<compile_context>
chip_gen: v7x
topology: tpu7x:2x2x1
jax: 0.10.0
libtpu: 0.0.40
codegen_flags: <defaults>
</compile_context>

<pallas_src>
import jax
import jax.numpy as jnp
from jax import lax
from jax.experimental import pallas as pl
from jax.experimental.pallas import tpu as pltpu

BN_EPS = 1e-5  # nn.BatchNorm2d default eps


def _round_up(n, m):
    return ((n + m - 1) // m) * m


# ----------------------------------------------------------------------------
# Pallas kernel 1: complex channel mixing (compl_mul2d), both mode blocks fused.
#   Packed layout (re||im on lanes, leading mode-block axis squeezed by BlockSpec):
#     a_ref: (B,    Cin, 2*MPAD)   activations for one mode block
#     w_ref: (Cout, Cin, 2*MPAD)   weights for that mode block
#     o_ref: (B,    Cout, 2*MPAD)
#   out[b, d, m] = sum_c a[b, c, m] * w[d, c, m]   (complex)
# ----------------------------------------------------------------------------
def _compl_mul_kernel(a_ref, w_ref, o_ref):
    m = a_ref.shape[-1] // 2
    w = w_ref[...]                       # (Cout, Cin, 2m)
    wr, wi = w[:, :, :m], w[:, :, m:]    # lane-aligned slices (multiple of 128)
    for b in range(a_ref.shape[0]):      # B is tiny & static -> unrolled
        a_b = a_ref[b]                                        # (Cin, 2m)
        ar, ai = a_b[:, :m], a_b[:, m:]                       # (Cin, m)
        # VPU multiply, XLU sublane-reduce over Cin (axis=1)
        o_re = jnp.sum(ar[None] * wr - ai[None] * wi, axis=1)  # (Cout, m)
        o_im = jnp.sum(ai[None] * wr + ar[None] * wi, axis=1)  # (Cout, m)
        o_ref[b] = jnp.concatenate([o_re, o_im], axis=-1)      # lane-dense store


def _compl_mul2d_fused(a_stacked, w_stacked, mpad):
    """a_stacked: (2, B, Cin, M) complex64, w_stacked: (2, Cout, Cin, M, 2) f32.

    Returns (2, B, Cout, M) complex64 via one pallas_call over the 2 mode blocks.
    """
    _, B, Cin, M = a_stacked.shape
    Cout = w_stacked.shape[1]
    pad = mpad - M

    ar = jnp.pad(jnp.real(a_stacked).astype(jnp.float32),
                 ((0, 0), (0, 0), (0, 0), (0, pad)))
    ai = jnp.pad(jnp.imag(a_stacked).astype(jnp.float32),
                 ((0, 0), (0, 0), (0, 0), (0, pad)))
    a_pk = jnp.concatenate([ar, ai], axis=-1)                 # (2, B, Cin, 2*mpad)

    wr = jnp.pad(w_stacked[..., 0].astype(jnp.float32),
                 ((0, 0), (0, 0), (0, 0), (0, pad)))
    wi = jnp.pad(w_stacked[..., 1].astype(jnp.float32),
                 ((0, 0), (0, 0), (0, 0), (0, pad)))
    w_pk = jnp.concatenate([wr, wi], axis=-1)                 # (2, Cout, Cin, 2*mpad)

    out = pl.pallas_call(
        _compl_mul_kernel,
        out_shape=jax.ShapeDtypeStruct((2, B, Cout, 2 * mpad), jnp.float32),
        grid=(2,),
        in_specs=[
            pl.BlockSpec((None, B, Cin, 2 * mpad), lambda s: (s, 0, 0, 0)),
            pl.BlockSpec((None, Cout, Cin, 2 * mpad), lambda s: (s, 0, 0, 0)),
        ],
        out_specs=pl.BlockSpec((None, B, Cout, 2 * mpad), lambda s: (s, 0, 0, 0)),
        compiler_params=pltpu.CompilerParams(dimension_semantics=("parallel",)),
    )(a_pk, w_pk)

    o_re = out[..., :M]                   # valid real lanes
    o_im = out[..., mpad:mpad + M]        # valid imag lanes
    return o_re + 1j * o_im               # (2, B, Cout, M) complex64


# ----------------------------------------------------------------------------
# Pallas kernel 2: BatchNorm2d (training-mode batch statistics) fused with ReLU.
# One-pass stats, channel tiling, no host transposes.
#   x_ref: (B, cC, H*W), g_ref/b_ref: (cC, 1), o_ref: (B, cC, H*W)
# ----------------------------------------------------------------------------
def _bn_relu_kernel(x_ref, g_ref, b_ref, o_ref):
    x = x_ref[...]                                             # (B, cC, HW)
    n = x.shape[0] * x.shape[2]
    s = jnp.sum(jnp.sum(x, axis=2, keepdims=True), axis=0, keepdims=True)
    ss = jnp.sum(jnp.sum(x * x, axis=2, keepdims=True), axis=0, keepdims=True)
    mean = s / n                                               # (1, cC, 1)
    var = ss / n - mean * mean                                 # biased (PyTorch BN)
    inv = lax.rsqrt(var + BN_EPS)
    scale = inv * g_ref[...][None]                             # (1, cC, 1)
    shift = b_ref[...][None] - mean * scale
    o_ref[...] = jnp.maximum(x * scale + shift, 0.0)


def _pick_channel_chunk(C):
    # 8-aligned sublane chunks; prefer >=2 grid steps so v7x uses both TCs.
    for cand in (16, 8):
        if C % cand == 0 and C // cand >= 2:
            return cand
    return C


def batchnorm_relu_pallas(x, gamma, beta):
    """x: (B, C, H, W) f32 -> (B, C, H, W) f32."""
    B, C, H, W = x.shape
    HW = H * W
    xf = x.reshape(B, C, HW)                                   # free reshape, no transpose
    g = gamma.reshape(C, 1).astype(jnp.float32)
    b = beta.reshape(C, 1).astype(jnp.float32)
    cc = _pick_channel_chunk(C)

    out = pl.pallas_call(
        _bn_relu_kernel,
        out_shape=jax.ShapeDtypeStruct((B, C, HW), jnp.float32),
        grid=(C // cc,),
        in_specs=[
            pl.BlockSpec((B, cc, HW), lambda c: (0, c, 0)),
            pl.BlockSpec((cc, 1), lambda c: (c, 0)),
            pl.BlockSpec((cc, 1), lambda c: (c, 0)),
        ],
        out_specs=pl.BlockSpec((B, cc, HW), lambda c: (0, c, 0)),
        compiler_params=pltpu.CompilerParams(dimension_semantics=("parallel",)),
    )(xf, g, b)
    return out.reshape(B, C, H, W)


# ----------------------------------------------------------------------------
# SpectralConv2d: rfft2 -> (fused Pallas compl_mul on the two mode blocks) -> irfft2
# ----------------------------------------------------------------------------
def spectral_conv2d(x, w1, w2, modes):
    B, Cin, H, W = x.shape
    Cout = w1.shape[0]
    M = modes * modes
    mpad = _round_up(M, 128)

    x_ft = jnp.fft.rfft2(x)                                    # (B, Cin, H, W//2+1) c64
    a1 = x_ft[:, :, :modes, :modes]
    a2 = x_ft[:, :, H - modes:, :modes]
    a = jnp.stack([a1, a2], axis=0).reshape(2, B, Cin, M)      # (2, B, Cin, M) complex
    w = jnp.stack([w1, w2], axis=0).reshape(2, Cout, Cin, M, 2)

    o = _compl_mul2d_fused(a, w, mpad)                         # (2, B, Cout, M) c64
    o = o.reshape(2, B, Cout, modes, modes)

    out_ft = jnp.zeros((B, Cout, H, W // 2 + 1), dtype=jnp.complex64)
    out_ft = out_ft.at[:, :, :modes, :modes].set(o[0])
    out_ft = out_ft.at[:, :, H - modes:, :modes].set(o[1])
    return jnp.fft.irfft2(out_ft, s=(H, W))


# ----------------------------------------------------------------------------
# FNO forward
# ----------------------------------------------------------------------------
def fno_forward(params, x):
    out = spectral_conv2d(x, params["conv1_w1"], params["conv1_w2"], modes=10)
    out = batchnorm_relu_pallas(out, params["bn1_gamma"], params["bn1_beta"])
    # TODO(synk): layer1-4 are built from `BasicBlock`, which is referenced via
    # eval('BasicBlock') but not defined in the provided source; they are omitted
    # rather than guessed. Channel count (32) is preserved so conv2 stays valid.
    out = spectral_conv2d(out, params["conv2_w1"], params["conv2_w2"], modes=10)
    return out


# ----------------------------------------------------------------------------
# Pure-JAX reference (same math, no Pallas) used as a correctness check.
# ----------------------------------------------------------------------------
def _compl_mul2d_ref(a, w):
    wc = w[..., 0] + 1j * w[..., 1]
    return jnp.einsum("bctq,dctq->bdtq", a, wc)


def _spectral_conv2d_ref(x, w1, w2, modes):
    B, Cin, H, W = x.shape
    Cout = w1.shape[0]
    x_ft = jnp.fft.rfft2(x)
    out_ft = jnp.zeros((B, Cout, H, W // 2 + 1), dtype=jnp.complex64)
    out_ft = out_ft.at[:, :, :modes, :modes].set(
        _compl_mul2d_ref(x_ft[:, :, :modes, :modes], w1))
    out_ft = out_ft.at[:, :, H - modes:, :modes].set(
        _compl_mul2d_ref(x_ft[:, :, H - modes:, :modes], w2))
    return jnp.fft.irfft2(out_ft, s=(H, W))


def _bn_relu_ref(x, gamma, beta):
    mean = jnp.mean(x, axis=(0, 2, 3), keepdims=True)
    var = jnp.mean((x - mean) ** 2, axis=(0, 2, 3), keepdims=True)
    y = (x - mean) / jnp.sqrt(var + BN_EPS)
    y = y * gamma[None, :, None, None] + beta[None, :, None, None]
    return jnp.maximum(y, 0.0)


def fno_forward_ref(params, x):
    out = _spectral_conv2d_ref(x, params["conv1_w1"], params["conv1_w2"], 10)
    out = _bn_relu_ref(out, params["bn1_gamma"], params["bn1_beta"])
    out = _spectral_conv2d_ref(out, params["conv2_w1"], params["conv2_w2"], 10)
    return out


# ----------------------------------------------------------------------------
# Deterministic parameter init (matches shapes/scales in FNO.__init__).
# ----------------------------------------------------------------------------
def init_params(key):
    ks = jax.random.split(key, 4)

    def spec_w(k, cout, cin, m):
        scale = 1.0 / (cin * cout)
        return scale * jax.random.uniform(k, (cout, cin, m, m, 2), dtype=jnp.float32)

    return {
        "conv1_w1": spec_w(ks[0], 32, 3, 10),
        "conv1_w2": spec_w(ks[1], 32, 3, 10),
        "bn1_gamma": jnp.ones((32,), jnp.float32),
        "bn1_beta": jnp.zeros((32,), jnp.float32),
        "conv2_w1": spec_w(ks[2], 3, 32, 10),
        "conv2_w2": spec_w(ks[3], 3, 32, 10),
    }


if __name__ == "__main__":
    key = jax.random.PRNGKey(0)
    pkey, xkey = jax.random.split(key)
    params = init_params(pkey)

    # modes=10 requires W//2+1 >= 10 and H >= 2*10 to mirror the PyTorch slicing.
    x = jax.random.normal(xkey, (2, 3, 32, 32), dtype=jnp.float32)

    fwd = jax.jit(fno_forward)
    y = jax.block_until_ready(fwd(params, x))

    y_ref = jax.block_until_ready(jax.jit(fno_forward_ref)(params, x))

    assert y.shape == (2, 3, 32, 32), y.shape
    assert bool(jnp.all(jnp.isfinite(y)))
    max_err = float(jnp.max(jnp.abs(y - y_ref)))
    assert max_err < 2e-3, f"mismatch vs reference: {max_err}"

    print("KERNEL_OK")
</pallas_src>

<mosaic_0001>
module attributes {stable_mosaic.version = 11 : i64} {
  func.func @_compl_mul_kernel(%arg0: i32, %arg1: memref<1x2x3x256xf32, #tpu.memory_space<vmem>>, %arg2: memref<1x32x3x256xf32, #tpu.memory_space<vmem>>, %arg3: memref<1x2x32x256xf32, #tpu.memory_space<vmem>>) attributes {dimension_semantics = [#tpu.dimension_semantics<parallel>], iteration_bounds = array<i64: 2>, scalar_prefetch = 0 : i64, scratch_operands = 0 : i64, tpu.core_type = #tpu.core_type<tc>, window_params = [{transform_indices = @transform_0, window_bounds = array<i64: 1, 2, 3, 256>}, {transform_indices = @transform_1, window_bounds = array<i64: 1, 32, 3, 256>}, {transform_indices = @transform_2, window_bounds = array<i64: 1, 2, 32, 256>}]} {
    %c0 = arith.constant 0 : index
    %c0_0 = arith.constant 0 : index
    %c0_1 = arith.constant 0 : index
    %c0_2 = arith.constant 0 : index
    %0 = vector.load %arg2[%c0, %c0_0, %c0_1, %c0_2] : memref<1x32x3x256xf32, #tpu.memory_space<vmem>>, vector<1x32x3x256xf32>
    %1 = vector.shape_cast %0 : vector<1x32x3x256xf32> to vector<32x3x256xf32>
    %2 = vector.extract_strided_slice %1 {offsets = [0, 0, 0], sizes = [32, 3, 128], strides = [1, 1, 1]} : vector<32x3x256xf32> to vector<32x3x128xf32>
    %3 = vector.extract_strided_slice %1 {offsets = [0, 0, 128], sizes = [32, 3, 128], strides = [1, 1, 1]} : vector<32x3x256xf32> to vector<32x3x128xf32>
    %c0_3 = arith.constant 0 : index
    %c0_4 = arith.constant 0 : index
    %c0_5 = arith.constant 0 : index
    %c0_6 = arith.constant 0 : index
    %4 = vector.load %arg1[%c0_3, %c0_4, %c0_5, %c0_6] : memref<1x2x3x256xf32, #tpu.memory_space<vmem>>, vector<1x1x3x256xf32>
    %5 = vector.shape_cast %4 : vector<1x1x3x256xf32> to vector<3x256xf32>
    %6 = vector.extract_strided_slice %5 {offsets = [0, 0], sizes = [3, 128], strides = [1, 1]} : vector<3x256xf32> to vector<3x128xf32>
    %7 = vector.extract_strided_slice %5 {offsets = [0, 128], sizes = [3, 128], strides = [1, 1]} : vector<3x256xf32> to vector<3x128xf32>
    %8 = vector.shape_cast %6 : vector<3x128xf32> to vector<1x3x128xf32>
    %9 = vector.broadcast %8 : vector<1x3x128xf32> to vector<32x3x128xf32>
    %10 = arith.mulf %9, %2 : vector<32x3x128xf32>
    %11 = vector.shape_cast %7 : vector<3x128xf32> to vector<1x3x128xf32>
    %12 = vector.broadcast %11 : vector<1x3x128xf32> to vector<32x3x128xf32>
    %13 = arith.mulf %12, %3 : vector<32x3x128xf32>
    %14 = arith.subf %10, %13 : vector<32x3x128xf32>
    %cst = arith.constant dense<0.000000e+00> : vector<32x128xf32>
    %15 = vector.multi_reduction <add>, %14, %cst [1] : vector<32x3x128xf32> to vector<32x128xf32>
    %16 = vector.shape_cast %7 : vector<3x128xf32> to vector<1x3x128xf32>
    %17 = vector.broadcast %16 : vector<1x3x128xf32> to vector<32x3x128xf32>
    %18 = arith.mulf %17, %2 : vector<32x3x128xf32>
    %19 = vector.shape_cast %6 : vector<3x128xf32> to vector<1x3x128xf32>
    %20 = vector.broadcast %19 : vector<1x3x128xf32> to vector<32x3x128xf32>
    %21 = arith.mulf %20, %3 : vector<32x3x128xf32>
    %22 = arith.addf %18, %21 : vector<32x3x128xf32>
    %cst_7 = arith.constant dense<0.000000e+00> : vector<32x128xf32>
    %23 = vector.multi_reduction <add>, %22, %cst_7 [1] : vector<32x3x128xf32> to vector<32x128xf32>
    %24 = tpu.concatenate %15, %23 in 1 : vector<32x128xf32>, vector<32x128xf32> -> vector<32x256xf32>
    %c0_8 = arith.constant 0 : index
    %c0_9 = arith.constant 0 : index
    %c0_10 = arith.constant 0 : index
    %c0_11 = arith.constant 0 : index
    %25 = vector.load %arg3[%c0_8, %c0_9, %c0_10, %c0_11] : memref<1x2x32x256xf32, #tpu.memory_space<vmem>>, vector<1x1x32x256xf32>
    %26 = vector.shape_cast %25 : vector<1x1x32x256xf32> to vector<32x256xf32>
    %27 = vector.shape_cast %24 : vector<32x256xf32> to vector<1x1x32x256xf32>
    tpu.vector_store %arg3[%c0_8, %c0_9, %c0_10, %c0_11], %27 {strides = array<i32>} : memref<1x2x32x256xf32, #tpu.memory_space<vmem>>, vector<1x1x32x256xf32>,
    %c0_12 = arith.constant 0 : index
    %c1 = arith.constant 1 : index
    %c0_13 = arith.constant 0 : index
    %c0_14 = arith.constant 0 : index
    %28 = vector.load %arg1[%c0_12, %c1, %c0_13, %c0_14] : memref<1x2x3x256xf32, #tpu.memory_space<vmem>>, vector<1x1x3x256xf32>
    %29 = vector.shape_cast %28 : vector<1x1x3x256xf32> to vector<3x256xf32>
    %30 = vector.extract_strided_slice %29 {offsets = [0, 0], sizes = [3, 128], strides = [1, 1]} : vector<3x256xf32> to vector<3x128xf32>
    %31 = vector.extract_strided_slice %29 {offsets = [0, 128], sizes = [3, 128], strides = [1, 1]} : vector<3x256xf32> to vector<3x128xf32>
    %32 = vector.shape_cast %30 : vector<3x128xf32> to vector<1x3x128xf32>
    %33 = vector.broadcast %32 : vector<1x3x128xf32> to vector<32x3x128xf32>
    %34 = arith.mulf %33, %2 : vector<32x3x128xf32>
    %35 = vector.shape_cast %31 : vector<3x128xf32> to vector<1x3x128xf32>
    %36 = vector.broadcast %35 : vector<1x3x128xf32> to vector<32x3x128xf32>
    %37 = arith.mulf %36, %3 : vector<32x3x128xf32>
    %38 = arith.subf %34, %37 : vector<32x3x128xf32>
    %cst_15 = arith.constant dense<0.000000e+00> : vector<32x128xf32>
    %39 = vector.multi_reduction <add>, %38, %cst_15 [1] : vector<32x3x128xf32> to vector<32x128xf32>
    %40 = vector.shape_cast %31 : vector<3x128xf32> to vector<1x3x128xf32>
    %41 = vector.broadcast %40 : vector<1x3x128xf32> to vector<32x3x128xf32>
    %42 = arith.mulf %41, %2 : vector<32x3x128xf32>
    %43 = vector.shape_cast %30 : vector<3x128xf32> to vector<1x3x128xf32>
    %44 = vector.broadcast %43 : vector<1x3x128xf32> to vector<32x3x128xf32>
    %45 = arith.mulf %44, %3 : vector<32x3x128xf32>
    %46 = arith.addf %42, %45 : vector<32x3x128xf32>
    %cst_16 = arith.constant dense<0.000000e+00> : vector<32x128xf32>
    %47 = vector.multi_reduction <add>, %46, %cst_16 [1] : vector<32x3x128xf32> to vector<32x128xf32>
    %48 = tpu.concatenate %39, %47 in 1 : vector<32x128xf32>, vector<32x128xf32> -> vector<32x256xf32>
    %c0_17 = arith.constant 0 : index
    %c1_18 = arith.constant 1 : index
    %c0_19 = arith.constant 0 : index
    %c0_20 = arith.constant 0 : index
    %49 = vector.load %arg3[%c0_17, %c1_18, %c0_19, %c0_20] : memref<1x2x32x256xf32, #tpu.memory_space<vmem>>, vector<1x1x32x256xf32>
    %50 = vector.shape_cast %49 : vector<1x1x32x256xf32> to vector<32x256xf32>
    %51 = vector.shape_cast %48 : vector<32x256xf32> to vector<1x1x32x256xf32>
    tpu.vector_store %arg3[%c0_17, %c1_18, %c0_19, %c0_20], %51 {strides = array<i32>} : memref<1x2x32x256xf32, #tpu.memory_space<vmem>>, vector<1x1x32x256xf32>,
    return
  }
  func.func @transform_0(%arg0: i32) -> (i32, i32, i32, i32) {
    %c0_i32 = arith.constant 0 : i32
    %c0_i32_0 = arith.constant 0 : i32
    %c0_i32_1 = arith.constant 0 : i32
    %c0_i32_2 = arith.constant 0 : i32
    return %arg0, %c0_i32, %c0_i32_0, %c0_i32_1 : i32, i32, i32, i32
  }
  func.func @transform_1(%arg0: i32) -> (i32, i32, i32, i32) {
    %c0_i32 = arith.constant 0 : i32
    %c0_i32_0 = arith.constant 0 : i32
    %c0_i32_1 = arith.constant 0 : i32
    %c0_i32_2 = arith.constant 0 : i32
    return %arg0, %c0_i32, %c0_i32_0, %c0_i32_1 : i32, i32, i32, i32
  }
  func.func @transform_2(%arg0: i32) -> (i32, i32, i32, i32) {
    %c0_i32 = arith.constant 0 : i32
    %c0_i32_0 = arith.constant 0 : i32
    %c0_i32_1 = arith.constant 0 : i32
    %c0_i32_2 = arith.constant 0 : i32
    return %arg0, %c0_i32, %c0_i32_0, %c0_i32_1 : i32, i32, i32, i32
  }
}

module attributes {stable_mosaic.version = 11 : i64} {
  func.func @_bn_relu_kernel(%arg0: i32, %arg1: memref<2x16x1024xf32, #tpu.memory_space<vmem>>, %arg2: memref<16x1xf32, #tpu.memory_space<vmem>>, %arg3: memref<16x1xf32, #tpu.memory_space<vmem>>, %arg4: memref<2x16x1024xf32, #tpu.memory_space<vmem>>) attributes {dimension_semantics = [#tpu.dimension_semantics<parallel>], iteration_bounds = array<i64: 2>, scalar_prefetch = 0 : i64, scratch_operands = 0 : i64, tpu.core_type = #tpu.core_type<tc>, window_params = [{transform_indices = @transform_0, window_bounds = array<i64: 2, 16, 1024>}, {transform_indices = @transform_1, window_bounds = array<i64: 16, 1>}, {transform_indices = @transform_2, window_bounds = array<i64: 16, 1>}, {transform_indices = @transform_3, window_bounds = array<i64: 2, 16, 1024>}]} {
    %c0 = arith.constant 0 : index
    %c0_0 = arith.constant 0 : index
    %c0_1 = arith.constant 0 : index
    %0 = vector.load %arg1[%c0, %c0_0, %c0_1] : memref<2x16x1024xf32, #tpu.memory_space<vmem>>, vector<2x16x1024xf32>
    %cst = arith.constant dense<0.000000e+00> : vector<2x16xf32>
    %1 = vector.multi_reduction <add>, %0, %cst [2] : vector<2x16x1024xf32> to vector<2x16xf32>
    %2 = vector.shape_cast %1 : vector<2x16xf32> to vector<2x16x1xf32>
    %cst_2 = arith.constant dense<0.000000e+00> : vector<16x1xf32>
    %3 = vector.multi_reduction <add>, %2, %cst_2 [0] : vector<2x16x1xf32> to vector<16x1xf32>
    %4 = vector.shape_cast %3 : vector<16x1xf32> to vector<1x16x1xf32>
    %5 = arith.mulf %0, %0 : vector<2x16x1024xf32>
    %cst_3 = arith.constant dense<0.000000e+00> : vector<2x16xf32>
    %6 = vector.multi_reduction <add>, %5, %cst_3 [2] : vector<2x16x1024xf32> to vector<2x16xf32>
    %7 = vector.shape_cast %6 : vector<2x16xf32> to vector<2x16x1xf32>
    %cst_4 = arith.constant dense<0.000000e+00> : vector<16x1xf32>
    %8 = vector.multi_reduction <add>, %7, %cst_4 [0] : vector<2x16x1xf32> to vector<16x1xf32>
    %9 = vector.shape_cast %8 : vector<16x1xf32> to vector<1x16x1xf32>
    %cst_5 = arith.constant 2.048000e+03 : f32
    %10 = vector.broadcast %cst_5 : f32 to vector<1x16x1xf32>
    %11 = arith.divf %4, %10 : vector<1x16x1xf32>
    %cst_6 = arith.constant 2.048000e+03 : f32
    %12 = vector.broadcast %cst_6 : f32 to vector<1x16x1xf32>
    %13 = arith.divf %9, %12 : vector<1x16x1xf32>
    %14 = arith.mulf %11, %11 : vector<1x16x1xf32>
    %15 = arith.subf %13, %14 : vector<1x16x1xf32>
    %cst_7 = arith.constant 9.99999974E-6 : f32
    %16 = vector.broadcast %cst_7 : f32 to vector<1x16x1xf32>
    %17 = arith.addf %15, %16 : vector<1x16x1xf32>
    %18 = math.rsqrt %17 : vector<1x16x1xf32>
    %c0_8 = arith.constant 0 : index
    %c0_9 = arith.constant 0 : index
    %19 = vector.load %arg2[%c0_8, %c0_9] : memref<16x1xf32, #tpu.memory_space<vmem>>, vector<16x1xf32>
    %20 = vector.shape_cast %19 : vector<16x1xf32> to vector<1x16x1xf32>
    %21 = arith.mulf %18, %20 : vector<1x16x1xf32>
    %c0_10 = arith.constant 0 : index
    %c0_11 = arith.constant 0 : index
    %22 = vector.load %arg3[%c0_10, %c0_11] : memref<16x1xf32, #tpu.memory_space<vmem>>, vector<16x1xf32>
    %23 = vector.shape_cast %22 : vector<16x1xf32> to vector<1x16x1xf32>
    %24 = arith.mulf %11, %21 : vector<1x16x1xf32>
    %25 = arith.subf %23, %24 : vector<1x16x1xf32>
    %26 = vector.broadcast %21 : vector<1x16x1xf32> to vector<2x16x1024xf32>
    %27 = arith.mulf %0, %26 : vector<2x16x1024xf32>
    %28 = vector.broadcast %25 : vector<1x16x1xf32> to vector<2x16x1024xf32>
    %29 = arith.addf %27, %28 : vector<2x16x1024xf32>
    %cst_12 = arith.constant 0.000000e+00 : f32
    %30 = vector.broadcast %cst_12 : f32 to vector<2x16x1024xf32>
    %31 = arith.maximumf %29, %30 : vector<2x16x1024xf32>
    %c0_13 = arith.constant 0 : index
    %c0_14 = arith.constant 0 : index
    %c0_15 = arith.constant 0 : index
    %32 = vector.load %arg4[%c0_13, %c0_14, %c0_15] : memref<2x16x1024xf32, #tpu.memory_space<vmem>>, vector<2x16x1024xf32>
    tpu.vector_store %arg4[%c0_13, %c0_14, %c0_15], %31 {strides = array<i32>} : memref<2x16x1024xf32, #tpu.memory_space<vmem>>, vector<2x16x1024xf32>,
    return
  }
  func.func @transform_0(%arg0: i32) -> (i32, i32, i32) {
    %c0_i32 = arith.constant 0 : i32
    %c0_i32_0 = arith.constant 0 : i32
    %c0_i32_1 = arith.constant 0 : i32
    return %c0_i32, %arg0, %c0_i32_0 : i32, i32, i32
  }
  func.func @transform_1(%arg0: i32) -> (i32, i32) {
    %c0_i32 = arith.constant 0 : i32
    %c0_i32_0 = arith.constant 0 : i32
    return %arg0, %c0_i32 : i32, i32
  }
  func.func @transform_2(%arg0: i32) -> (i32, i32) {
    %c0_i32 = arith.constant 0 : i32
    %c0_i32_0 = arith.constant 0 : i32
    return %arg0, %c0_i32 : i32, i32
  }
  func.func @transform_3(%arg0: i32) -> (i32, i32, i32) {
    %c0_i32 = arith.constant 0 : i32
    %c0_i32_0 = arith.constant 0 : i32
    %c0_i32_1 = arith.constant 0 : i32
    return %c0_i32, %arg0, %c0_i32_0 : i32, i32, i32
  }
}

module attributes {stable_mosaic.version = 11 : i64} {
  func.func @_compl_mul_kernel(%arg0: i32, %arg1: memref<1x2x32x256xf32, #tpu.memory_space<vmem>>, %arg2: memref<1x3x32x256xf32, #tpu.memory_space<vmem>>, %arg3: memref<1x2x3x256xf32, #tpu.memory_space<vmem>>) attributes {dimension_semantics = [#tpu.dimension_semantics<parallel>], iteration_bounds = array<i64: 2>, scalar_prefetch = 0 : i64, scratch_operands = 0 : i64, tpu.core_type = #tpu.core_type<tc>, window_params = [{transform_indices = @transform_0, window_bounds = array<i64: 1, 2, 32, 256>}, {transform_indices = @transform_1, window_bounds = array<i64: 1, 3, 32, 256>}, {transform_indices = @transform_2, window_bounds = array<i64: 1, 2, 3, 256>}]} {
    %c0 = arith.constant 0 : index
    %c0_0 = arith.constant 0 : index
    %c0_1 = arith.constant 0 : index
    %c0_2 = arith.constant 0 : index
    %0 = vector.load %arg2[%c0, %c0_0, %c0_1, %c0_2] : memref<1x3x32x256xf32, #tpu.memory_space<vmem>>, vector<1x3x32x256xf32>
    %1 = vector.shape_cast %0 : vector<1x3x32x256xf32> to vector<3x32x256xf32>
    %2 = vector.extract_strided_slice %1 {offsets = [0, 0, 0], sizes = [3, 32, 128], strides = [1, 1, 1]} : vector<3x32x256xf32> to vector<3x32x128xf32>
    %3 = vector.extract_strided_slice %1 {offsets = [0, 0, 128], sizes = [3, 32, 128], strides = [1, 1, 1]} : vector<3x32x256xf32> to vector<3x32x128xf32>
    %c0_3 = arith.constant 0 : index
    %c0_4 = arith.constant 0 : index
    %c0_5 = arith.constant 0 : index
    %c0_6 = arith.constant 0 : index
    %4 = vector.load %arg1[%c0_3, %c0_4, %c0_5, %c0_6] : memref<1x2x32x256xf32, #tpu.memory_space<vmem>>, vector<1x1x32x256xf32>
    %5 = vector.shape_cast %4 : vector<1x1x32x256xf32> to vector<32x256xf32>
    %6 = vector.extract_strided_slice %5 {offsets = [0, 0], sizes = [32, 128], strides = [1, 1]} : vector<32x256xf32> to vector<32x128xf32>
    %7 = vector.extract_strided_slice %5 {offsets = [0, 128], sizes = [32, 128], strides = [1, 1]} : vector<32x256xf32> to vector<32x128xf32>
    %8 = vector.shape_cast %6 : vector<32x128xf32> to vector<1x32x128xf32>
    %9 = vector.broadcast %8 : vector<1x32x128xf32> to vector<3x32x128xf32>
    %10 = arith.mulf %9, %2 : vector<3x32x128xf32>
    %11 = vector.shape_cast %7 : vector<32x128xf32> to vector<1x32x128xf32>
    %12 = vector.broadcast %11 : vector<1x32x128xf32> to vector<3x32x128xf32>
    %13 = arith.mulf %12, %3 : vector<3x32x128xf32>
    %14 = arith.subf %10, %13 : vector<3x32x128xf32>
    %cst = arith.constant dense<0.000000e+00> : vector<3x128xf32>
    %15 = vector.multi_reduction <add>, %14, %cst [1] : vector<3x32x128xf32> to vector<3x128xf32>
    %16 = vector.shape_cast %7 : vector<32x128xf32> to vector<1x32x128xf32>
    %17 = vector.broadcast %16 : vector<1x32x128xf32> to vector<3x32x128xf32>
    %18 = arith.mulf %17, %2 : vector<3x32x128xf32>
    %19 = vector.shape_cast %6 : vector<32x128xf32> to vector<1x32x128xf32>
    %20 = vector.broadcast %19 : vector<1x32x128xf32> to vector<3x32x128xf32>
    %21 = arith.mulf %20, %3 : vector<3x32x128xf32>
    %22 = arith.addf %18, %21 : vector<3x32x128xf32>
    %cst_7 = arith.constant dense<0.000000e+00> : vector<3x128xf32>
    %23 = vector.multi_reduction <add>, %22, %cst_7 [1] : vector<3x32x128xf32> to vector<3x128xf32>
    %24 = tpu.concatenate %15, %23 in 1 : vector<3x128xf32>, vector<3x128xf32> -> vector<3x256xf32>
    %c0_8 = arith.constant 0 : index
    %c0_9 = arith.constant 0 : index
    %c0_10 = arith.constant 0 : index
    %c0_11 = arith.constant 0 : index
    %25 = vector.load %arg3[%c0_8, %c0_9, %c0_10, %c0_11] : memref<1x2x3x256xf32, #tpu.memory_space<vmem>>, vector<1x1x3x256xf32>
    %26 = vector.shape_cast %25 : vector<1x1x3x256xf32> to vector<3x256xf32>
    %27 = vector.shape_cast %24 : vector<3x256xf32> to vector<1x1x3x256xf32>
    tpu.vector_store %arg3[%c0_8, %c0_9, %c0_10, %c0_11], %27 {strides = array<i32>} : memref<1x2x3x256xf32, #tpu.memory_space<vmem>>, vector<1x1x3x256xf32>,
    %c0_12 = arith.constant 0 : index
    %c1 = arith.constant 1 : index
    %c0_13 = arith.constant 0 : index
    %c0_14 = arith.constant 0 : index
    %28 = vector.load %arg1[%c0_12, %c1, %c0_13, %c0_14] : memref<1x2x32x256xf32, #tpu.memory_space<vmem>>, vector<1x1x32x256xf32>
    %29 = vector.shape_cast %28 : vector<1x1x32x256xf32> to vector<32x256xf32>
    %30 = vector.extract_strided_slice %29 {offsets = [0, 0], sizes = [32, 128], strides = [1, 1]} : vector<32x256xf32> to vector<32x128xf32>
    %31 = vector.extract_strided_slice %29 {offsets = [0, 128], sizes = [32, 128], strides = [1, 1]} : vector<32x256xf32> to vector<32x128xf32>
    %32 = vector.shape_cast %30 : vector<32x128xf32> to vector<1x32x128xf32>
    %33 = vector.broadcast %32 : vector<1x32x128xf32> to vector<3x32x128xf32>
    %34 = arith.mulf %33, %2 : vector<3x32x128xf32>
    %35 = vector.shape_cast %31 : vector<32x128xf32> to vector<1x32x128xf32>
    %36 = vector.broadcast %35 : vector<1x32x128xf32> to vector<3x32x128xf32>
    %37 = arith.mulf %36, %3 : vector<3x32x128xf32>
    %38 = arith.subf %34, %37 : vector<3x32x128xf32>
    %cst_15 = arith.constant dense<0.000000e+00> : vector<3x128xf32>
    %39 = vector.multi_reduction <add>, %38, %cst_15 [1] : vector<3x32x128xf32> to vector<3x128xf32>
    %40 = vector.shape_cast %31 : vector<32x128xf32> to vector<1x32x128xf32>
    %41 = vector.broadcast %40 : vector<1x32x128xf32> to vector<3x32x128xf32>
    %42 = arith.mulf %41, %2 : vector<3x32x128xf32>
    %43 = vector.shape_cast %30 : vector<32x128xf32> to vector<1x32x128xf32>
    %44 = vector.broadcast %43 : vector<1x32x128xf32> to vector<3x32x128xf32>
    %45 = arith.mulf %44, %3 : vector<3x32x128xf32>
    %46 = arith.addf %42, %45 : vector<3x32x128xf32>
    %cst_16 = arith.constant dense<0.000000e+00> : vector<3x128xf32>
    %47 = vector.multi_reduction <add>, %46, %cst_16 [1] : vector<3x32x128xf32> to vector<3x128xf32>
    %48 = tpu.concatenate %39, %47 in 1 : vector<3x128xf32>, vector<3x128xf32> -> vector<3x256xf32>
    %c0_17 = arith.constant 0 : index
    %c1_18 = arith.constant 1 : index
    %c0_19 = arith.constant 0 : index
    %c0_20 = arith.constant 0 : index
    %49 = vector.load %arg3[%c0_17, %c1_18, %c0_19, %c0_20] : memref<1x2x3x256xf32, #tpu.memory_space<vmem>>, vector<1x1x3x256xf32>
    %50 = vector.shape_cast %49 : vector<1x1x3x256xf32> to vector<3x256xf32>
    %51 = vector.shape_cast %48 : vector<3x256xf32> to vector<1x1x3x256xf32>
    tpu.vector_store %arg3[%c0_17, %c1_18, %c0_19, %c0_20], %51 {strides = array<i32>} : memref<1x2x3x256xf32, #tpu.memory_space<vmem>>, vector<1x1x3x256xf32>,
    return
  }
  func.func @transform_0(%arg0: i32) -> (i32, i32, i32, i32) {
    %c0_i32 = arith.constant 0 : i32
    %c0_i32_0 = arith.constant 0 : i32
    %c0_i32_1 = arith.constant 0 : i32
    %c0_i32_2 = arith.constant 0 : i32
    return %arg0, %c0_i32, %c0_i32_0, %c0_i32_1 : i32, i32, i32, i32
  }
  func.func @transform_1(%arg0: i32) -> (i32, i32, i32, i32) {
    %c0_i32 = arith.constant 0 : i32
    %c0_i32_0 = arith.constant 0 : i32
    %c0_i32_1 = arith.constant 0 : i32
    %c0_i32_2 = arith.constant 0 : i32
    return %arg0, %c0_i32, %c0_i32_0, %c0_i32_1 : i32, i32, i32, i32
  }
  func.func @transform_2(%arg0: i32) -> (i32, i32, i32, i32) {
    %c0_i32 = arith.constant 0 : i32
    %c0_i32_0 = arith.constant 0 : i32
    %c0_i32_1 = arith.constant 0 : i32
    %c0_i32_2 = arith.constant 0 : i32
    return %arg0, %c0_i32, %c0_i32_0, %c0_i32_1 : i32, i32, i32, i32
  }
}

</mosaic_0001>

<llo_original>
// kernel: fno_forward.3
$region0: #{fno_forward.3}
  #allocation0 [shape = 'u32[]', space=smem, size = 0x4, offset = 0x4, fixed_abs, tag = 'smem constant byte address 0x4 - core index']
  #allocation1 [shape = 'u32[144,128]{1,0:T(1,128)}', space=vmem, size = 0x12000, scoped, tag = 'internal scratch']
  %s0 = inlined_call_operand.vmem [shape: f32[2,2,3,256], index: 0, kind: input, shape index: {}]
  %s1 = inlined_call_operand.vmem [shape: f32[2,32,3,256], index: 1, kind: input, shape index: {}]
  %s2 = inlined_call_operand.vmem [shape: f32[2,2,32,256], index: 2, kind: output, shape index: {}]
  %s3 = sld [smem:[#allocation0]]
  $region41: #{fno_forward.3} parent=0
    _
  %s5 = ssub.s32 1, %s3
  %s6 = scalar_select 0, %s5, %s3
  loop: start=0, step=1, limit=4
  $region2: #{fno_forward.3} parent=0 // loop_pre_header
    _
  $region3: #{fno_forward.3} parent=0 // loop_header
    %s8 = sphi 0, %s12
    %p9 = scmp.ge.s32.totalorder %s8, 4
    %s18 = sphi 0, %s20
    %s21 = sphi 0, %s18
    %s22 = sphi 0, %s21
    %s38 = sphi 0, %s22
    %s44 = sphi 0, %s46
    %s47 = sphi 0, %s44
    %s48 = sphi 0, %s47
    %s64 = sphi 0, %s48
    %s70 = sphi 0, %s72
    %s73 = sphi 0, %s70
    %s74 = sphi 0, %s73
    %s90 = sphi 0, %s74
  $region4: #{fno_forward.3} parent=0 // loop_header_branch
    %11 = sbr.rel (%p9) target = $region8
  $region5: #{fno_forward.3} parent=0 // loop_body
    %s13 = ssub.s32 %s8, 1
    %s14 = ssub.s32 %s8, 2
    %s15 = sadd.s32 %s8, 1
    %s16 = ssub.s32 %s8, %s15
    %p17 = scmp.eq.s32.totalorder %s16, 0
    %s19 = sadd.s32 %s18, 1
    %s20 = scalar_select %p17, %s18, %s19
    %p23 = pneg %p17
    %p24 = scmp.eq.s32.totalorder %s8, 1
    %p25 = por %p23, %p24
    %p26 = scmp.ne.s32.totalorder %s18, %s21
    %p27 = scmp.eq.s32.totalorder %s8, 0
    %p28 = por %p26, %p27
    %p29 = scmp.ne.s32.totalorder %s18, %s21
    %p30 = scmp.eq.s32.totalorder %s13, 1
    %p31 = por %p29, %p30
    %p32 = scmp.ne.s32.totalorder %s21, %s22
    %p33 = scmp.eq.s32.totalorder %s13, 0
    %p34 = por %p32, %p33
    %p35 = scmp.ne.s32.totalorder %s21, %s22
    %p36 = scmp.eq.s32.totalorder %s14, 1
    %p37 = por %p35, %p36
    %p39 = scmp.ne.s32.totalorder %s22, %s38
    %p40 = scmp.eq.s32.totalorder %s14, 0
    %p41 = por %p39, %p40
    %s42 = ssub.s32 %s8, %s15
    %p43 = scmp.eq.s32.totalorder %s42, 0
    %s45 = sadd.s32 %s44, 1
    %s46 = scalar_select %p43, %s44, %s45
    %p49 = pneg %p43
    %p50 = scmp.eq.s32.totalorder %s8, 1
    %p51 = por %p49, %p50
    %p52 = scmp.ne.s32.totalorder %s44, %s47
    %p53 = scmp.eq.s32.totalorder %s8, 0
    %p54 = por %p52, %p53
    %p55 = scmp.ne.s32.totalorder %s44, %s47
    %p56 = scmp.eq.s32.totalorder %s13, 1
    %p57 = por %p55, %p56
    %p58 = scmp.ne.s32.totalorder %s47, %s48
    %p59 = scmp.eq.s32.totalorder %s13, 0
    %p60 = por %p58, %p59
    %p61 = scmp.ne.s32.totalorder %s47, %s48
    %p62 = scmp.eq.s32.totalorder %s14, 1
    %p63 = por %p61, %p62
    %p65 = scmp.ne.s32.totalorder %s48, %s64
    %p66 = scmp.eq.s32.totalorder %s14, 0
    %p67 = por %p65, %p66
    %s68 = ssub.s32 %s8, %s15
    %p69 = scmp.eq.s32.totalorder %s68, 0
    %s71 = sadd.s32 %s70, 1
    %s72 = scalar_select %p69, %s70, %s71
    %p75 = pneg %p69
    %p76 = scmp.eq.s32.totalorder %s8, 1
    %p77 = por %p75, %p76
    %p78 = scmp.ne.s32.totalorder %s70, %s73
    %p79 = scmp.eq.s32.totalorder %s8, 0
    %p80 = por %p78, %p79
    %p81 = scmp.ne.s32.totalorder %s70, %s73
    %p82 = scmp.eq.s32.totalorder %s13, 1
    %p83 = por %p81, %p82
    %p84 = scmp.ne.s32.totalorder %s73, %s74
    %p85 = scmp.eq.s32.totalorder %s13, 0
    %p86 = por %p84, %p85
    %p87 = scmp.ne.s32.totalorder %s73, %s74
    %p88 = scmp.eq.s32.totalorder %s14, 1
    %p89 = por %p87, %p88
    %p91 = scmp.ne.s32.totalorder %s74, %s90
    %p92 = scmp.eq.s32.totalorder %s14, 0
    %p93 = por %p91, %p92
    %p94 = scmp.le.s32.totalorder 1, %s8
    %p95 = scmp.lt.s32.totalorder %s8, 3
    %p96 = pnand %p94, %p95
    %p97 = pneg %p96
    // Predicated region
    $region9: #{fno_forward.3} parent=5 // pred_check
      _
    $region10: #{fno_forward.3} parent=5 // pred_check_branch
      %99 = sbr.rel (%p96) target = $region12
    $region11: #{fno_forward.3} parent=5 // pred_region
      %s100 = ssub.s32 %s8, 1
    $region12: #{fno_forward.3} parent=5 // pred_fallthru
      _
    %p101 = scmp.lt.s32.totalorder %s8, 2
    // Predicated region
    $region13: #{fno_forward.3} parent=5 // pred_check
      %p102 = pneg %p101
    $region14: #{fno_forward.3} parent=5 // pred_check_branch
      %104 = sbr.rel (%p102) target = $region16
    $region15: #{fno_forward.3} parent=5 // pred_region
      // Predicated region
      $region17: #{fno_forward.3} parent=15 // pred_check
        %p105 = pneg %p28
      $region18: #{fno_forward.3} parent=15 // pred_check_branch
        %107 = sbr.rel (%p105) target = $region20
      $region19: #{fno_forward.3} parent=15 // pred_region
        %p108 = scmp.lt.s32.totalorder %s8, 1
        %s109 = scalar_select %p108, %s8, 1
        %s110 = smul.addr %s109, 4
        %s111 = smul.addr %s110, 4
        %s112 = scalar_lea.vmem %s0, %s111
      $region20: #{fno_forward.3} parent=15 // pred_fallthru
        _
      // Predicated region
      $region21: #{fno_forward.3} parent=15 // pred_check
        %p113 = pneg %p54
      $region22: #{fno_forward.3} parent=15 // pred_check_branch
        %115 = sbr.rel (%p113) target = $region24
      $region23: #{fno_forward.3} parent=15 // pred_region
        %p116 = scmp.lt.s32.totalorder %s8, 1
        %s117 = scalar_select %p116, %s8, 1
        %s118 = smul.addr %s117, 64
        %s119 = smul.addr %s118, 4
        %s120 = scalar_lea.vmem %s1, %s119
      $region24: #{fno_forward.3} parent=15 // pred_fallthru
        _
    $region16: #{fno_forward.3} parent=5 // pred_fallthru
      _
    %p121 = scmp.le.s32.totalorder 1, %s8
    %p122 = scmp.lt.s32.totalorder %s8, 3
    %p123 = pnand %p121, %p122
    %p124 = pneg %p123
    // Predicated region
    $region25: #{fno_forward.3} parent=5 // pred_check
      _
    $region26: #{fno_forward.3} parent=5 // pred_check_branch
      %126 = sbr.rel (%p123) target = $region28
    $region27: #{fno_forward.3} parent=5 // pred_region
      %s127 = ssub.s32 %s8, 1
      %p128 = scmp.lt.s32.totalorder %s13, 1
      %s129 = scalar_select %p128, %s13, 1
      %s130 = smul.addr %s129, 4
      %s131 = smul.addr %s130, 4
      %s132 = scalar_lea.vmem %s0, %s131
      %p133 = pneg %p34
      %p134 = pneg %p31
      %p135 = scmp.lt.s32.totalorder %s13, 1
      %s136 = scalar_select %p135, %s13, 1
      %s137 = smul.addr %s136, 64
      %s138 = smul.addr %s137, 4
      %s139 = scalar_lea.vmem %s1, %s138
      %p140 = pneg %p60
      %p141 = pneg %p57
      %p142 = pneg %p86
      %p143 = pneg %p83
      %p144 = scmp.lt.s32.totalorder %s13, 1
      %s145 = scalar_select %p144, %s13, 1
      %s146 = smul.addr %s145, 16
      %s147 = smul.addr %s146, 8
      %s148 = scalar_lea.vmem %s2, %s147
      %p149 = scmp.lt.s32.totalorder %s13, 1
      %s150 = scalar_select %p149, %s13, 1
      %s151 = smul.addr %s150, 4
      %s152 = smul.addr %s151, 4
      %s153 = scalar_lea.vmem %s0, %s152
      %p154 = scmp.lt.s32.totalorder %s13, 1
      %s155 = scalar_select %p154, %s13, 1
      %s156 = smul.addr %s155, 64
      %s157 = smul.addr %s156, 4
      %s158 = scalar_lea.vmem %s1, %s157
      %p159 = scmp.lt.s32.totalorder %s13, 1
      %s160 = scalar_select %p159, %s13, 1
      %s161 = smul.addr %s160, 16
      %s162 = smul.addr %s161, 8
      %s163 = scalar_lea.vmem %s2, %s162
      %v164 = vld [vmem:[%s158] sm:$0x77]
      %v165 = vld [vmem:[%s158 + $0x8] sm:$0x77]
      %v166 = vld [vmem:[%s158 + $0x10] sm:$0x77]
      %v167 = vld [vmem:[%s158 + $0x18] sm:$0x77]
      %v168 = vld [vmem:[%s158 + $0x20] sm:$0x77]
      %v169 = vld [vmem:[%s158 + $0x28] sm:$0x77]
      %v170 = vld [vmem:[%s158 + $0x30] sm:$0x77]
      %v171 = vld [vmem:[%s158 + $0x38] sm:$0x77]
      %v172 = vld [vmem:[%s158 + $0x40] sm:$0x77]
      %v173 = vld [vmem:[%s158 + $0x48] sm:$0x77]
      %v174 = vld [vmem:[%s158 + $0x50] sm:$0x77]
      %v175 = vld [vmem:[%s158 + $0x58] sm:$0x77]
      %v176 = vld [vmem:[%s158 + $0x60] sm:$0x77]
      %v177 = vld [vmem:[%s158 + $0x68] sm:$0x77]
      %v178 = vld [vmem:[%s158 + $0x70] sm:$0x77]
      %v179 = vld [vmem:[%s158 + $0x78] sm:$0x77]
      %v180 = vld [vmem:[%s158 + $0x80] sm:$0x77]
      %v181 = vld [vmem:[%s158 + $0x88] sm:$0x77]
      %v182 = vld [vmem:[%s158 + $0x90] sm:$0x77]
      %v183 = vld [vmem:[%s158 + $0x98] sm:$0x77]
      %v184 = vld [vmem:[%s158 + $0xa0] sm:$0x77]
      %v185 = vld [vmem:[%s158 + $0xa8] sm:$0x77]
      %v186 = vld [vmem:[%s158 + $0xb0] sm:$0x77]
      %v187 = vld [vmem:[%s158 + $0xb8] sm:$0x77]
      %v188 = vld [vmem:[%s158 + $0xc0] sm:$0x77]
      %v189 = vld [vmem:[%s158 + $0xc8] sm:$0x77]
      %v190 = vld [vmem:[%s158 + $0xd0] sm:$0x77]
      %v191 = vld [vmem:[%s158 + $0xd8] sm:$0x77]
      %v192 = vld [vmem:[%s158 + $0xe0] sm:$0x77]
      %v193 = vld [vmem:[%s158 + $0xe8] sm:$0x77]
      %v194 = vld [vmem:[%s158 + $0xf0] sm:$0x77]
      %v195 = vld [vmem:[%s158 + $0xf8] sm:$0x77]
      %v196 = vld [vmem:[%s153] sm:$0x77]
      %v197 = vmul.f32 %v196, %v164
      %v198 = vmul.f32 %v196, %v165
      %v199 = vmul.f32 %v196, %v166
      %v200 = vmul.f32 %v196, %v167
      %v201 = vmul.f32 %v196, %v168
      %v202 = vmul.f32 %v196, %v169
      %v203 = vmul.f32 %v196, %v170
      %v204 = vmul.f32 %v196, %v171
      %v205 = vmul.f32 %v196, %v172
      %v206 = vmul.f32 %v196, %v173
      %v207 = vmul.f32 %v196, %v174
      %v208 = vmul.f32 %v196, %v175
      %v209 = vmul.f32 %v196, %v176
      %v210 = vmul.f32 %v196, %v177
      %v211 = vmul.f32 %v196, %v178
      %v212 = vmul.f32 %v196, %v179
      %v213 = vmul.f32 %v196, %v180
      %v214 = vmul.f32 %v196, %v181
      %v215 = vmul.f32 %v196, %v182
      %v216 = vmul.f32 %v196, %v183
      %v217 = vmul.f32 %v196, %v184
      %v218 = vmul.f32 %v196, %v185
      %v219 = vmul.f32 %v196, %v186
      %v220 = vmul.f32 %v196, %v187
      %v221 = vmul.f32 %v196, %v188
      %v222 = vmul.f32 %v196, %v189
      %v223 = vmul.f32 %v196, %v190
      %v224 = vmul.f32 %v196, %v191
      %v225 = vmul.f32 %v196, %v192
      %v226 = vmul.f32 %v196, %v193
      %v227 = vmul.f32 %v196, %v194
      %v228 = vmul.f32 %v196, %v195
      %v230 = vrot.slane %v196, 4
      %v264 = vrot.slane %v164, 4
      %v265 = vrot.slane %v165, 4
      %v266 = vrot.slane %v166, 4
      %v267 = vrot.slane %v167, 4
      %v268 = vrot.slane %v168, 4
      %v269 = vrot.slane %v169, 4
      %v270 = vrot.slane %v170, 4
      %v271 = vrot.slane %v171, 4
      %v272 = vrot.slane %v172, 4
      %v273 = vrot.slane %v173, 4
      %v274 = vrot.slane %v174, 4
      %v275 = vrot.slane %v175, 4
      %v276 = vrot.slane %v176, 4
      %v277 = vrot.slane %v177, 4
      %v278 = vrot.slane %v178, 4
      %v279 = vrot.slane %v179, 4
      %v280 = vrot.slane %v180, 4
      %v281 = vrot.slane %v181, 4
      %v282 = vrot.slane %v182, 4
      %v283 = vrot.slane %v183, 4
      %v284 = vrot.slane %v184, 4
      %v285 = vrot.slane %v185, 4
      %v286 = vrot.slane %v186, 4
      %v287 = vrot.slane %v187, 4
      %v288 = vrot.slane %v188, 4
      %v289 = vrot.slane %v189, 4
      %v290 = vrot.slane %v190, 4
      %v291 = vrot.slane %v191, 4
      %v292 = vrot.slane %v192, 4
      %v293 = vrot.slane %v193, 4
      %v294 = vrot.slane %v194, 4
      %v295 = vrot.slane %v195, 4
      %v328 = vmul.f32 %v230, %v264
      %v329 = vmul.f32 %v230, %v265
      %v330 = vmul.f32 %v230, %v266
      %v331 = vmul.f32 %v230, %v267
      %v332 = vmul.f32 %v230, %v268
      %v333 = vmul.f32 %v230, %v269
      %v334 = vmul.f32 %v230, %v270
      %v335 = vmul.f32 %v230, %v271
      %v336 = vmul.f32 %v230, %v272
      %v337 = vmul.f32 %v230, %v273
      %v338 = vmul.f32 %v230, %v274
      %v339 = vmul.f32 %v230, %v275
      %v340 = vmul.f32 %v230, %v276
      %v341 = vmul.f32 %v230, %v277
      %v342 = vmul.f32 %v230, %v278
      %v343 = vmul.f32 %v230, %v279
      %v344 = vmul.f32 %v230, %v280
      %v345 = vmul.f32 %v230, %v281
      %v346 = vmul.f32 %v230, %v282
      %v347 = vmul.f32 %v230, %v283
      %v348 = vmul.f32 %v230, %v284
      %v349 = vmul.f32 %v230, %v285
      %v350 = vmul.f32 %v230, %v286
      %v351 = vmul.f32 %v230, %v287
      %v352 = vmul.f32 %v230, %v288
      %v353 = vmul.f32 %v230, %v289
      %v354 = vmul.f32 %v230, %v290
      %v355 = vmul.f32 %v230, %v291
      %v356 = vmul.f32 %v230, %v292
      %v357 = vmul.f32 %v230, %v293
      %v358 = vmul.f32 %v230, %v294
      %v359 = vmul.f32 %v230, %v295
      %v360 = vsub.f32 %v197, %v328
      %v361 = vsub.f32 %v198, %v329
      %v362 = vsub.f32 %v199, %v330
      %v363 = vsub.f32 %v200, %v331
      %v364 = vsub.f32 %v201, %v332
      %v365 = vsub.f32 %v202, %v333
      %v366 = vsub.f32 %v203, %v334
      %v367 = vsub.f32 %v204, %v335
      %v368 = vsub.f32 %v205, %v336
      %v369 = vsub.f32 %v206, %v337
      %v370 = vsub.f32 %v207, %v338
      %v371 = vsub.f32 %v208, %v339
      %v372 = vsub.f32 %v209, %v340
      %v373 = vsub.f32 %v210, %v341
      %v374 = vsub.f32 %v211, %v342
      %v375 = vsub.f32 %v212, %v343
      %v376 = vsub.f32 %v213, %v344
      %v377 = vsub.f32 %v214, %v345
      %v378 = vsub.f32 %v215, %v346
      %v379 = vsub.f32 %v216, %v347
      %v380 = vsub.f32 %v217, %v348
      %v381 = vsub.f32 %v218, %v349
      %v382 = vsub.f32 %v219, %v350
      %v383 = vsub.f32 %v220, %v351
      %v384 = vsub.f32 %v221, %v352
      %v385 = vsub.f32 %v222, %v353
      %v386 = vsub.f32 %v223, %v354
      %v387 = vsub.f32 %v224, %v355
      %v388 = vsub.f32 %v225, %v356
      %v389 = vsub.f32 %v226, %v357
      %v390 = vsub.f32 %v227, %v358
      %v391 = vsub.f32 %v228, %v359
      %vm392 = vcmask 1042432
      %v393 = vsel %vm392, %v360, 0.0
      %v394 = vrot.slane %v393, 4
      %v395 = vadd.f32 %v393, %v394
      %v396 = vrot.slane %v395, 2
      %v397 = vadd.f32 %v395, %v396
      %v398 = vrot.slane %v397, 1
      %v399 = vadd.f32 %v397, %v398
      %v400 = vsel %vm392, %v361, 0.0
      %v401 = vrot.slane %v400, 4
      %v402 = vadd.f32 %v400, %v401
      %v403 = vrot.slane %v402, 2
      %v404 = vadd.f32 %v402, %v403
      %v405 = vrot.slane %v404, 1
      %v406 = vadd.f32 %v404, %v405
      %v407 = vsel %vm392, %v362, 0.0
      %v408 = vrot.slane %v407, 4
      %v409 = vadd.f32 %v407, %v408
      %v410 = vrot.slane %v409, 2
      %v411 = vadd.f32 %v409, %v410
      %v412 = vrot.slane %v411, 1
      %v413 = vadd.f32 %v411, %v412
      %v414 = vsel %vm392, %v363, 0.0
      %v415 = vrot.slane %v414, 4
      %v416 = vadd.f32 %v414, %v415
      %v417 = vrot.slane %v416, 2
      %v418 = vadd.f32 %v416, %v417
      %v419 = vrot.slane %v418, 1
      %v420 = vadd.f32 %v418, %v419
      %v421 = vsel %vm392, %v364, 0.0
      %v422 = vrot.slane %v421, 4
      %v423 = vadd.f32 %v421, %v422
      %v424 = vrot.slane %v423, 2
      %v425 = vadd.f32 %v423, %v424
      %v426 = vrot.slane %v425, 1
      %v427 = vadd.f32 %v425, %v426
      %v428 = vsel %vm392, %v365, 0.0
      %v429 = vrot.slane %v428, 4
      %v430 = vadd.f32 %v428, %v429
      %v431 = vrot.slane %v430, 2
      %v432 = vadd.f32 %v430, %v431
      %v433 = vrot.slane %v432, 1
      %v434 = vadd.f32 %v432, %v433
      %v435 = vsel %vm392, %v366, 0.0
      %v436 = vrot.slane %v435, 4
      %v437 = vadd.f32 %v435, %v436
      %v438 = vrot.slane %v437, 2
      %v439 = vadd.f32 %v437, %v438
      %v440 = vrot.slane %v439, 1
      %v441 = vadd.f32 %v439, %v440
      %v442 = vsel %vm392, %v367, 0.0
      %v443 = vrot.slane %v442, 4
      %v444 = vadd.f32 %v442, %v443
      %v445 = vrot.slane %v444, 2
      %v446 = vadd.f32 %v444, %v445
      %v447 = vrot.slane %v446, 1
      %v448 = vadd.f32 %v446, %v447
      %v449 = vsel %vm392, %v368, 0.0
      %v450 = vrot.slane %v449, 4
      %v451 = vadd.f32 %v449, %v450
      %v452 = vrot.slane %v451, 2
      %v453 = vadd.f32 %v451, %v452
      %v454 = vrot.slane %v453, 1
      %v455 = vadd.f32 %v453, %v454
      %v456 = vsel %vm392, %v369, 0.0
      %v457 = vrot.slane %v456, 4
      %v458 = vadd.f32 %v456, %v457
      %v459 = vrot.slane %v458, 2
      %v460 = vadd.f32 %v458, %v459
      %v461 = vrot.slane %v460, 1
      %v462 = vadd.f32 %v460, %v461
      %v463 = vsel %vm392, %v370, 0.0
      %v464 = vrot.slane %v463, 4
      %v465 = vadd.f32 %v463, %v464
      %v466 = vrot.slane %v465, 2
      %v467 = vadd.f32 %v465, %v466
      %v468 = vrot.slane %v467, 1
      %v469 = vadd.f32 %v467, %v468
      %v470 = vsel %vm392, %v371, 0.0
      %v471 = vrot.slane %v470, 4
      %v472 = vadd.f32 %v470, %v471
      %v473 = vrot.slane %v472, 2
      %v474 = vadd.f32 %v472, %v473
      %v475 = vrot.slane %v474, 1
      %v476 = vadd.f32 %v474, %v475
      %v477 = vsel %vm392, %v372, 0.0
      %v478 = vrot.slane %v477, 4
      %v479 = vadd.f32 %v477, %v478
      %v480 = vrot.slane %v479, 2
      %v481 = vadd.f32 %v479, %v480
      %v482 = vrot.slane %v481, 1
      %v483 = vadd.f32 %v481, %v482
      %v484 = vsel %vm392, %v373, 0.0
      %v485 = vrot.slane %v484, 4
      %v486 = vadd.f32 %v484, %v485
      %v487 = vrot.slane %v486, 2
      %v488 = vadd.f32 %v486, %v487
      %v489 = vrot.slane %v488, 1
      %v490 = vadd.f32 %v488, %v489
      %v491 = vsel %vm392, %v374, 0.0
      %v492 = vrot.slane %v491, 4
      %v493 = vadd.f32 %v491, %v492
      %v494 = vrot.slane %v493, 2
      %v495 = vadd.f32 %v493, %v494
      %v496 = vrot.slane %v495, 1
      %v497 = vadd.f32 %v495, %v496
      %v498 = vsel %vm392, %v375, 0.0
      %v499 = vrot.slane %v498, 4
      %v500 = vadd.f32 %v498, %v499
      %v501 = vrot.slane %v500, 2
      %v502 = vadd.f32 %v500, %v501
      %v503 = vrot.slane %v502, 1
      %v504 = vadd.f32 %v502, %v503
      %v505 = vsel %vm392, %v376, 0.0
      %v506 = vrot.slane %v505, 4
      %v507 = vadd.f32 %v505, %v506
      %v508 = vrot.slane %v507, 2
      %v509 = vadd.f32 %v507, %v508
      %v510 = vrot.slane %v509, 1
      %v511 = vadd.f32 %v509, %v510
      %v512 = vsel %vm392, %v377, 0.0
      %v513 = vrot.slane %v512, 4
      %v514 = vadd.f32 %v512, %v513
      %v515 = vrot.slane %v514, 2
      %v516 = vadd.f32 %v514, %v515
      %v517 = vrot.slane %v516, 1
      %v518 = vadd.f32 %v516, %v517
      %v519 = vsel %vm392, %v378, 0.0
      %v520 = vrot.slane %v519, 4
      %v521 = vadd.f32 %v519, %v520
      %v522 = vrot.slane %v521, 2
      %v523 = vadd.f32 %v521, %v522
      %v524 = vrot.slane %v523, 1
      %v525 = vadd.f32 %v523, %v524
      %v526 = vsel %vm392, %v379, 0.0
      %v527 = vrot.slane %v526, 4
      %v528 = vadd.f32 %v526, %v527
      %v529 = vrot.slane %v528, 2
      %v530 = vadd.f32 %v528, %v529
      %v531 = vrot.slane %v530, 1
      %v532 = vadd.f32 %v530, %v531
      %v533 = vsel %vm392, %v380, 0.0
      %v534 = vrot.slane %v533, 4
      %v535 = vadd.f32 %v533, %v534
      %v536 = vrot.slane %v535, 2
      %v537 = vadd.f32 %v535, %v536
      %v538 = vrot.slane %v537, 1
      %v539 = vadd.f32 %v537, %v538
      %v540 = vsel %vm392, %v381, 0.0
      %v541 = vrot.slane %v540, 4
      %v542 = vadd.f32 %v540, %v541
      %v543 = vrot.slane %v542, 2
      %v544 = vadd.f32 %v542, %v543
      %v545 = vrot.slane %v544, 1
      %v546 = vadd.f32 %v544, %v545
      %v547 = vsel %vm392, %v382, 0.0
      %v548 = vrot.slane %v547, 4
      %v549 = vadd.f32 %v547, %v548
      %v550 = vrot.slane %v549, 2
      %v551 = vadd.f32 %v549, %v550
      %v552 = vrot.slane %v551, 1
      %v553 = vadd.f32 %v551, %v552
      %v554 = vsel %vm392, %v383, 0.0
      %v555 = vrot.slane %v554, 4
      %v556 = vadd.f32 %v554, %v555
      %v557 = vrot.slane %v556, 2
      %v558 = vadd.f32 %v556, %v557
      %v559 = vrot.slane %v558, 1
      %v560 = vadd.f32 %v558, %v559
      %v561 = vsel %vm392, %v384, 0.0
      %v562 = vrot.slane %v561, 4
      %v563 = vadd.f32 %v561, %v562
      %v564 = vrot.slane %v563, 2
      %v565 = vadd.f32 %v563, %v564
      %v566 = vrot.slane %v565, 1
      %v567 = vadd.f32 %v565, %v566
      %v568 = vsel %vm392, %v385, 0.0
      %v569 = vrot.slane %v568, 4
      %v570 = vadd.f32 %v568, %v569
      %v571 = vrot.slane %v570, 2
      %v572 = vadd.f32 %v570, %v571
      %v573 = vrot.slane %v572, 1
      %v574 = vadd.f32 %v572, %v573
      %v575 = vsel %vm392, %v386, 0.0
      %v576 = vrot.slane %v575, 4
      %v577 = vadd.f32 %v575, %v576
      %v578 = vrot.slane %v577, 2
      %v579 = vadd.f32 %v577, %v578
      %v580 = vrot.slane %v579, 1
      %v581 = vadd.f32 %v579, %v580
      %v582 = vsel %vm392, %v387, 0.0
      %v583 = vrot.slane %v582, 4
      %v584 = vadd.f32 %v582, %v583
      %v585 = vrot.slane %v584, 2
      %v586 = vadd.f32 %v584, %v585
      %v587 = vrot.slane %v586, 1
      %v588 = vadd.f32 %v586, %v587
      %v589 = vsel %vm392, %v388, 0.0
      %v590 = vrot.slane %v589, 4
      %v591 = vadd.f32 %v589, %v590
      %v592 = vrot.slane %v591, 2
      %v593 = vadd.f32 %v591, %v592
      %v594 = vrot.slane %v593, 1
      %v595 = vadd.f32 %v593, %v594
      %v596 = vsel %vm392, %v389, 0.0
      %v597 = vrot.slane %v596, 4
      %v598 = vadd.f32 %v596, %v597
      %v599 = vrot.slane %v598, 2
      %v600 = vadd.f32 %v598, %v599
      %v601 = vrot.slane %v600, 1
      %v602 = vadd.f32 %v600, %v601
      %v603 = vsel %vm392, %v390, 0.0
      %v604 = vrot.slane %v603, 4
      %v605 = vadd.f32 %v603, %v604
      %v606 = vrot.slane %v605, 2
      %v607 = vadd.f32 %v605, %v606
      %v608 = vrot.slane %v607, 1
      %v609 = vadd.f32 %v607, %v608
      %v610 = vsel %vm392, %v391, 0.0
      %v611 = vrot.slane %v610, 4
      %v612 = vadd.f32 %v610, %v611
      %v613 = vrot.slane %v612, 2
      %v614 = vadd.f32 %v612, %v613
      %v615 = vrot.slane %v614, 1
      %v616 = vadd.f32 %v614, %v615
      %v617 = vmul.f32 %v230, %v164
      %v618 = vmul.f32 %v230, %v165
      %v619 = vmul.f32 %v230, %v166
      %v620 = vmul.f32 %v230, %v167
      %v621 = vmul.f32 %v230, %v168
      %v622 = vmul.f32 %v230, %v169
      %v623 = vmul.f32 %v230, %v170
      %v624 = vmul.f32 %v230, %v171
      %v625 = vmul.f32 %v230, %v172
      %v626 = vmul.f32 %v230, %v173
      %v627 = vmul.f32 %v230, %v174
      %v628 = vmul.f32 %v230, %v175
      %v629 = vmul.f32 %v230, %v176
      %v630 = vmul.f32 %v230, %v177
      %v631 = vmul.f32 %v230, %v178
      %v632 = vmul.f32 %v230, %v179
      %v633 = vmul.f32 %v230, %v180
      %v634 = vmul.f32 %v230, %v181
      %v635 = vmul.f32 %v230, %v182
      %v636 = vmul.f32 %v230, %v183
      %v637 = vmul.f32 %v230, %v184
      %v638 = vmul.f32 %v230, %v185
      %v639 = vmul.f32 %v230, %v186
      %v640 = vmul.f32 %v230, %v187
      %v641 = vmul.f32 %v230, %v188
      %v642 = vmul.f32 %v230, %v189
      %v643 = vmul.f32 %v230, %v190
      %v644 = vmul.f32 %v230, %v191
      %v645 = vmul.f32 %v230, %v192
      %v646 = vmul.f32 %v230, %v193
      %v647 = vmul.f32 %v230, %v194
      %v648 = vmul.f32 %v230, %v195
      %v649 = vmul.f32 %v196, %v264
      %v650 = vmul.f32 %v196, %v265
      %v651 = vmul.f32 %v196, %v266
      %v652 = vmul.f32 %v196, %v267
      %v653 = vmul.f32 %v196, %v268
      %v654 = vmul.f32 %v196, %v269
      %v655 = vmul.f32 %v196, %v270
      %v656 = vmul.f32 %v196, %v271
      %v657 = vmul.f32 %v196, %v272
      %v658 = vmul.f32 %v196, %v273
      %v659 = vmul.f32 %v196, %v274
      %v660 = vmul.f32 %v196, %v275
      %v661 = vmul.f32 %v196, %v276
      %v662 = vmul.f32 %v196, %v277
      %v663 = vmul.f32 %v196, %v278
      %v664 = vmul.f32 %v196, %v279
      %v665 = vmul.f32 %v196, %v280
      %v666 = vmul.f32 %v196, %v281
      %v667 = vmul.f32 %v196, %v282
      %v668 = vmul.f32 %v196, %v283
      %v669 = vmul.f32 %v196, %v284
      %v670 = vmul.f32 %v196, %v285
      %v671 = vmul.f32 %v196, %v286
      %v672 = vmul.f32 %v196, %v287
      %v673 = vmul.f32 %v196, %v288
      %v674 = vmul.f32 %v196, %v289
      %v675 = vmul.f32 %v196, %v290
      %v676 = vmul.f32 %v196, %v291
      %v677 = vmul.f32 %v196, %v292
      %v678 = vmul.f32 %v196, %v293
      %v679 = vmul.f32 %v196, %v294
      %v680 = vmul.f32 %v196, %v295
      %v681 = vadd.f32 %v617, %v649
      %v682 = vadd.f32 %v618, %v650
      %v683 = vadd.f32 %v619, %v651
      %v684 = vadd.f32 %v620, %v652
      %v685 = vadd.f32 %v621, %v653
      %v686 = vadd.f32 %v622, %v654
      %v687 = vadd.f32 %v623, %v655
      %v688 = vadd.f32 %v624, %v656
      %v689 = vadd.f32 %v625, %v657
      %v690 = vadd.f32 %v626, %v658
      %v691 = vadd.f32 %v627, %v659
      %v692 = vadd.f32 %v628, %v660
      %v693 = vadd.f32 %v629, %v661
      %v694 = vadd.f32 %v630, %v662
      %v695 = vadd.f32 %v631, %v663
      %v696 = vadd.f32 %v632, %v664
      %v697 = vadd.f32 %v633, %v665
      %v698 = vadd.f32 %v634, %v666
      %v699 = vadd.f32 %v635, %v667
      %v700 = vadd.f32 %v636, %v668
      %v701 = vadd.f32 %v637, %v669
      %v702 = vadd.f32 %v638, %v670
      %v703 = vadd.f32 %v639, %v671
      %v704 = vadd.f32 %v640, %v672
      %v705 = vadd.f32 %v641, %v673
      %v706 = vadd.f32 %v642, %v674
      %v707 = vadd.f32 %v643, %v675
      %v708 = vadd.f32 %v644, %v676
      %v709 = vadd.f32 %v645, %v677
      %v710 = vadd.f32 %v646, %v678
      %v711 = vadd.f32 %v647, %v679
      %v712 = vadd.f32 %v648, %v680
      %v713 = vsel %vm392, %v681, 0.0
      %v714 = vrot.slane %v713, 4
      %v715 = vadd.f32 %v713, %v714
      %v716 = vrot.slane %v715, 2
      %v717 = vadd.f32 %v715, %v716
      %v718 = vrot.slane %v717, 1
      %v719 = vadd.f32 %v717, %v718
      %v720 = vsel %vm392, %v682, 0.0
      %v721 = vrot.slane %v720, 4
      %v722 = vadd.f32 %v720, %v721
      %v723 = vrot.slane %v722, 2
      %v724 = vadd.f32 %v722, %v723
      %v725 = vrot.slane %v724, 1
      %v726 = vadd.f32 %v724, %v725
      %v727 = vsel %vm392, %v683, 0.0
      %v728 = vrot.slane %v727, 4
      %v729 = vadd.f32 %v727, %v728
      %v730 = vrot.slane %v729, 2
      %v731 = vadd.f32 %v729, %v730
      %v732 = vrot.slane %v731, 1
      %v733 = vadd.f32 %v731, %v732
      %v734 = vsel %vm392, %v684, 0.0
      %v735 = vrot.slane %v734, 4
      %v736 = vadd.f32 %v734, %v735
      %v737 = vrot.slane %v736, 2
      %v738 = vadd.f32 %v736, %v737
      %v739 = vrot.slane %v738, 1
      %v740 = vadd.f32 %v738, %v739
      %v741 = vsel %vm392, %v685, 0.0
      %v742 = vrot.slane %v741, 4
      %v743 = vadd.f32 %v741, %v742
      %v744 = vrot.slane %v743, 2
      %v745 = vadd.f32 %v743, %v744
      %v746 = vrot.slane %v745, 1
      %v747 = vadd.f32 %v745, %v746
      %v748 = vsel %vm392, %v686, 0.0
      %v749 = vrot.slane %v748, 4
      %v750 = vadd.f32 %v748, %v749
      %v751 = vrot.slane %v750, 2
      %v752 = vadd.f32 %v750, %v751
      %v753 = vrot.slane %v752, 1
      %v754 = vadd.f32 %v752, %v753
      %v755 = vsel %vm392, %v687, 0.0
      %v756 = vrot.slane %v755, 4
      %v757 = vadd.f32 %v755, %v756
      %v758 = vrot.slane %v757, 2
      %v759 = vadd.f32 %v757, %v758
      %v760 = vrot.slane %v759, 1
      %v761 = vadd.f32 %v759, %v760
      %v762 = vsel %vm392, %v688, 0.0
      %v763 = vrot.slane %v762, 4
      %v764 = vadd.f32 %v762, %v763
      %v765 = vrot.slane %v764, 2
      %v766 = vadd.f32 %v764, %v765
      %v767 = vrot.slane %v766, 1
      %v768 = vadd.f32 %v766, %v767
      %v769 = vsel %vm392, %v689, 0.0
      %v770 = vrot.slane %v769, 4
      %v771 = vadd.f32 %v769, %v770
      %v772 = vrot.slane %v771, 2
      %v773 = vadd.f32 %v771, %v772
      %v774 = vrot.slane %v773, 1
      %v775 = vadd.f32 %v773, %v774
      %v776 = vsel %vm392, %v690, 0.0
      %v777 = vrot.slane %v776, 4
      %v778 = vadd.f32 %v776, %v777
      %v779 = vrot.slane %v778, 2
      %v780 = vadd.f32 %v778, %v779
      %v781 = vrot.slane %v780, 1
      %v782 = vadd.f32 %v780, %v781
      %v783 = vsel %vm392, %v691, 0.0
      %v784 = vrot.slane %v783, 4
      %v785 = vadd.f32 %v783, %v784
      %v786 = vrot.slane %v785, 2
      %v787 = vadd.f32 %v785, %v786
      %v788 = vrot.slane %v787, 1
      %v789 = vadd.f32 %v787, %v788
      %v790 = vsel %vm392, %v692, 0.0
      %v791 = vrot.slane %v790, 4
      %v792 = vadd.f32 %v790, %v791
      %v793 = vrot.slane %v792, 2
      %v794 = vadd.f32 %v792, %v793
      %v795 = vrot.slane %v794, 1
      %v796 = vadd.f32 %v794, %v795
      %v797 = vsel %vm392, %v693, 0.0
      %v798 = vrot.slane %v797, 4
      %v799 = vadd.f32 %v797, %v798
      %v800 = vrot.slane %v799, 2
      %v801 = vadd.f32 %v799, %v800
      %v802 = vrot.slane %v801, 1
      %v803 = vadd.f32 %v801, %v802
      %v804 = vsel %vm392, %v694, 0.0
      %v805 = vrot.slane %v804, 4
      %v806 = vadd.f32 %v804, %v805
      %v807 = vrot.slane %v806, 2
      %v808 = vadd.f32 %v806, %v807
      %v809 = vrot.slane %v808, 1
      %v810 = vadd.f32 %v808, %v809
      %v811 = vsel %vm392, %v695, 0.0
      %v812 = vrot.slane %v811, 4
      %v813 = vadd.f32 %v811, %v812
      %v814 = vrot.slane %v813, 2
      %v815 = vadd.f32 %v813, %v814
      %v816 = vrot.slane %v815, 1
      %v817 = vadd.f32 %v815, %v816
      %v818 = vsel %vm392, %v696, 0.0
      %v819 = vrot.slane %v818, 4
      %v820 = vadd.f32 %v818, %v819
      %v821 = vrot.slane %v820, 2
      %v822 = vadd.f32 %v820, %v821
      %v823 = vrot.slane %v822, 1
      %v824 = vadd.f32 %v822, %v823
      %v825 = vsel %vm392, %v697, 0.0
      %v826 = vrot.slane %v825, 4
      %v827 = vadd.f32 %v825, %v826
      %v828 = vrot.slane %v827, 2
      %v829 = vadd.f32 %v827, %v828
      %v830 = vrot.slane %v829, 1
      %v831 = vadd.f32 %v829, %v830
      %v832 = vsel %vm392, %v698, 0.0
      %v833 = vrot.slane %v832, 4
      %v834 = vadd.f32 %v832, %v833
      %v835 = vrot.slane %v834, 2
      %v836 = vadd.f32 %v834, %v835
      %v837 = vrot.slane %v836, 1
      %v838 = vadd.f32 %v836, %v837
      %v839 = vsel %vm392, %v699, 0.0
      %v840 = vrot.slane %v839, 4
      %v841 = vadd.f32 %v839, %v840
      %v842 = vrot.slane %v841, 2
      %v843 = vadd.f32 %v841, %v842
      %v844 = vrot.slane %v843, 1
      %v845 = vadd.f32 %v843, %v844
      %v846 = vsel %vm392, %v700, 0.0
      %v847 = vrot.slane %v846, 4
      %v848 = vadd.f32 %v846, %v847
      %v849 = vrot.slane %v848, 2
      %v850 = vadd.f32 %v848, %v849
      %v851 = vrot.slane %v850, 1
      %v852 = vadd.f32 %v850, %v851
      %v853 = vsel %vm392, %v701, 0.0
      %v854 = vrot.slane %v853, 4
      %v855 = vadd.f32 %v853, %v854
      %v856 = vrot.slane %v855, 2
      %v857 = vadd.f32 %v855, %v856
      %v858 = vrot.slane %v857, 1
      %v859 = vadd.f32 %v857, %v858
      %v860 = vsel %vm392, %v702, 0.0
      %v861 = vrot.slane %v860, 4
      %v862 = vadd.f32 %v860, %v861
      %v863 = vrot.slane %v862, 2
      %v864 = vadd.f32 %v862, %v863
      %v865 = vrot.slane %v864, 1
      %v866 = vadd.f32 %v864, %v865
      %v867 = vsel %vm392, %v703, 0.0
      %v868 = vrot.slane %v867, 4
      %v869 = vadd.f32 %v867, %v868
      %v870 = vrot.slane %v869, 2
      %v871 = vadd.f32 %v869, %v870
      %v872 = vrot.slane %v871, 1
      %v873 = vadd.f32 %v871, %v872
      %v874 = vsel %vm392, %v704, 0.0
      %v875 = vrot.slane %v874, 4
      %v876 = vadd.f32 %v874, %v875
      %v877 = vrot.slane %v876, 2
      %v878 = vadd.f32 %v876, %v877
      %v879 = vrot.slane %v878, 1
      %v880 = vadd.f32 %v878, %v879
      %v881 = vsel %vm392, %v705, 0.0
      %v882 = vrot.slane %v881, 4
      %v883 = vadd.f32 %v881, %v882
      %v884 = vrot.slane %v883, 2
      %v885 = vadd.f32 %v883, %v884
      %v886 = vrot.slane %v885, 1
      %v887 = vadd.f32 %v885, %v886
      %v888 = vsel %vm392, %v706, 0.0
      %v889 = vrot.slane %v888, 4
      %v890 = vadd.f32 %v888, %v889
      %v891 = vrot.slane %v890, 2
      %v892 = vadd.f32 %v890, %v891
      %v893 = vrot.slane %v892, 1
      %v894 = vadd.f32 %v892, %v893
      %v895 = vsel %vm392, %v707, 0.0
      %v896 = vrot.slane %v895, 4
      %v897 = vadd.f32 %v895, %v896
      %v898 = vrot.slane %v897, 2
      %v899 = vadd.f32 %v897, %v898
      %v900 = vrot.slane %v899, 1
      %v901 = vadd.f32 %v899, %v900
      %v902 = vsel %vm392, %v708, 0.0
      %v903 = vrot.slane %v902, 4
      %v904 = vadd.f32 %v902, %v903
      %v905 = vrot.slane %v904, 2
      %v906 = vadd.f32 %v904, %v905
      %v907 = vrot.slane %v906, 1
      %v908 = vadd.f32 %v906, %v907
      %v909 = vsel %vm392, %v709, 0.0
      %v910 = vrot.slane %v909, 4
      %v911 = vadd.f32 %v909, %v910
      %v912 = vrot.slane %v911, 2
      %v913 = vadd.f32 %v911, %v912
      %v914 = vrot.slane %v913, 1
      %v915 = vadd.f32 %v913, %v914
      %v916 = vsel %vm392, %v710, 0.0
      %v917 = vrot.slane %v916, 4
      %v918 = vadd.f32 %v916, %v917
      %v919 = vrot.slane %v918, 2
      %v920 = vadd.f32 %v918, %v919
      %v921 = vrot.slane %v920, 1
      %v922 = vadd.f32 %v920, %v921
      %v923 = vsel %vm392, %v711, 0.0
      %v924 = vrot.slane %v923, 4
      %v925 = vadd.f32 %v923, %v924
      %v926 = vrot.slane %v925, 2
      %v927 = vadd.f32 %v925, %v926
      %v928 = vrot.slane %v927, 1
      %v929 = vadd.f32 %v927, %v928
      %v930 = vsel %vm392, %v712, 0.0
      %v931 = vrot.slane %v930, 4
      %v932 = vadd.f32 %v930, %v931
      %v933 = vrot.slane %v932, 2
      %v934 = vadd.f32 %v932, %v933
      %v935 = vrot.slane %v934, 1
      %v936 = vadd.f32 %v934, %v935
      %vm969 = vcmask 1041409
      %v970 = vsel %vm969, %v406, %v399
      %vm971 = vcmask 1042434
      %v972 = vsel %vm971, %v413, %v970
      %vm973 = vcmask 1043459
      %v974 = vsel %vm973, %v420, %v972
      %vm975 = vcmask 1044484
      %v976 = vsel %vm975, %v427, %v974
      %vm977 = vcmask 1045509
      %v978 = vsel %vm977, %v434, %v976
      %vm979 = vcmask 1046534
      %v980 = vsel %vm979, %v441, %v978
      %vm981 = vcmask 1047559
      %v982 = vsel %vm981, %v448, %v980
      %v983 = vsel %vm969, %v462, %v455
      %v984 = vsel %vm971, %v469, %v983
      %v985 = vsel %vm973, %v476, %v984
      %v986 = vsel %vm975, %v483, %v985
      %v987 = vsel %vm977, %v490, %v986
      %v988 = vsel %vm979, %v497, %v987
      %v989 = vsel %vm981, %v504, %v988
      %v990 = vsel %vm969, %v518, %v511
      %v991 = vsel %vm971, %v525, %v990
      %v992 = vsel %vm973, %v532, %v991
      %v993 = vsel %vm975, %v539, %v992
      %v994 = vsel %vm977, %v546, %v993
      %v995 = vsel %vm979, %v553, %v994
      %v996 = vsel %vm981, %v560, %v995
      %v997 = vsel %vm969, %v574, %v567
      %v998 = vsel %vm971, %v581, %v997
      %v999 = vsel %vm973, %v588, %v998
      %v1000 = vsel %vm975, %v595, %v999
      %v1001 = vsel %vm977, %v602, %v1000
      %v1002 = vsel %vm979, %v609, %v1001
      %v1003 = vsel %vm981, %v616, %v1002
      %v1040 = vsel %vm969, %v726, %v719
      %v1041 = vsel %vm971, %v733, %v1040
      %v1042 = vsel %vm973, %v740, %v1041
      %v1043 = vsel %vm975, %v747, %v1042
      %v1044 = vsel %vm977, %v754, %v1043
      %v1045 = vsel %vm979, %v761, %v1044
      %v1046 = vsel %vm981, %v768, %v1045
      %v1047 = vsel %vm969, %v782, %v775
      %v1048 = vsel %vm971, %v789, %v1047
      %v1049 = vsel %vm973, %v796, %v1048
      %v1050 = vsel %vm975, %v803, %v1049
      %v1051 = vsel %vm977, %v810, %v1050
      %v1052 = vsel %vm979, %v817, %v1051
      %v1053 = vsel %vm981, %v824, %v1052
      %v1054 = vsel %vm969, %v838, %v831
      %v1055 = vsel %vm971, %v845, %v1054
      %v1056 = vsel %vm973, %v852, %v1055
      %v1057 = vsel %vm975, %v859, %v1056
      %v1058 = vsel %vm977, %v866, %v1057
      %v1059 = vsel %vm979, %v873, %v1058
      %v1060 = vsel %vm981, %v880, %v1059
      %v1061 = vsel %vm969, %v894, %v887
      %v1062 = vsel %vm971, %v901, %v1061
      %v1063 = vsel %vm973, %v908, %v1062
      %v1064 = vsel %vm975, %v915, %v1063
      %v1065 = vsel %vm977, %v922, %v1064
      %v1066 = vsel %vm979, %v929, %v1065
      %v1067 = vsel %vm981, %v936, %v1066
      %1072 = vst [vmem:[%s163] sm:$0xff] %v982
      %1073 = vst [vmem:[%s163 + $0x8] sm:$0xff] %v1046
      %1074 = vst [vmem:[%s163 + $0x10] sm:$0xff] %v989
      %1075 = vst [vmem:[%s163 + $0x18] sm:$0xff] %v1053
      %1076 = vst [vmem:[%s163 + $0x20] sm:$0xff] %v996
      %1077 = vst [vmem:[%s163 + $0x28] sm:$0xff] %v1060
      %1078 = vst [vmem:[%s163 + $0x30] sm:$0xff] %v1003
      %1079 = vst [vmem:[%s163 + $0x38] sm:$0xff] %v1067
      %s1080 = scalar_lea.vmem %s153, 8
      %v1081 = vld [vmem:[%s1080] sm:$0x77]
      %v1082 = vmul.f32 %v1081, %v164
      %v1083 = vmul.f32 %v1081, %v165
      %v1084 = vmul.f32 %v1081, %v166
      %v1085 = vmul.f32 %v1081, %v167
      %v1086 = vmul.f32 %v1081, %v168
      %v1087 = vmul.f32 %v1081, %v169
      %v1088 = vmul.f32 %v1081, %v170
      %v1089 = vmul.f32 %v1081, %v171
      %v1090 = vmul.f32 %v1081, %v172
      %v1091 = vmul.f32 %v1081, %v173
      %v1092 = vmul.f32 %v1081, %v174
      %v1093 = vmul.f32 %v1081, %v175
      %v1094 = vmul.f32 %v1081, %v176
      %v1095 = vmul.f32 %v1081, %v177
      %v1096 = vmul.f32 %v1081, %v178
      %v1097 = vmul.f32 %v1081, %v179
      %v1098 = vmul.f32 %v1081, %v180
      %v1099 = vmul.f32 %v1081, %v181
      %v1100 = vmul.f32 %v1081, %v182
      %v1101 = vmul.f32 %v1081, %v183
      %v1102 = vmul.f32 %v1081, %v184
      %v1103 = vmul.f32 %v1081, %v185
      %v1104 = vmul.f32 %v1081, %v186
      %v1105 = vmul.f32 %v1081, %v187
      %v1106 = vmul.f32 %v1081, %v188
      %v1107 = vmul.f32 %v1081, %v189
      %v1108 = vmul.f32 %v1081, %v190
      %v1109 = vmul.f32 %v1081, %v191
      %v1110 = vmul.f32 %v1081, %v192
      %v1111 = vmul.f32 %v1081, %v193
      %v1112 = vmul.f32 %v1081, %v194
      %v1113 = vmul.f32 %v1081, %v195
      %v1115 = vrot.slane %v1081, 4
      %v1117 = vmul.f32 %v1115, %v264
      %v1118 = vmul.f32 %v1115, %v265
      %v1119 = vmul.f32 %v1115, %v266
      %v1120 = vmul.f32 %v1115, %v267
      %v1121 = vmul.f32 %v1115, %v268
      %v1122 = vmul.f32 %v1115, %v269
      %v1123 = vmul.f32 %v1115, %v270
      %v1124 = vmul.f32 %v1115, %v271
      %v1125 = vmul.f32 %v1115, %v272
      %v1126 = vmul.f32 %v1115, %v273
      %v1127 = vmul.f32 %v1115, %v274
      %v1128 = vmul.f32 %v1115, %v275
      %v1129 = vmul.f32 %v1115, %v276
      %v1130 = vmul.f32 %v1115, %v277
      %v1131 = vmul.f32 %v1115, %v278
      %v1132 = vmul.f32 %v1115, %v279
      %v1133 = vmul.f32 %v1115, %v280
      %v1134 = vmul.f32 %v1115, %v281
      %v1135 = vmul.f32 %v1115, %v282
      %v1136 = vmul.f32 %v1115, %v283
      %v1137 = vmul.f32 %v1115, %v284
      %v1138 = vmul.f32 %v1115, %v285
      %v1139 = vmul.f32 %v1115, %v286
      %v1140 = vmul.f32 %v1115, %v287
      %v1141 = vmul.f32 %v1115, %v288
      %v1142 = vmul.f32 %v1115, %v289
      %v1143 = vmul.f32 %v1115, %v290
      %v1144 = vmul.f32 %v1115, %v291
      %v1145 = vmul.f32 %v1115, %v292
      %v1146 = vmul.f32 %v1115, %v293
      %v1147 = vmul.f32 %v1115, %v294
      %v1148 = vmul.f32 %v1115, %v295
      %v1149 = vsub.f32 %v1082, %v1117
      %v1150 = vsub.f32 %v1083, %v1118
      %v1151 = vsub.f32 %v1084, %v1119
      %v1152 = vsub.f32 %v1085, %v1120
      %v1153 = vsub.f32 %v1086, %v1121
      %v1154 = vsub.f32 %v1087, %v1122
      %v1155 = vsub.f32 %v1088, %v1123
      %v1156 = vsub.f32 %v1089, %v1124
      %v1157 = vsub.f32 %v1090, %v1125
      %v1158 = vsub.f32 %v1091, %v1126
      %v1159 = vsub.f32 %v1092, %v1127
      %v1160 = vsub.f32 %v1093, %v1128
      %v1161 = vsub.f32 %v1094, %v1129
      %v1162 = vsub.f32 %v1095, %v1130
      %v1163 = vsub.f32 %v1096, %v1131
      %v1164 = vsub.f32 %v1097, %v1132
      %v1165 = vsub.f32 %v1098, %v1133
      %v1166 = vsub.f32 %v1099, %v1134
      %v1167 = vsub.f32 %v1100, %v1135
      %v1168 = vsub.f32 %v1101, %v1136
      %v1169 = vsub.f32 %v1102, %v1137
      %v1170 = vsub.f32 %v1103, %v1138
      %v1171 = vsub.f32 %v1104, %v1139
      %v1172 = vsub.f32 %v1105, %v1140
      %v1173 = vsub.f32 %v1106, %v1141
      %v1174 = vsub.f32 %v1107, %v1142
      %v1175 = vsub.f32 %v1108, %v1143
      %v1176 = vsub.f32 %v1109, %v1144
      %v1177 = vsub.f32 %v1110, %v1145
      %v1178 = vsub.f32 %v1111, %v1146
      %v1179 = vsub.f32 %v1112, %v1147
      %v1180 = vsub.f32 %v1113, %v1148
      %v1181 = vsel %vm392, %v1149, 0.0
      %v1182 = vrot.slane %v1181, 4
      %v1183 = vadd.f32 %v1181, %v1182
      %v1184 = vrot.slane %v1183, 2
      %v1185 = vadd.f32 %v1183, %v1184
      %v1186 = vrot.slane %v1185, 1
      %v1187 = vadd.f32 %v1185, %v1186
      %v1188 = vsel %vm392, %v1150, 0.0
      %v1189 = vrot.slane %v1188, 4
      %v1190 = vadd.f32 %v1188, %v1189
      %v1191 = vrot.slane %v1190, 2
      %v1192 = vadd.f32 %v1190, %v1191
      %v1193 = vrot.slane %v1192, 1
      %v1194 = vadd.f32 %v1192, %v1193
      %v1195 = vsel %vm392, %v1151, 0.0
      %v1196 = vrot.slane %v1195, 4
      %v1197 = vadd.f32 %v1195, %v1196
      %v1198 = vrot.slane %v1197, 2
      %v1199 = vadd.f32 %v1197, %v1198
      %v1200 = vrot.slane %v1199, 1
      %v1201 = vadd.f32 %v1199, %v1200
      %v1202 = vsel %vm392, %v1152, 0.0
      %v1203 = vrot.slane %v1202, 4
      %v1204 = vadd.f32 %v1202, %v1203
      %v1205 = vrot.slane %v1204, 2
      %v1206 = vadd.f32 %v1204, %v1205
      %v1207 = vrot.slane %v1206, 1
      %v1208 = vadd.f32 %v1206, %v1207
      %v1209 = vsel %vm392, %v1153, 0.0
      %v1210 = vrot.slane %v1209, 4
      %v1211 = vadd.f32 %v1209, %v1210
      %v1212 = vrot.slane %v1211, 2
      %v1213 = vadd.f32 %v1211, %v1212
      %v1214 = vrot.slane %v1213, 1
      %v1215 = vadd.f32 %v1213, %v1214
      %v1216 = vsel %vm392, %v1154, 0.0
      %v1217 = vrot.slane %v1216, 4
      %v1218 = vadd.f32 %v1216, %v1217
      %v1219 = vrot.slane %v1218, 2
      %v1220 = vadd.f32 %v1218, %v1219
      %v1221 = vrot.slane %v1220, 1
      %v1222 = vadd.f32 %v1220, %v1221
      %v1223 = vsel %vm392, %v1155, 0.0
      %v1224 = vrot.slane %v1223, 4
      %v1225 = vadd.f32 %v1223, %v1224
      %v1226 = vrot.slane %v1225, 2
      %v1227 = vadd.f32 %v1225, %v1226
      %v1228 = vrot.slane %v1227, 1
      %v1229 = vadd.f32 %v1227, %v1228
      %v1230 = vsel %vm392, %v1156, 0.0
      %v1231 = vrot.slane %v1230, 4
      %v1232 = vadd.f32 %v1230, %v1231
      %v1233 = vrot.slane %v1232, 2
      %v1234 = vadd.f32 %v1232, %v1233
      %v1235 = vrot.slane %v1234, 1
      %v1236 = vadd.f32 %v1234, %v1235
      %v1237 = vsel %vm392, %v1157, 0.0
      %v1238 = vrot.slane %v1237, 4
      %v1239 = vadd.f32 %v1237, %v1238
      %v1240 = vrot.slane %v1239, 2
      %v1241 = vadd.f32 %v1239, %v1240
      %v1242 = vrot.slane %v1241, 1
      %v1243 = vadd.f32 %v1241, %v1242
      %v1244 = vsel %vm392, %v1158, 0.0
      %v1245 = vrot.slane %v1244, 4
      %v1246 = vadd.f32 %v1244, %v1245
      %v1247 = vrot.slane %v1246, 2
      %v1248 = vadd.f32 %v1246, %v1247
      %v1249 = vrot.slane %v1248, 1
      %v1250 = vadd.f32 %v1248, %v1249
      %v1251 = vsel %vm392, %v1159, 0.0
      %v1252 = vrot.slane %v1251, 4
      %v1253 = vadd.f32 %v1251, %v1252
      %v1254 = vrot.slane %v1253, 2
      %v1255 = vadd.f32 %v1253, %v1254
      %v1256 = vrot.slane %v1255, 1
      %v1257 = vadd.f32 %v1255, %v1256
      %v1258 = vsel %vm392, %v1160, 0.0
      %v1259 = vrot.slane %v1258, 4
      %v1260 = vadd.f32 %v1258, %v1259
      %v1261 = vrot.slane %v1260, 2
      %v1262 = vadd.f32 %v1260, %v1261
      %v1263 = vrot.slane %v1262, 1
      %v1264 = vadd.f32 %v1262, %v1263
      %v1265 = vsel %vm392, %v1161, 0.0
      %v1266 = vrot.slane %v1265, 4
      %v1267 = vadd.f32 %v1265, %v1266
      %v1268 = vrot.slane %v1267, 2
      %v1269 = vadd.f32 %v1267, %v1268
      %v1270 = vrot.slane %v1269, 1
      %v1271 = vadd.f32 %v1269, %v1270
      %v1272 = vsel %vm392, %v1162, 0.0
      %v1273 = vrot.slane %v1272, 4
      %v1274 = vadd.f32 %v1272, %v1273
      %v1275 = vrot.slane %v1274, 2
      %v1276 = vadd.f32 %v1274, %v1275
      %v1277 = vrot.slane %v1276, 1
      %v1278 = vadd.f32 %v1276, %v1277
      %v1279 = vsel %vm392, %v1163, 0.0
      %v1280 = vrot.slane %v1279, 4
      %v1281 = vadd.f32 %v1279, %v1280
      %v1282 = vrot.slane %v1281, 2
      %v1283 = vadd.f32 %v1281, %v1282
      %v1284 = vrot.slane %v1283, 1
      %v1285 = vadd.f32 %v1283, %v1284
      %v1286 = vsel %vm392, %v1164, 0.0
      %v1287 = vrot.slane %v1286, 4
      %v1288 = vadd.f32 %v1286, %v1287
      %v1289 = vrot.slane %v1288, 2
      %v1290 = vadd.f32 %v1288, %v1289
      %v1291 = vrot.slane %v1290, 1
      %v1292 = vadd.f32 %v1290, %v1291
      %v1293 = vsel %vm392, %v1165, 0.0
      %v1294 = vrot.slane %v1293, 4
      %v1295 = vadd.f32 %v1293, %v1294
      %v1296 = vrot.slane %v1295, 2
      %v1297 = vadd.f32 %v1295, %v1296
      %v1298 = vrot.slane %v1297, 1
      %v1299 = vadd.f32 %v1297, %v1298
      %v1300 = vsel %vm392, %v1166, 0.0
      %v1301 = vrot.slane %v1300, 4
      %v1302 = vadd.f32 %v1300, %v1301
      %v1303 = vrot.slane %v1302, 2
      %v1304 = vadd.f32 %v1302, %v1303
      %v1305 = vrot.slane %v1304, 1
      %v1306 = vadd.f32 %v1304, %v1305
      %v1307 = vsel %vm392, %v1167, 0.0
      %v1308 = vrot.slane %v1307, 4
      %v1309 = vadd.f32 %v1307, %v1308
      %v1310 = vrot.slane %v1309, 2
      %v1311 = vadd.f32 %v1309, %v1310
      %v1312 = vrot.slane %v1311, 1
      %v1313 = vadd.f32 %v1311, %v1312
      %v1314 = vsel %vm392, %v1168, 0.0
      %v1315 = vrot.slane %v1314, 4
      %v1316 = vadd.f32 %v1314, %v1315
      %v1317 = vrot.slane %v1316, 2
      %v1318 = vadd.f32 %v1316, %v1317
      %v1319 = vrot.slane %v1318, 1
      %v1320 = vadd.f32 %v1318, %v1319
      %v1321 = vsel %vm392, %v1169, 0.0
      %v1322 = vrot.slane %v1321, 4
      %v1323 = vadd.f32 %v1321, %v1322
      %v1324 = vrot.slane %v1323, 2
      %v1325 = vadd.f32 %v1323, %v1324
      %v1326 = vrot.slane %v1325, 1
      %v1327 = vadd.f32 %v1325, %v1326
      %v1328 = vsel %vm392, %v1170, 0.0
      %v1329 = vrot.slane %v1328, 4
      %v1330 = vadd.f32 %v1328, %v1329
      %v1331 = vrot.slane %v1330, 2
      %v1332 = vadd.f32 %v1330, %v1331
      %v1333 = vrot.slane %v1332, 1
      %v1334 = vadd.f32 %v1332, %v1333
      %v1335 = vsel %vm392, %v1171, 0.0
      %v1336 = vrot.slane %v1335, 4
      %v1337 = vadd.f32 %v1335, %v1336
      %v1338 = vrot.slane %v1337, 2
      %v1339 = vadd.f32 %v1337, %v1338
      %v1340 = vrot.slane %v1339, 1
      %v1341 = vadd.f32 %v1339, %v1340
      %v1342 = vsel %vm392, %v1172, 0.0
      %v1343 = vrot.slane %v1342, 4
      %v1344 = vadd.f32 %v1342, %v1343
      %v1345 = vrot.slane %v1344, 2
      %v1346 = vadd.f32 %v1344, %v1345
      %v1347 = vrot.slane %v1346, 1
      %v1348 = vadd.f32 %v1346, %v1347
      %v1349 = vsel %vm392, %v1173, 0.0
      %v1350 = vrot.slane %v1349, 4
      %v1351 = vadd.f32 %v1349, %v1350
      %v1352 = vrot.slane %v1351, 2
      %v1353 = vadd.f32 %v1351, %v1352
      %v1354 = vrot.slane %v1353, 1
      %v1355 = vadd.f32 %v1353, %v1354
      %v1356 = vsel %vm392, %v1174, 0.0
      %v1357 = vrot.slane %v1356, 4
      %v1358 = vadd.f32 %v1356, %v1357
      %v1359 = vrot.slane %v1358, 2
      %v1360 = vadd.f32 %v1358, %v1359
      %v1361 = vrot.slane %v1360, 1
      %v1362 = vadd.f32 %v1360, %v1361
      %v1363 = vsel %vm392, %v1175, 0.0
      %v1364 = vrot.slane %v1363, 4
      %v1365 = vadd.f32 %v1363, %v1364
      %v1366 = vrot.slane %v1365, 2
      %v1367 = vadd.f32 %v1365, %v1366
      %v1368 = vrot.slane %v1367, 1
      %v1369 = vadd.f32 %v1367, %v1368
      %v1370 = vsel %vm392, %v1176, 0.0
      %v1371 = vrot.slane %v1370, 4
      %v1372 = vadd.f32 %v1370, %v1371
      %v1373 = vrot.slane %v1372, 2
      %v1374 = vadd.f32 %v1372, %v1373
      %v1375 = vrot.slane %v1374, 1
      %v1376 = vadd.f32 %v1374, %v1375
      %v1377 = vsel %vm392, %v1177, 0.0
      %v1378 = vrot.slane %v1377, 4
      %v1379 = vadd.f32 %v1377, %v1378
      %v1380 = vrot.slane %v1379, 2
      %v1381 = vadd.f32 %v1379, %v1380
      %v1382 = vrot.slane %v1381, 1
      %v1383 = vadd.f32 %v1381, %v1382
      %v1384 = vsel %vm392, %v1178, 0.0
      %v1385 = vrot.slane %v1384, 4
      %v1386 = vadd.f32 %v1384, %v1385
      %v1387 = vrot.slane %v1386, 2
      %v1388 = vadd.f32 %v1386, %v1387
      %v1389 = vrot.slane %v1388, 1
      %v1390 = vadd.f32 %v1388, %v1389
      %v1391 = vsel %vm392, %v1179, 0.0
      %v1392 = vrot.slane %v1391, 4
      %v1393 = vadd.f32 %v1391, %v1392
      %v1394 = vrot.slane %v1393, 2
      %v1395 = vadd.f32 %v1393, %v1394
      %v1396 = vrot.slane %v1395, 1
      %v1397 = vadd.f32 %v1395, %v1396
      %v1398 = vsel %vm392, %v1180, 0.0
      %v1399 = vrot.slane %v1398, 4
      %v1400 = vadd.f32 %v1398, %v1399
      %v1401 = vrot.slane %v1400, 2
      %v1402 = vadd.f32 %v1400, %v1401
      %v1403 = vrot.slane %v1402, 1
      %v1404 = vadd.f32 %v1402, %v1403
      %v1405 = vmul.f32 %v1115, %v164
      %v1406 = vmul.f32 %v1115, %v165
      %v1407 = vmul.f32 %v1115, %v166
      %v1408 = vmul.f32 %v1115, %v167
      %v1409 = vmul.f32 %v1115, %v168
      %v1410 = vmul.f32 %v1115, %v169
      %v1411 = vmul.f32 %v1115, %v170
      %v1412 = vmul.f32 %v1115, %v171
      %v1413 = vmul.f32 %v1115, %v172
      %v1414 = vmul.f32 %v1115, %v173
      %v1415 = vmul.f32 %v1115, %v174
      %v1416 = vmul.f32 %v1115, %v175
      %v1417 = vmul.f32 %v1115, %v176
      %v1418 = vmul.f32 %v1115, %v177
      %v1419 = vmul.f32 %v1115, %v178
      %v1420 = vmul.f32 %v1115, %v179
      %v1421 = vmul.f32 %v1115, %v180
      %v1422 = vmul.f32 %v1115, %v181
      %v1423 = vmul.f32 %v1115, %v182
      %v1424 = vmul.f32 %v1115, %v183
      %v1425 = vmul.f32 %v1115, %v184
      %v1426 = vmul.f32 %v1115, %v185
      %v1427 = vmul.f32 %v1115, %v186
      %v1428 = vmul.f32 %v1115, %v187
      %v1429 = vmul.f32 %v1115, %v188
      %v1430 = vmul.f32 %v1115, %v189
      %v1431 = vmul.f32 %v1115, %v190
      %v1432 = vmul.f32 %v1115, %v191
      %v1433 = vmul.f32 %v1115, %v192
      %v1434 = vmul.f32 %v1115, %v193
      %v1435 = vmul.f32 %v1115, %v194
      %v1436 = vmul.f32 %v1115, %v195
      %v1437 = vmul.f32 %v1081, %v264
      %v1438 = vmul.f32 %v1081, %v265
      %v1439 = vmul.f32 %v1081, %v266
      %v1440 = vmul.f32 %v1081, %v267
      %v1441 = vmul.f32 %v1081, %v268
      %v1442 = vmul.f32 %v1081, %v269
      %v1443 = vmul.f32 %v1081, %v270
      %v1444 = vmul.f32 %v1081, %v271
      %v1445 = vmul.f32 %v1081, %v272
      %v1446 = vmul.f32 %v1081, %v273
      %v1447 = vmul.f32 %v1081, %v274
      %v1448 = vmul.f32 %v1081, %v275
      %v1449 = vmul.f32 %v1081, %v276
      %v1450 = vmul.f32 %v1081, %v277
      %v1451 = vmul.f32 %v1081, %v278
      %v1452 = vmul.f32 %v1081, %v279
      %v1453 = vmul.f32 %v1081, %v280
      %v1454 = vmul.f32 %v1081, %v281
      %v1455 = vmul.f32 %v1081, %v282
      %v1456 = vmul.f32 %v1081, %v283
      %v1457 = vmul.f32 %v1081, %v284
      %v1458 = vmul.f32 %v1081, %v285
      %v1459 = vmul.f32 %v1081, %v286
      %v1460 = vmul.f32 %v1081, %v287
      %v1461 = vmul.f32 %v1081, %v288
      %v1462 = vmul.f32 %v1081, %v289
      %v1463 = vmul.f32 %v1081, %v290
      %v1464 = vmul.f32 %v1081, %v291
      %v1465 = vmul.f32 %v1081, %v292
      %v1466 = vmul.f32 %v1081, %v293
      %v1467 = vmul.f32 %v1081, %v294
      %v1468 = vmul.f32 %v1081, %v295
      %v1469 = vadd.f32 %v1405, %v1437
      %v1470 = vadd.f32 %v1406, %v1438
      %v1471 = vadd.f32 %v1407, %v1439
      %v1472 = vadd.f32 %v1408, %v1440
      %v1473 = vadd.f32 %v1409, %v1441
      %v1474 = vadd.f32 %v1410, %v1442
      %v1475 = vadd.f32 %v1411, %v1443
      %v1476 = vadd.f32 %v1412, %v1444
      %v1477 = vadd.f32 %v1413, %v1445
      %v1478 = vadd.f32 %v1414, %v1446
      %v1479 = vadd.f32 %v1415, %v1447
      %v1480 = vadd.f32 %v1416, %v1448
      %v1481 = vadd.f32 %v1417, %v1449
      %v1482 = vadd.f32 %v1418, %v1450
      %v1483 = vadd.f32 %v1419, %v1451
      %v1484 = vadd.f32 %v1420, %v1452
      %v1485 = vadd.f32 %v1421, %v1453
      %v1486 = vadd.f32 %v1422, %v1454
      %v1487 = vadd.f32 %v1423, %v1455
      %v1488 = vadd.f32 %v1424, %v1456
      %v1489 = vadd.f32 %v1425, %v1457
      %v1490 = vadd.f32 %v1426, %v1458
      %v1491 = vadd.f32 %v1427, %v1459
      %v1492 = vadd.f32 %v1428, %v1460
      %v1493 = vadd.f32 %v1429, %v1461
      %v1494 = vadd.f32 %v1430, %v1462
      %v1495 = vadd.f32 %v1431, %v1463
      %v1496 = vadd.f32 %v1432, %v1464
      %v1497 = vadd.f32 %v1433, %v1465
      %v1498 = vadd.f32 %v1434, %v1466
      %v1499 = vadd.f32 %v1435, %v1467
      %v1500 = vadd.f32 %v1436, %v1468
      %v1501 = vsel %vm392, %v1469, 0.0
      %v1502 = vrot.slane %v1501, 4
      %v1503 = vadd.f32 %v1501, %v1502
      %v1504 = vrot.slane %v1503, 2
      %v1505 = vadd.f32 %v1503, %v1504
      %v1506 = vrot.slane %v1505, 1
      %v1507 = vadd.f32 %v1505, %v1506
      %v1508 = vsel %vm392, %v1470, 0.0
      %v1509 = vrot.slane %v1508, 4
      %v1510 = vadd.f32 %v1508, %v1509
      %v1511 = vrot.slane %v1510, 2
      %v1512 = vadd.f32 %v1510, %v1511
      %v1513 = vrot.slane %v1512, 1
      %v1514 = vadd.f32 %v1512, %v1513
      %v1515 = vsel %vm392, %v1471, 0.0
      %v1516 = vrot.slane %v1515, 4
      %v1517 = vadd.f32 %v1515, %v1516
      %v1518 = vrot.slane %v1517, 2
      %v1519 = vadd.f32 %v1517, %v1518
      %v1520 = vrot.slane %v1519, 1
      %v1521 = vadd.f32 %v1519, %v1520
      %v1522 = vsel %vm392, %v1472, 0.0
      %v1523 = vrot.slane %v1522, 4
      %v1524 = vadd.f32 %v1522, %v1523
      %v1525 = vrot.slane %v1524, 2
      %v1526 = vadd.f32 %v1524, %v1525
      %v1527 = vrot.slane %v1526, 1
      %v1528 = vadd.f32 %v1526, %v1527
      %v1529 = vsel %vm392, %v1473, 0.0
      %v1530 = vrot.slane %v1529, 4
      %v1531 = vadd.f32 %v1529, %v1530
      %v1532 = vrot.slane %v1531, 2
      %v1533 = vadd.f32 %v1531, %v1532
      %v1534 = vrot.slane %v1533, 1
      %v1535 = vadd.f32 %v1533, %v1534
      %v1536 = vsel %vm392, %v1474, 0.0
      %v1537 = vrot.slane %v1536, 4
      %v1538 = vadd.f32 %v1536, %v1537
      %v1539 = vrot.slane %v1538, 2
      %v1540 = vadd.f32 %v1538, %v1539
      %v1541 = vrot.slane %v1540, 1
      %v1542 = vadd.f32 %v1540, %v1541
      %v1543 = vsel %vm392, %v1475, 0.0
      %v1544 = vrot.slane %v1543, 4
      %v1545 = vadd.f32 %v1543, %v1544
      %v1546 = vrot.slane %v1545, 2
      %v1547 = vadd.f32 %v1545, %v1546
      %v1548 = vrot.slane %v1547, 1
      %v1549 = vadd.f32 %v1547, %v1548
      %v1550 = vsel %vm392, %v1476, 0.0
      %v1551 = vrot.slane %v1550, 4
      %v1552 = vadd.f32 %v1550, %v1551
      %v1553 = vrot.slane %v1552, 2
      %v1554 = vadd.f32 %v1552, %v1553
      %v1555 = vrot.slane %v1554, 1
      %v1556 = vadd.f32 %v1554, %v1555
      %v1557 = vsel %vm392, %v1477, 0.0
      %v1558 = vrot.slane %v1557, 4
      %v1559 = vadd.f32 %v1557, %v1558
      %v1560 = vrot.slane %v1559, 2
      %v1561 = vadd.f32 %v1559, %v1560
      %v1562 = vrot.slane %v1561, 1
      %v1563 = vadd.f32 %v1561, %v1562
      %v1564 = vsel %vm392, %v1478, 0.0
      %v1565 = vrot.slane %v1564, 4
      %v1566 = vadd.f32 %v1564, %v1565
      %v1567 = vrot.slane %v1566, 2
      %v1568 = vadd.f32 %v1566, %v1567
      %v1569 = vrot.slane %v1568, 1
      %v1570 = vadd.f32 %v1568, %v1569
      %v1571 = vsel %vm392, %v1479, 0.0
      %v1572 = vrot.slane %v1571, 4
      %v1573 = vadd.f32 %v1571, %v1572
      %v1574 = vrot.slane %v1573, 2
      %v1575 = vadd.f32 %v1573, %v1574
      %v1576 = vrot.slane %v1575, 1
      %v1577 = vadd.f32 %v1575, %v1576
      %v1578 = vsel %vm392, %v1480, 0.0
      %v1579 = vrot.slane %v1578, 4
      %v1580 = vadd.f32 %v1578, %v1579
      %v1581 = vrot.slane %v1580, 2
      %v1582 = vadd.f32 %v1580, %v1581
      %v1583 = vrot.slane %v1582, 1
      %v1584 = vadd.f32 %v1582, %v1583
      %v1585 = vsel %vm392, %v1481, 0.0
      %v1586 = vrot.slane %v1585, 4
      %v1587 = vadd.f32 %v1585, %v1586
      %v1588 = vrot.slane %v1587, 2
      %v1589 = vadd.f32 %v1587, %v1588
      %v1590 = vrot.slane %v1589, 1
      %v1591 = vadd.f32 %v1589, %v1590
      %v1592 = vsel %vm392, %v1482, 0.0
      %v1593 = vrot.slane %v1592, 4
      %v1594 = vadd.f32 %v1592, %v1593
      %v1595 = vrot.slane %v1594, 2
      %v1596 = vadd.f32 %v1594, %v1595
      %v1597 = vrot.slane %v1596, 1
      %v1598 = vadd.f32 %v1596, %v1597
      %v1599 = vsel %vm392, %v1483, 0.0
      %v1600 = vrot.slane %v1599, 4
      %v1601 = vadd.f32 %v1599, %v1600
      %v1602 = vrot.slane %v1601, 2
      %v1603 = vadd.f32 %v1601, %v1602
      %v1604 = vrot.slane %v1603, 1
      %v1605 = vadd.f32 %v1603, %v1604
      %v1606 = vsel %vm392, %v1484, 0.0
      %v1607 = vrot.slane %v1606, 4
      %v1608 = vadd.f32 %v1606, %v1607
      %v1609 = vrot.slane %v1608, 2
      %v1610 = vadd.f32 %v1608, %v1609
      %v1611 = vrot.slane %v1610, 1
      %v1612 = vadd.f32 %v1610, %v1611
      %v1613 = vsel %vm392, %v1485, 0.0
      %v1614 = vrot.slane %v1613, 4
      %v1615 = vadd.f32 %v1613, %v1614
      %v1616 = vrot.slane %v1615, 2
      %v1617 = vadd.f32 %v1615, %v1616
      %v1618 = vrot.slane %v1617, 1
      %v1619 = vadd.f32 %v1617, %v1618
      %v1620 = vsel %vm392, %v1486, 0.0
      %v1621 = vrot.slane %v1620, 4
      %v1622 = vadd.f32 %v1620, %v1621
      %v1623 = vrot.slane %v1622, 2
      %v1624 = vadd.f32 %v1622, %v1623
      %v1625 = vrot.slane %v1624, 1
      %v1626 = vadd.f32 %v1624, %v1625
      %v1627 = vsel %vm392, %v1487, 0.0
      %v1628 = vrot.slane %v1627, 4
      %v1629 = vadd.f32 %v1627, %v1628
      %v1630 = vrot.slane %v1629, 2
      %v1631 = vadd.f32 %v1629, %v1630
      %v1632 = vrot.slane %v1631, 1
      %v1633 = vadd.f32 %v1631, %v1632
      %v1634 = vsel %vm392, %v1488, 0.0
      %v1635 = vrot.slane %v1634, 4
      %v1636 = vadd.f32 %v1634, %v1635
      %v1637 = vrot.slane %v1636, 2
      %v1638 = vadd.f32 %v1636, %v1637
      %v1639 = vrot.slane %v1638, 1
      %v1640 = vadd.f32 %v1638, %v1639
      %v1641 = vsel %vm392, %v1489, 0.0
      %v1642 = vrot.slane %v1641, 4
      %v1643 = vadd.f32 %v1641, %v1642
      %v1644 = vrot.slane %v1643, 2
      %v1645 = vadd.f32 %v1643, %v1644
      %v1646 = vrot.slane %v1645, 1
      %v1647 = vadd.f32 %v1645, %v1646
      %v1648 = vsel %vm392, %v1490, 0.0
      %v1649 = vrot.slane %v1648, 4
      %v1650 = vadd.f32 %v1648, %v1649
      %v1651 = vrot.slane %v1650, 2
      %v1652 = vadd.f32 %v1650, %v1651
      %v1653 = vrot.slane %v1652, 1
      %v1654 = vadd.f32 %v1652, %v1653
      %v1655 = vsel %vm392, %v1491, 0.0
      %v1656 = vrot.slane %v1655, 4
      %v1657 = vadd.f32 %v1655, %v1656
      %v1658 = vrot.slane %v1657, 2
      %v1659 = vadd.f32 %v1657, %v1658
      %v1660 = vrot.slane %v1659, 1
      %v1661 = vadd.f32 %v1659, %v1660
      %v1662 = vsel %vm392, %v1492, 0.0
      %v1663 = vrot.slane %v1662, 4
      %v1664 = vadd.f32 %v1662, %v1663
      %v1665 = vrot.slane %v1664, 2
      %v1666 = vadd.f32 %v1664, %v1665
      %v1667 = vrot.slane %v1666, 1
      %v1668 = vadd.f32 %v1666, %v1667
      %v1669 = vsel %vm392, %v1493, 0.0
      %v1670 = vrot.slane %v1669, 4
      %v1671 = vadd.f32 %v1669, %v1670
      %v1672 = vrot.slane %v1671, 2
      %v1673 = vadd.f32 %v1671, %v1672
      %v1674 = vrot.slane %v1673, 1
      %v1675 = vadd.f32 %v1673, %v1674
      %v1676 = vsel %vm392, %v1494, 0.0
      %v1677 = vrot.slane %v1676, 4
      %v1678 = vadd.f32 %v1676, %v1677
      %v1679 = vrot.slane %v1678, 2
      %v1680 = vadd.f32 %v1678, %v1679
      %v1681 = vrot.slane %v1680, 1
      %v1682 = vadd.f32 %v1680, %v1681
      %v1683 = vsel %vm392, %v1495, 0.0
      %v1684 = vrot.slane %v1683, 4
      %v1685 = vadd.f32 %v1683, %v1684
      %v1686 = vrot.slane %v1685, 2
      %v1687 = vadd.f32 %v1685, %v1686
      %v1688 = vrot.slane %v1687, 1
      %v1689 = vadd.f32 %v1687, %v1688
      %v1690 = vsel %vm392, %v1496, 0.0
      %v1691 = vrot.slane %v1690, 4
      %v1692 = vadd.f32 %v1690, %v1691
      %v1693 = vrot.slane %v1692, 2
      %v1694 = vadd.f32 %v1692, %v1693
      %v1695 = vrot.slane %v1694, 1
      %v1696 = vadd.f32 %v1694, %v1695
      %v1697 = vsel %vm392, %v1497, 0.0
      %v1698 = vrot.slane %v1697, 4
      %v1699 = vadd.f32 %v1697, %v1698
      %v1700 = vrot.slane %v1699, 2
      %v1701 = vadd.f32 %v1699, %v1700
      %v1702 = vrot.slane %v1701, 1
      %v1703 = vadd.f32 %v1701, %v1702
      %v1704 = vsel %vm392, %v1498, 0.0
      %v1705 = vrot.slane %v1704, 4
      %v1706 = vadd.f32 %v1704, %v1705
      %v1707 = vrot.slane %v1706, 2
      %v1708 = vadd.f32 %v1706, %v1707
      %v1709 = vrot.slane %v1708, 1
      %v1710 = vadd.f32 %v1708, %v1709
      %v1711 = vsel %vm392, %v1499, 0.0
      %v1712 = vrot.slane %v1711, 4
      %v1713 = vadd.f32 %v1711, %v1712
      %v1714 = vrot.slane %v1713, 2
      %v1715 = vadd.f32 %v1713, %v1714
      %v1716 = vrot.slane %v1715, 1
      %v1717 = vadd.f32 %v1715, %v1716
      %v1718 = vsel %vm392, %v1500, 0.0
      %v1719 = vrot.slane %v1718, 4
      %v1720 = vadd.f32 %v1718, %v1719
      %v1721 = vrot.slane %v1720, 2
      %v1722 = vadd.f32 %v1720, %v1721
      %v1723 = vrot.slane %v1722, 1
      %v1724 = vadd.f32 %v1722, %v1723
      %v1757 = vsel %vm969, %v1194, %v1187
      %v1758 = vsel %vm971, %v1201, %v1757
      %v1759 = vsel %vm973, %v1208, %v1758
      %v1760 = vsel %vm975, %v1215, %v1759
      %v1761 = vsel %vm977, %v1222, %v1760
      %v1762 = vsel %vm979, %v1229, %v1761
      %v1763 = vsel %vm981, %v1236, %v1762
      %v1764 = vsel %vm969, %v1250, %v1243
      %v1765 = vsel %vm971, %v1257, %v1764
      %v1766 = vsel %vm973, %v1264, %v1765
      %v1767 = vsel %vm975, %v1271, %v1766
      %v1768 = vsel %vm977, %v1278, %v1767
      %v1769 = vsel %vm979, %v1285, %v1768
      %v1770 = vsel %vm981, %v1292, %v1769
      %v1771 = vsel %vm969, %v1306, %v1299
      %v1772 = vsel %vm971, %v1313, %v1771
      %v1773 = vsel %vm973, %v1320, %v1772
      %v1774 = vsel %vm975, %v1327, %v1773
      %v1775 = vsel %vm977, %v1334, %v1774
      %v1776 = vsel %vm979, %v1341, %v1775
      %v1777 = vsel %vm981, %v1348, %v1776
      %v1778 = vsel %vm969, %v1362, %v1355
      %v1779 = vsel %vm971, %v1369, %v1778
      %v1780 = vsel %vm973, %v1376, %v1779
      %v1781 = vsel %vm975, %v1383, %v1780
      %v1782 = vsel %vm977, %v1390, %v1781
      %v1783 = vsel %vm979, %v1397, %v1782
      %v1784 = vsel %vm981, %v1404, %v1783
      %v1821 = vsel %vm969, %v1514, %v1507
      %v1822 = vsel %vm971, %v1521, %v1821
      %v1823 = vsel %vm973, %v1528, %v1822
      %v1824 = vsel %vm975, %v1535, %v1823
      %v1825 = vsel %vm977, %v1542, %v1824
      %v1826 = vsel %vm979, %v1549, %v1825
      %v1827 = vsel %vm981, %v1556, %v1826
      %v1828 = vsel %vm969, %v1570, %v1563
      %v1829 = vsel %vm971, %v1577, %v1828
      %v1830 = vsel %vm973, %v1584, %v1829
      %v1831 = vsel %vm975, %v1591, %v1830
      %v1832 = vsel %vm977, %v1598, %v1831
      %v1833 = vsel %vm979, %v1605, %v1832
      %v1834 = vsel %vm981, %v1612, %v1833
      %v1835 = vsel %vm969, %v1626, %v1619
      %v1836 = vsel %vm971, %v1633, %v1835
      %v1837 = vsel %vm973, %v1640, %v1836
      %v1838 = vsel %vm975, %v1647, %v1837
      %v1839 = vsel %vm977, %v1654, %v1838
      %v1840 = vsel %vm979, %v1661, %v1839
      %v1841 = vsel %vm981, %v1668, %v1840
      %v1842 = vsel %vm969, %v1682, %v1675
      %v1843 = vsel %vm971, %v1689, %v1842
      %v1844 = vsel %vm973, %v1696, %v1843
      %v1845 = vsel %vm975, %v1703, %v1844
      %v1846 = vsel %vm977, %v1710, %v1845
      %v1847 = vsel %vm979, %v1717, %v1846
      %v1848 = vsel %vm981, %v1724, %v1847
      %s1853 = scalar_lea.vmem %s163, 64
      %1854 = vst [vmem:[%s1853] sm:$0xff] %v1763
      %1855 = vst [vmem:[%s1853 + $0x8] sm:$0xff] %v1827
      %1856 = vst [vmem:[%s1853 + $0x10] sm:$0xff] %v1770
      %1857 = vst [vmem:[%s1853 + $0x18] sm:$0xff] %v1834
      %1858 = vst [vmem:[%s1853 + $0x20] sm:$0xff] %v1777
      %1859 = vst [vmem:[%s1853 + $0x28] sm:$0xff] %v1841
      %1860 = vst [vmem:[%s1853 + $0x30] sm:$0xff] %v1784
      %1861 = vst [vmem:[%s1853 + $0x38] sm:$0xff] %v1848
      %p1862 = scmp.lt.s32.totalorder %s13, 1
      %s1863 = scalar_select %p1862, %s13, 1
      %s1864 = smul.addr %s1863, 16
      %s1865 = smul.addr %s1864, 8
      %s1866 = scalar_lea.vmem %s2, %s1865
      // Predicated region
      $region29: #{fno_forward.3} parent=27 // pred_check
        %p1867 = pneg %p83
      $region30: #{fno_forward.3} parent=27 // pred_check_branch
        %1869 = sbr.rel (%p1867) target = $region32
      $region31: #{fno_forward.3} parent=27 // pred_region
        _
      $region32: #{fno_forward.3} parent=27 // pred_fallthru
        _
    $region28: #{fno_forward.3} parent=5 // pred_fallthru
      _
    %p1870 = scmp.le.s32.totalorder 2, %s8
    // Predicated region
    $region33: #{fno_forward.3} parent=5 // pred_check
      %p1871 = pneg %p1870
    $region34: #{fno_forward.3} parent=5 // pred_check_branch
      %1873 = sbr.rel (%p1871) target = $region36
    $region35: #{fno_forward.3} parent=5 // pred_region
      %s1874 = ssub.s32 %s8, 2
      // Predicated region
      $region37: #{fno_forward.3} parent=35 // pred_check
        %p1875 = pneg %p89
      $region38: #{fno_forward.3} parent=35 // pred_check_branch
        %1877 = sbr.rel (%p1875) target = $region40
      $region39: #{fno_forward.3} parent=35 // pred_region
        %p1878 = scmp.lt.s32.totalorder %s14, 1
        %s1879 = scalar_select %p1878, %s14, 1
        %s1880 = smul.addr %s1879, 16
        %s1881 = smul.addr %s1880, 8
        %s1882 = scalar_lea.vmem %s2, %s1881
      $region40: #{fno_forward.3} parent=35 // pred_fallthru
        _
    $region36: #{fno_forward.3} parent=5 // pred_fallthru
      _
  $region6: #{fno_forward.3} parent=0 // loop_footer
    %s12 = sadd.s32 1, %s8
  $region7: #{fno_forward.3} parent=0 // loop_footer_branch
    %7 = sbr.rel target = $region3
  $region8: #{fno_forward.3} parent=0 // loop_exit
    _

// kernel: reverse.2
$region0: #{reverse.2}
  #allocation0 [shape = 's32[1]{0}', space=sflag, size = 0x4, scoped, tag = 'scoped memory for reverse.2']
  %s0 = inlined_call_operand.vmem [shape: f32[2,32,32,15], index: 0, kind: input, shape index: {}]
  %s1 = inlined_call_operand.vmem [shape: f32[2,32,32,15], index: 1, kind: output, shape index: {}]
  %s2 = scalar_lea.vmem %s0, 448
  %v3 = vld [vmem:[%s2] sm:$0xff]
  %4 = vst [vmem:[%s1] sm:$0xff] %v3
  %s5 = scalar_lea.vmem %s0, 928
  %v6 = vld [vmem:[%s5] sm:$0xff]
  %s7 = scalar_lea.vmem %s1, 480
  %8 = vst [vmem:[%s7] sm:$0xff] %v6
  %s9 = scalar_lea.vmem %s0, 416
  %v10 = vld [vmem:[%s9] sm:$0xff]
  %s11 = scalar_lea.vmem %s1, 32
  %12 = vst [vmem:[%s11] sm:$0xff] %v10
  %s13 = scalar_lea.vmem %s0, 896
  %v14 = vld [vmem:[%s13] sm:$0xff]
  %s15 = scalar_lea.vmem %s1, 512
  %16 = vst [vmem:[%s15] sm:$0xff] %v14
  %s17 = scalar_lea.vmem %s0, 384
  %v18 = vld [vmem:[%s17] sm:$0xff]
  %s19 = scalar_lea.vmem %s1, 64
  %20 = vst [vmem:[%s19] sm:$0xff] %v18
  %s21 = scalar_lea.vmem %s0, 864
  %v22 = vld [vmem:[%s21] sm:$0xff]
  %s23 = scalar_lea.vmem %s1, 544
  %24 = vst [vmem:[%s23] sm:$0xff] %v22
  %s25 = scalar_lea.vmem %s0, 352
  %v26 = vld [vmem:[%s25] sm:$0xff]
  %s27 = scalar_lea.vmem %s1, 96
  %28 = vst [vmem:[%s27] sm:$0xff] %v26
  %s29 = scalar_lea.vmem %s0, 832
  %v30 = vld [vmem:[%s29] sm:$0xff]
  %s31 = scalar_lea.vmem %s1, 576
  %32 = vst [vmem:[%s31] sm:$0xff] %v30
  %s33 = scalar_lea.vmem %s0, 320
  %v34 = vld [vmem:[%s33] sm:$0xff]
  %s35 = scalar_lea.vmem %s1, 128
  %36 = vst [vmem:[%s35] sm:$0xff] %v34
  %s37 = scalar_lea.vmem %s0, 800
  %v38 = vld [vmem:[%s37] sm:$0xff]
  %s39 = scalar_lea.vmem %s1, 608
  %40 = vst [vmem:[%s39] sm:$0xff] %v38
  %s41 = scalar_lea.vmem %s0, 288
  %v42 = vld [vmem:[%s41] sm:$0xff]
  %s43 = scalar_lea.vmem %s1, 160
  %44 = vst [vmem:[%s43] sm:$0xff] %v42
  %s45 = scalar_lea.vmem %s0, 768
  %v46 = vld [vmem:[%s45] sm:$0xff]
  %s47 = scalar_lea.vmem %s1, 640
  %48 = vst [vmem:[%s47] sm:$0xff] %v46
  %s49 = scalar_lea.vmem %s0, 256
  %v50 = vld [vmem:[%s49] sm:$0xff]
  %s51 = scalar_lea.vmem %s1, 192
  %52 = vst [vmem:[%s51] sm:$0xff] %v50
  %s53 = scalar_lea.vmem %s0, 736
  %v54 = vld [vmem:[%s53] sm:$0xff]
  %s55 = scalar_lea.vmem %s1, 672
  %56 = vst [vmem:[%s55] sm:$0xff] %v54
  %s57 = scalar_lea.vmem %s0, 224
  %v58 = vld [vmem:[%s57] sm:$0xff]
  %s59 = scalar_lea.vmem %s1, 224
  %60 = vst [vmem:[%s59] sm:$0xff] %v58
  %s61 = scalar_lea.vmem %s0, 704
  %v62 = vld [vmem:[%s61] sm:$0xff]
  %s63 = scalar_lea.vmem %s1, 704
  %64 = vst [vmem:[%s63] sm:$0xff] %v62
  %s65 = scalar_lea.vmem %s0, 192
  %v66 = vld [vmem:[%s65] sm:$0xff]
  %s67 = scalar_lea.vmem %s1, 256
  %68 = vst [vmem:[%s67] sm:$0xff] %v66
  %s69 = scalar_lea.vmem %s0, 672
  %v70 = vld [vmem:[%s69] sm:$0xff]
  %s71 = scalar_lea.vmem %s1, 736
  %72 = vst [vmem:[%s71] sm:$0xff] %v70
  %s73 = scalar_lea.vmem %s0, 160
  %v74 = vld [vmem:[%s73] sm:$0xff]
  %s75 = scalar_lea.vmem %s1, 288
  %76 = vst [vmem:[%s75] sm:$0xff] %v74
  %s77 = scalar_lea.vmem %s0, 640
  %v78 = vld [vmem:[%s77] sm:$0xff]
  %s79 = scalar_lea.vmem %s1, 768
  %80 = vst [vmem:[%s79] sm:$0xff] %v78
  %s81 = scalar_lea.vmem %s0, 128
  %v82 = vld [vmem:[%s81] sm:$0xff]
  %s83 = scalar_lea.vmem %s1, 320
  %84 = vst [vmem:[%s83] sm:$0xff] %v82
  %s85 = scalar_lea.vmem %s0, 608
  %v86 = vld [vmem:[%s85] sm:$0xff]
  %s87 = scalar_lea.vmem %s1, 800
  %88 = vst [vmem:[%s87] sm:$0xff] %v86
  %s89 = scalar_lea.vmem %s0, 96
  %v90 = vld [vmem:[%s89] sm:$0xff]
  %s91 = scalar_lea.vmem %s1, 352
  %92 = vst [vmem:[%s91] sm:$0xff] %v90
  %s93 = scalar_lea.vmem %s0, 576
  %v94 = vld [vmem:[%s93] sm:$0xff]
  %s95 = scalar_lea.vmem %s1, 832
  %96 = vst [vmem:[%s95] sm:$0xff] %v94
  %s97 = scalar_lea.vmem %s0, 64
  %v98 = vld [vmem:[%s97] sm:$0xff]
  %s99 = scalar_lea.vmem %s1, 384
  %100 = vst [vmem:[%s99] sm:$0xff] %v98
  %s101 = scalar_lea.vmem %s0, 544
  %v102 = vld [vmem:[%s101] sm:$0xff]
  %s103 = scalar_lea.vmem %s1, 864
  %104 = vst [vmem:[%s103] sm:$0xff] %v102
  %s105 = scalar_lea.vmem %s0, 32
  %v106 = vld [vmem:[%s105] sm:$0xff]
  %s107 = scalar_lea.vmem %s1, 416
  %108 = vst [vmem:[%s107] sm:$0xff] %v106
  %s109 = scalar_lea.vmem %s0, 512
  %v110 = vld [vmem:[%s109] sm:$0xff]
  %s111 = scalar_lea.vmem %s1, 896
  %112 = vst [vmem:[%s111] sm:$0xff] %v110
  %v113 = vld [vmem:[%s0] sm:$0xff]
  %s114 = scalar_lea.vmem %s1, 448
  %115 = vst [vmem:[%s114] sm:$0xff] %v113
  %s116 = scalar_lea.vmem %s0, 480
  %v117 = vld [vmem:[%s116] sm:$0xff]
  %s118 = scalar_lea.vmem %s1, 928
  %119 = vst [vmem:[%s118] sm:$0xff] %v117
  %s120 = scalar_lea.vmem %s0, 456
  %v121 = vld [vmem:[%s120] sm:$0xff]
  %s122 = scalar_lea.vmem %s1, 8
  %123 = vst [vmem:[%s122] sm:$0xff] %v121
  %s124 = scalar_lea.vmem %s0, 936
  %v125 = vld [vmem:[%s124] sm:$0xff]
  %s126 = scalar_lea.vmem %s1, 488
  %127 = vst [vmem:[%s126] sm:$0xff] %v125
  %s128 = scalar_lea.vmem %s0, 424
  %v129 = vld [vmem:[%s128] sm:$0xff]
  %s130 = scalar_lea.vmem %s1, 40
  %131 = vst [vmem:[%s130] sm:$0xff] %v129
  %s132 = scalar_lea.vmem %s0, 904
  %v133 = vld [vmem:[%s132] sm:$0xff]
  %s134 = scalar_lea.vmem %s1, 520
  %135 = vst [vmem:[%s134] sm:$0xff] %v133
  %s136 = scalar_lea.vmem %s0, 392
  %v137 = vld [vmem:[%s136] sm:$0xff]
  %s138 = scalar_lea.vmem %s1, 72
  %139 = vst [vmem:[%s138] sm:$0xff] %v137
  %s140 = scalar_lea.vmem %s0, 872
  %v141 = vld [vmem:[%s140] sm:$0xff]
  %s142 = scalar_lea.vmem %s1, 552
  %143 = vst [vmem:[%s142] sm:$0xff] %v141
  %s144 = scalar_lea.vmem %s0, 360
  %v145 = vld [vmem:[%s144] sm:$0xff]
  %s146 = scalar_lea.vmem %s1, 104
  %147 = vst [vmem:[%s146] sm:$0xff] %v145
  %s148 = scalar_lea.vmem %s0, 840
  %v149 = vld [vmem:[%s148] sm:$0xff]
  %s150 = scalar_lea.vmem %s1, 584
  %151 = vst [vmem:[%s150] sm:$0xff] %v149
  %s152 = scalar_lea.vmem %s0, 328
  %v153 = vld [vmem:[%s152] sm:$0xff]
  %s154 = scalar_lea.vmem %s1, 136
  %155 = vst [vmem:[%s154] sm:$0xff] %v153
  %s156 = scalar_lea.vmem %s0, 808
  %v157 = vld [vmem:[%s156] sm:$0xff]
  %s158 = scalar_lea.vmem %s1, 616
  %159 = vst [vmem:[%s158] sm:$0xff] %v157
  %s160 = scalar_lea.vmem %s0, 296
  %v161 = vld [vmem:[%s160] sm:$0xff]
  %s162 = scalar_lea.vmem %s1, 168
  %163 = vst [vmem:[%s162] sm:$0xff] %v161
  %s164 = scalar_lea.vmem %s0, 776
  %v165 = vld [vmem:[%s164] sm:$0xff]
  %s166 = scalar_lea.vmem %s1, 648
  %167 = vst [vmem:[%s166] sm:$0xff] %v165
  %s168 = scalar_lea.vmem %s0, 264
  %v169 = vld [vmem:[%s168] sm:$0xff]
  %s170 = scalar_lea.vmem %s1, 200
  %171 = vst [vmem:[%s170] sm:$0xff] %v169
  %s172 = scalar_lea.vmem %s0, 744
  %v173 = vld [vmem:[%s172] sm:$0xff]
  %s174 = scalar_lea.vmem %s1, 680
  %175 = vst [vmem:[%s174] sm:$0xff] %v173
  %s176 = scalar_lea.vmem %s0, 232
  %v177 = vld [vmem:[%s176] sm:$0xff]
  %s178 = scalar_lea.vmem %s1, 232
  %179 = vst [vmem:[%s178] sm:$0xff] %v177
  %s180 = scalar_lea.vmem %s0, 712
  %v181 = vld [vmem:[%s180] sm:$0xff]
  %s182 = scalar_lea.vmem %s1, 712
  %183 = vst [vmem:[%s182] sm:$0xff] %v181
  %s184 = scalar_lea.vmem %s0, 200
  %v185 = vld [vmem:[%s184] sm:$0xff]
  %s186 = scalar_lea.vmem %s1, 264
  %187 = vst [vmem:[%s186] sm:$0xff] %v185
  %s188 = scalar_lea.vmem %s0, 680
  %v189 = vld [vmem:[%s188] sm:$0xff]
  %s190 = scalar_lea.vmem %s1, 744
  %191 = vst [vmem:[%s190] sm:$0xff] %v189
  %s192 = scalar_lea.vmem %s0, 168
  %v193 = vld [vmem:[%s192] sm:$0xff]
  %s194 = scalar_lea.vmem %s1, 296
  %195 = vst [vmem:[%s194] sm:$0xff] %v193
  %s196 = scalar_lea.vmem %s0, 648
  %v197 = vld [vmem:[%s196] sm:$0xff]
  %s198 = scalar_lea.vmem %s1, 776
  %199 = vst [vmem:[%s198] sm:$0xff] %v197
  %s200 = scalar_lea.vmem %s0, 136
  %v201 = vld [vmem:[%s200] sm:$0xff]
  %s202 = scalar_lea.vmem %s1, 328
  %203 = vst [vmem:[%s202] sm:$0xff] %v201
  %s204 = scalar_lea.vmem %s0, 616
  %v205 = vld [vmem:[%s204] sm:$0xff]
  %s206 = scalar_lea.vmem %s1, 808
  %207 = vst [vmem:[%s206] sm:$0xff] %v205
  %s208 = scalar_lea.vmem %s0, 104
  %v209 = vld [vmem:[%s208] sm:$0xff]
  %s210 = scalar_lea.vmem %s1, 360
  %211 = vst [vmem:[%s210] sm:$0xff] %v209
  %s212 = scalar_lea.vmem %s0, 584
  %v213 = vld [vmem:[%s212] sm:$0xff]
  %s214 = scalar_lea.vmem %s1, 840
  %215 = vst [vmem:[%s214] sm:$0xff] %v213
  %s216 = scalar_lea.vmem %s0, 72
  %v217 = vld [vmem:[%s216] sm:$0xff]
  %s218 = scalar_lea.vmem %s1, 392
  %219 = vst [vmem:[%s218] sm:$0xff] %v217
  %s220 = scalar_lea.vmem %s0, 552
  %v221 = vld [vmem:[%s220] sm:$0xff]
  %s222 = scalar_lea.vmem %s1, 872
  %223 = vst [vmem:[%s222] sm:$0xff] %v221
  %s224 = scalar_lea.vmem %s0, 40
  %v225 = vld [vmem:[%s224] sm:$0xff]
  %s226 = scalar_lea.vmem %s1, 424
  %227 = vst [vmem:[%s226] sm:$0xff] %v225
  %s228 = scalar_lea.vmem %s0, 520
  %v229 = vld [vmem:[%s228] sm:$0xff]
  %s230 = scalar_lea.vmem %s1, 904
  %231 = vst [vmem:[%s230] sm:$0xff] %v229
  %s232 = scalar_lea.vmem %s0, 8
  %v233 = vld [vmem:[%s232] sm:$0xff]
  %s234 = scalar_lea.vmem %s1, 456
  %235 = vst [vmem:[%s234] sm:$0xff] %v233
  %s236 = scalar_lea.vmem %s0, 488
  %v237 = vld [vmem:[%s236] sm:$0xff]
  %s238 = scalar_lea.vmem %s1, 936
  %239 = vst [vmem:[%s238] sm:$0xff] %v237
  %s240 = scalar_lea.vmem %s0, 464
  %v241 = vld [vmem:[%s240] sm:$0xff]
  %s242 = scalar_lea.vmem %s1, 16
  %243 = vst [vmem:[%s242] sm:$0xff] %v241
  %s244 = scalar_lea.vmem %s0, 944
  %v245 = vld [vmem:[%s244] sm:$0xff]
  %s246 = scalar_lea.vmem %s1, 496
  %247 = vst [vmem:[%s246] sm:$0xff] %v245
  %s248 = scalar_lea.vmem %s0, 432
  %v249 = vld [vmem:[%s248] sm:$0xff]
  %s250 = scalar_lea.vmem %s1, 48
  %251 = vst [vmem:[%s250] sm:$0xff] %v249
  %s252 = scalar_lea.vmem %s0, 912
  %v253 = vld [vmem:[%s252] sm:$0xff]
  %s254 = scalar_lea.vmem %s1, 528
  %255 = vst [vmem:[%s254] sm:$0xff] %v253
  %s256 = scalar_lea.vmem %s0, 400
  %v257 = vld [vmem:[%s256] sm:$0xff]
  %s258 = scalar_lea.vmem %s1, 80
  %259 = vst [vmem:[%s258] sm:$0xff] %v257
  %s260 = scalar_lea.vmem %s0, 880
  %v261 = vld [vmem:[%s260] sm:$0xff]
  %s262 = scalar_lea.vmem %s1, 560
  %263 = vst [vmem:[%s262] sm:$0xff] %v261
  %s264 = scalar_lea.vmem %s0, 368
  %v265 = vld [vmem:[%s264] sm:$0xff]
  %s266 = scalar_lea.vmem %s1, 112
  %267 = vst [vmem:[%s266] sm:$0xff] %v265
  %s268 = scalar_lea.vmem %s0, 848
  %v269 = vld [vmem:[%s268] sm:$0xff]
  %s270 = scalar_lea.vmem %s1, 592
  %271 = vst [vmem:[%s270] sm:$0xff] %v269
  %s272 = scalar_lea.vmem %s0, 336
  %v273 = vld [vmem:[%s272] sm:$0xff]
  %s274 = scalar_lea.vmem %s1, 144
  %275 = vst [vmem:[%s274] sm:$0xff] %v273
  %s276 = scalar_lea.vmem %s0, 816
  %v277 = vld [vmem:[%s276] sm:$0xff]
  %s278 = scalar_lea.vmem %s1, 624
  %279 = vst [vmem:[%s278] sm:$0xff] %v277
  %s280 = scalar_lea.vmem %s0, 304
  %v281 = vld [vmem:[%s280] sm:$0xff]
  %s282 = scalar_lea.vmem %s1, 176
  %283 = vst [vmem:[%s282] sm:$0xff] %v281
  %s284 = scalar_lea.vmem %s0, 784
  %v285 = vld [vmem:[%s284] sm:$0xff]
  %s286 = scalar_lea.vmem %s1, 656
  %287 = vst [vmem:[%s286] sm:$0xff] %v285
  %s288 = scalar_lea.vmem %s0, 272
  %v289 = vld [vmem:[%s288] sm:$0xff]
  %s290 = scalar_lea.vmem %s1, 208
  %291 = vst [vmem:[%s290] sm:$0xff] %v289
  %s292 = scalar_lea.vmem %s0, 752
  %v293 = vld [vmem:[%s292] sm:$0xff]
  %s294 = scalar_lea.vmem %s1, 688
  %295 = vst [vmem:[%s294] sm:$0xff] %v293
  %s296 = scalar_lea.vmem %s0, 240
  %v297 = vld [vmem:[%s296] sm:$0xff]
  %s298 = scalar_lea.vmem %s1, 240
  %299 = vst [vmem:[%s298] sm:$0xff] %v297
  %s300 = scalar_lea.vmem %s0, 720
  %v301 = vld [vmem:[%s300] sm:$0xff]
  %s302 = scalar_lea.vmem %s1, 720
  %303 = vst [vmem:[%s302] sm:$0xff] %v301
  %s304 = scalar_lea.vmem %s0, 208
  %v305 = vld [vmem:[%s304] sm:$0xff]
  %s306 = scalar_lea.vmem %s1, 272
  %307 = vst [vmem:[%s306] sm:$0xff] %v305
  %s308 = scalar_lea.vmem %s0, 688
  %v309 = vld [vmem:[%s308] sm:$0xff]
  %s310 = scalar_lea.vmem %s1, 752
  %311 = vst [vmem:[%s310] sm:$0xff] %v309
  %s312 = scalar_lea.vmem %s0, 176
  %v313 = vld [vmem:[%s312] sm:$0xff]
  %s314 = scalar_lea.vmem %s1, 304
  %315 = vst [vmem:[%s314] sm:$0xff] %v313
  %s316 = scalar_lea.vmem %s0, 656
  %v317 = vld [vmem:[%s316] sm:$0xff]
  %s318 = scalar_lea.vmem %s1, 784
  %319 = vst [vmem:[%s318] sm:$0xff] %v317
  %s320 = scalar_lea.vmem %s0, 144
  %v321 = vld [vmem:[%s320] sm:$0xff]
  %s322 = scalar_lea.vmem %s1, 336
  %323 = vst [vmem:[%s322] sm:$0xff] %v321
  %s324 = scalar_lea.vmem %s0, 624
  %v325 = vld [vmem:[%s324] sm:$0xff]
  %s326 = scalar_lea.vmem %s1, 816
  %327 = vst [vmem:[%s326] sm:$0xff] %v325
  %s328 = scalar_lea.vmem %s0, 112
  %v329 = vld [vmem:[%s328] sm:$0xff]
  %s330 = scalar_lea.vmem %s1, 368
  %331 = vst [vmem:[%s330] sm:$0xff] %v329
  %s332 = scalar_lea.vmem %s0, 592
  %v333 = vld [vmem:[%s332] sm:$0xff]
  %s334 = scalar_lea.vmem %s1, 848
  %335 = vst [vmem:[%s334] sm:$0xff] %v333
  %s336 = scalar_lea.vmem %s0, 80
  %v337 = vld [vmem:[%s336] sm:$0xff]
  %s338 = scalar_lea.vmem %s1, 400
  %339 = vst [vmem:[%s338] sm:$0xff] %v337
  %s340 = scalar_lea.vmem %s0, 560
  %v341 = vld [vmem:[%s340] sm:$0xff]
  %s342 = scalar_lea.vmem %s1, 880
  %343 = vst [vmem:[%s342] sm:$0xff] %v341
  %s344 = scalar_lea.vmem %s0, 48
  %v345 = vld [vmem:[%s344] sm:$0xff]
  %s346 = scalar_lea.vmem %s1, 432
  %347 = vst [vmem:[%s346] sm:$0xff] %v345
  %s348 = scalar_lea.vmem %s0, 528
  %v349 = vld [vmem:[%s348] sm:$0xff]
  %s350 = scalar_lea.vmem %s1, 912
  %351 = vst [vmem:[%s350] sm:$0xff] %v349
  %s352 = scalar_lea.vmem %s0, 16
  %v353 = vld [vmem:[%s352] sm:$0xff]
  %s354 = scalar_lea.vmem %s1, 464
  %355 = vst [vmem:[%s354] sm:$0xff] %v353
  %s356 = scalar_lea.vmem %s0, 496
  %v357 = vld [vmem:[%s356] sm:$0xff]
  %s358 = scalar_lea.vmem %s1, 944
  %359 = vst [vmem:[%s358] sm:$0xff] %v357
  %s360 = scalar_lea.vmem %s0, 472
  %v361 = vld [vmem:[%s360] sm:$0xff]
  %s362 = scalar_lea.vmem %s1, 24
  %363 = vst [vmem:[%s362] sm:$0xff] %v361
  %s364 = scalar_lea.vmem %s0, 952
  %v365 = vld [vmem:[%s364] sm:$0xff]
  %s366 = scalar_lea.vmem %s1, 504
  %367 = vst [vmem:[%s366] sm:$0xff] %v365
  %s368 = scalar_lea.vmem %s0, 440
  %v369 = vld [vmem:[%s368] sm:$0xff]
  %s370 = scalar_lea.vmem %s1, 56
  %371 = vst [vmem:[%s370] sm:$0xff] %v369
  %s372 = scalar_lea.vmem %s0, 920
  %v373 = vld [vmem:[%s372] sm:$0xff]
  %s374 = scalar_lea.vmem %s1, 536
  %375 = vst [vmem:[%s374] sm:$0xff] %v373
  %s376 = scalar_lea.vmem %s0, 408
  %v377 = vld [vmem:[%s376] sm:$0xff]
  %s378 = scalar_lea.vmem %s1, 88
  %379 = vst [vmem:[%s378] sm:$0xff] %v377
  %s380 = scalar_lea.vmem %s0, 888
  %v381 = vld [vmem:[%s380] sm:$0xff]
  %s382 = scalar_lea.vmem %s1, 568
  %383 = vst [vmem:[%s382] sm:$0xff] %v381
  %s384 = scalar_lea.vmem %s0, 376
  %v385 = vld [vmem:[%s384] sm:$0xff]
  %s386 = scalar_lea.vmem %s1, 120
  %387 = vst [vmem:[%s386] sm:$0xff] %v385
  %s388 = scalar_lea.vmem %s0, 856
  %v389 = vld [vmem:[%s388] sm:$0xff]
  %s390 = scalar_lea.vmem %s1, 600
  %391 = vst [vmem:[%s390] sm:$0xff] %v389
  %s392 = scalar_lea.vmem %s0, 344
  %v393 = vld [vmem:[%s392] sm:$0xff]
  %s394 = scalar_lea.vmem %s1, 152
  %395 = vst [vmem:[%s394] sm:$0xff] %v393
  %s396 = scalar_lea.vmem %s0, 824
  %v397 = vld [vmem:[%s396] sm:$0xff]
  %s398 = scalar_lea.vmem %s1, 632
  %399 = vst [vmem:[%s398] sm:$0xff] %v397
  %s400 = scalar_lea.vmem %s0, 312
  %v401 = vld [vmem:[%s400] sm:$0xff]
  %s402 = scalar_lea.vmem %s1, 184
  %403 = vst [vmem:[%s402] sm:$0xff] %v401
  %s404 = scalar_lea.vmem %s0, 792
  %v405 = vld [vmem:[%s404] sm:$0xff]
  %s406 = scalar_lea.vmem %s1, 664
  %407 = vst [vmem:[%s406] sm:$0xff] %v405
  %s408 = scalar_lea.vmem %s0, 280
  %v409 = vld [vmem:[%s408] sm:$0xff]
  %s410 = scalar_lea.vmem %s1, 216
  %411 = vst [vmem:[%s410] sm:$0xff] %v409
  %s412 = scalar_lea.vmem %s0, 760
  %v413 = vld [vmem:[%s412] sm:$0xff]
  %s414 = scalar_lea.vmem %s1, 696
  %415 = vst [vmem:[%s414] sm:$0xff] %v413
  %s416 = scalar_lea.vmem %s0, 248
  %v417 = vld [vmem:[%s416] sm:$0xff]
  %s418 = scalar_lea.vmem %s1, 248
  %419 = vst [vmem:[%s418] sm:$0xff] %v417
  %s420 = scalar_lea.vmem %s0, 728
  %v421 = vld [vmem:[%s420] sm:$0xff]
  %s422 = scalar_lea.vmem %s1, 728
  %423 = vst [vmem:[%s422] sm:$0xff] %v421
  %s424 = scalar_lea.vmem %s0, 216
  %v425 = vld [vmem:[%s424] sm:$0xff]
  %s426 = scalar_lea.vmem %s1, 280
  %427 = vst [vmem:[%s426] sm:$0xff] %v425
  %s428 = scalar_lea.vmem %s0, 696
  %v429 = vld [vmem:[%s428] sm:$0xff]
  %s430 = scalar_lea.vmem %s1, 760
  %431 = vst [vmem:[%s430] sm:$0xff] %v429
  %s432 = scalar_lea.vmem %s0, 184
  %v433 = vld [vmem:[%s432] sm:$0xff]
  %s434 = scalar_lea.vmem %s1, 312
  %435 = vst [vmem:[%s434] sm:$0xff] %v433
  %s436 = scalar_lea.vmem %s0, 664
  %v437 = vld [vmem:[%s436] sm:$0xff]
  %s438 = scalar_lea.vmem %s1, 792
  %439 = vst [vmem:[%s438] sm:$0xff] %v437
  %s440 = scalar_lea.vmem %s0, 152
  %v441 = vld [vmem:[%s440] sm:$0xff]
  %s442 = scalar_lea.vmem %s1, 344
  %443 = vst [vmem:[%s442] sm:$0xff] %v441
  %s444 = scalar_lea.vmem %s0, 632
  %v445 = vld [vmem:[%s444] sm:$0xff]
  %s446 = scalar_lea.vmem %s1, 824
  %447 = vst [vmem:[%s446] sm:$0xff] %v445
  %s448 = scalar_lea.vmem %s0, 120
  %v449 = vld [vmem:[%s448] sm:$0xff]
  %s450 = scalar_lea.vmem %s1, 376
  %451 = vst [vmem:[%s450] sm:$0xff] %v449
  %s452 = scalar_lea.vmem %s0, 600
  %v453 = vld [vmem:[%s452] sm:$0xff]
  %s454 = scalar_lea.vmem %s1, 856
  %455 = vst [vmem:[%s454] sm:$0xff] %v453
  %s456 = scalar_lea.vmem %s0, 88
  %v457 = vld [vmem:[%s456] sm:$0xff]
  %s458 = scalar_lea.vmem %s1, 408
  %459 = vst [vmem:[%s458] sm:$0xff] %v457
  %s460 = scalar_lea.vmem %s0, 568
  %v461 = vld [vmem:[%s460] sm:$0xff]
  %s462 = scalar_lea.vmem %s1, 888
  %463 = vst [vmem:[%s462] sm:$0xff] %v461
  %s464 = scalar_lea.vmem %s0, 56
  %v465 = vld [vmem:[%s464] sm:$0xff]
  %s466 = scalar_lea.vmem %s1, 440
  %467 = vst [vmem:[%s466] sm:$0xff] %v465
  %s468 = scalar_lea.vmem %s0, 536
  %v469 = vld [vmem:[%s468] sm:$0xff]
  %s470 = scalar_lea.vmem %s1, 920
  %471 = vst [vmem:[%s470] sm:$0xff] %v469
  %s472 = scalar_lea.vmem %s0, 24
  %v473 = vld [vmem:[%s472] sm:$0xff]
  %s474 = scalar_lea.vmem %s1, 472
  %475 = vst [vmem:[%s474] sm:$0xff] %v473
  %s476 = scalar_lea.vmem %s0, 504
  %v477 = vld [vmem:[%s476] sm:$0xff]
  %s478 = scalar_lea.vmem %s1, 952
  %479 = vst [vmem:[%s478] sm:$0xff] %v477

// kernel: fno_forward.4
$region0: #{fno_forward.4}
  #allocation0 [shape = 'u32[]', space=smem, size = 0x4, offset = 0x4, fixed_abs, tag = 'smem constant byte address 0x4 - core index']
  #allocation1 [shape = 'u32[144,128]{1,0:T(1,128)}', space=vmem, size = 0x12000, scoped, tag = 'internal scratch']
  %s0 = inlined_call_operand.vmem [shape: f32[2,32,1024], index: 0, kind: input, shape index: {}]
  %s1 = inlined_call_operand.vmem [shape: f32[32,1], index: 1, kind: input, shape index: {}]
  %s2 = inlined_call_operand.vmem [shape: f32[32,1], index: 2, kind: input, shape index: {}]
  %s3 = inlined_call_operand.vmem [shape: f32[2,32,1024], index: 3, kind: output, shape index: {}]
  %s4 = sld [smem:[#allocation0]]
  $region87: #{fno_forward.4} parent=0
    _
  %s6 = ssub.s32 1, %s4
  %s7 = scalar_select 0, %s6, %s4
  $region1: #{fno_forward.4} parent=0
    #allocation2 [shape = 'u8[262144]{0}', space=vmem, size = 0x40000, scoped, tag = 'input window, operand 0']
    #allocation3 [shape = 'u8[262144]{0}', space=vmem, size = 0x40000, scoped, tag = 'output window, operand 0']
    loop: start=0, step=1, limit=4
    $region2: #{fno_forward.4} parent=1 // loop_pre_header
      _
    $region3: #{fno_forward.4} parent=1 // loop_header
      %s9 = sphi 0, %s13
      %p10 = scmp.ge.s32.totalorder %s9, 4
      %s19 = sphi 0, %s21
      %s22 = sphi 0, %s19
      %s23 = sphi 0, %s22
      %s39 = sphi 0, %s23
      %s45 = sphi 0, %s47
      %s48 = sphi 0, %s45
      %s49 = sphi 0, %s48
      %s65 = sphi 0, %s49
      %s71 = sphi 0, %s73
      %s74 = sphi 0, %s71
      %s75 = sphi 0, %s74
      %s91 = sphi 0, %s75
      %s97 = sphi 0, %s99
      %s100 = sphi 0, %s97
      %s101 = sphi 0, %s100
      %s117 = sphi 0, %s101
    $region4: #{fno_forward.4} parent=1 // loop_header_branch
      %12 = sbr.rel (%p10) target = $region8
    $region5: #{fno_forward.4} parent=1 // loop_body
      %s14 = ssub.s32 %s9, 1
      %s15 = ssub.s32 %s9, 2
      %s16 = sadd.s32 %s9, 1
      %s17 = ssub.s32 %s9, %s16
      %p18 = scmp.eq.s32.totalorder %s17, 0
      %s20 = sadd.s32 %s19, 1
      %s21 = scalar_select %p18, %s19, %s20
      %p24 = pneg %p18
      %p25 = scmp.eq.s32.totalorder %s9, 1
      %p26 = por %p24, %p25
      %p27 = scmp.ne.s32.totalorder %s19, %s22
      %p28 = scmp.eq.s32.totalorder %s9, 0
      %p29 = por %p27, %p28
      %p30 = scmp.ne.s32.totalorder %s19, %s22
      %p31 = scmp.eq.s32.totalorder %s14, 1
      %p32 = por %p30, %p31
      %p33 = scmp.ne.s32.totalorder %s22, %s23
      %p34 = scmp.eq.s32.totalorder %s14, 0
      %p35 = por %p33, %p34
      %p36 = scmp.ne.s32.totalorder %s22, %s23
      %p37 = scmp.eq.s32.totalorder %s15, 1
      %p38 = por %p36, %p37
      %p40 = scmp.ne.s32.totalorder %s23, %s39
      %p41 = scmp.eq.s32.totalorder %s15, 0
      %p42 = por %p40, %p41
      %s43 = ssub.s32 %s9, %s16
      %p44 = scmp.eq.s32.totalorder %s43, 0
      %s46 = sadd.s32 %s45, 1
      %s47 = scalar_select %p44, %s45, %s46
      %p50 = pneg %p44
      %p51 = scmp.eq.s32.totalorder %s9, 1
      %p52 = por %p50, %p51
      %p53 = scmp.ne.s32.totalorder %s45, %s48
      %p54 = scmp.eq.s32.totalorder %s9, 0
      %p55 = por %p53, %p54
      %p56 = scmp.ne.s32.totalorder %s45, %s48
      %p57 = scmp.eq.s32.totalorder %s14, 1
      %p58 = por %p56, %p57
      %p59 = scmp.ne.s32.totalorder %s48, %s49
      %p60 = scmp.eq.s32.totalorder %s14, 0
      %p61 = por %p59, %p60
      %p62 = scmp.ne.s32.totalorder %s48, %s49
      %p63 = scmp.eq.s32.totalorder %s15, 1
      %p64 = por %p62, %p63
      %p66 = scmp.ne.s32.totalorder %s49, %s65
      %p67 = scmp.eq.s32.totalorder %s15, 0
      %p68 = por %p66, %p67
      %s69 = ssub.s32 %s9, %s16
      %p70 = scmp.eq.s32.totalorder %s69, 0
      %s72 = sadd.s32 %s71, 1
      %s73 = scalar_select %p70, %s71, %s72
      %p76 = pneg %p70
      %p77 = scmp.eq.s32.totalorder %s9, 1
      %p78 = por %p76, %p77
      %p79 = scmp.ne.s32.totalorder %s71, %s74
      %p80 = scmp.eq.s32.totalorder %s9, 0
      %p81 = por %p79, %p80
      %p82 = scmp.ne.s32.totalorder %s71, %s74
      %p83 = scmp.eq.s32.totalorder %s14, 1
      %p84 = por %p82, %p83
      %p85 = scmp.ne.s32.totalorder %s74, %s75
      %p86 = scmp.eq.s32.totalorder %s14, 0
      %p87 = por %p85, %p86
      %p88 = scmp.ne.s32.totalorder %s74, %s75
      %p89 = scmp.eq.s32.totalorder %s15, 1
      %p90 = por %p88, %p89
      %p92 = scmp.ne.s32.totalorder %s75, %s91
      %p93 = scmp.eq.s32.totalorder %s15, 0
      %p94 = por %p92, %p93
      %s95 = ssub.s32 %s9, %s16
      %p96 = scmp.eq.s32.totalorder %s95, 0
      %s98 = sadd.s32 %s97, 1
      %s99 = scalar_select %p96, %s97, %s98
      %p102 = pneg %p96
      %p103 = scmp.eq.s32.totalorder %s9, 1
      %p104 = por %p102, %p103
      %p105 = scmp.ne.s32.totalorder %s97, %s100
      %p106 = scmp.eq.s32.totalorder %s9, 0
      %p107 = por %p105, %p106
      %p108 = scmp.ne.s32.totalorder %s97, %s100
      %p109 = scmp.eq.s32.totalorder %s14, 1
      %p110 = por %p108, %p109
      %p111 = scmp.ne.s32.totalorder %s100, %s101
      %p112 = scmp.eq.s32.totalorder %s14, 0
      %p113 = por %p111, %p112
      %p114 = scmp.ne.s32.totalorder %s100, %s101
      %p115 = scmp.eq.s32.totalorder %s15, 1
      %p116 = por %p114, %p115
      %p118 = scmp.ne.s32.totalorder %s101, %s117
      %p119 = scmp.eq.s32.totalorder %s15, 0
      %p120 = por %p118, %p119
      %p121 = scmp.le.s32.totalorder 1, %s9
      %p122 = scmp.lt.s32.totalorder %s9, 3
      %p123 = pnand %p121, %p122
      %p124 = pneg %p123
      // Predicated region
      $region9: #{fno_forward.4} parent=5 // pred_check
        _
      $region10: #{fno_forward.4} parent=5 // pred_check_branch
        %126 = sbr.rel (%p123) target = $region12
      $region11: #{fno_forward.4} parent=5 // pred_region
        %s127 = ssub.s32 %s9, 1
      $region12: #{fno_forward.4} parent=5 // pred_fallthru
        _
      %p128 = scmp.lt.s32.totalorder %s9, 2
      // Predicated region
      $region13: #{fno_forward.4} parent=5 // pred_check
        %p129 = pneg %p128
      $region14: #{fno_forward.4} parent=5 // pred_check_branch
        %131 = sbr.rel (%p129) target = $region16
      $region15: #{fno_forward.4} parent=5 // pred_region
        // Predicated region
        $region17: #{fno_forward.4} parent=15 // pred_check
          %p132 = pneg %p29
        $region18: #{fno_forward.4} parent=15 // pred_check_branch
          %134 = sbr.rel (%p132) target = $region20
        $region19: #{fno_forward.4} parent=15 // pred_region
          %s135 = sand.u32 %s19, 1
          %s136 = sand.u32 %s19, 1
          %s137 = smul.addr %s136, 256
          %s138 = scalar_lea.vmem [#allocation2], %s137
          %s139 = smul.u32 2, %s9
          %s140 = smul.addr %s139, 8
          %s141 = smul.addr %s140, 8
          %s142 = scalar_lea.vmem %s0, %s141
          // Predicated region
          $region21: #{fno_forward.4} parent=19 // pred_check
            _
          $region22: #{fno_forward.4} parent=19 // pred_check_branch
            %144 = sbr.rel (0) target = $region24
          $region23: #{fno_forward.4} parent=19 // pred_region
            // Predicated region
            $region25: #{fno_forward.4} parent=23 // pred_check
              _
            $region26: #{fno_forward.4} parent=23 // pred_check_branch
              %146 = sbr.rel (0) target = $region28
            $region27: #{fno_forward.4} parent=23 // pred_region
              loop: start=0, step=1, limit=1
              $region29: #{fno_forward.4} parent=27 // loop_pre_header
                _
              $region30: #{fno_forward.4} parent=27 // loop_header
                %s148 = sphi 0, %s152
                %p149 = scmp.ge.s32.totalorder %s148, 1
                %s153 = sphi %s142, %s142
                %s154 = sphi %s138, %s138
              $region31: #{fno_forward.4} parent=27 // loop_header_branch
                %151 = sbr.rel (%p149) target = $region35
              $region32: #{fno_forward.4} parent=27 // loop_body
                %v155 = vld [vmem:[%s153] sm:$0xff]
                %156 = vst [vmem:[%s154] sm:$0xff] %v155
                %v157 = vld [vmem:[%s153 + $0x8] sm:$0xff]
                %158 = vst [vmem:[%s154 + $0x8] sm:$0xff] %v157
                %v159 = vld [vmem:[%s153 + $0x10] sm:$0xff]
                %160 = vst [vmem:[%s154 + $0x10] sm:$0xff] %v159
                %v161 = vld [vmem:[%s153 + $0x18] sm:$0xff]
                %162 = vst [vmem:[%s154 + $0x18] sm:$0xff] %v161
                %v163 = vld [vmem:[%s153 + $0x20] sm:$0xff]
                %164 = vst [vmem:[%s154 + $0x20] sm:$0xff] %v163
                %v165 = vld [vmem:[%s153 + $0x28] sm:$0xff]
                %166 = vst [vmem:[%s154 + $0x28] sm:$0xff] %v165
                %v167 = vld [vmem:[%s153 + $0x30] sm:$0xff]
                %168 = vst [vmem:[%s154 + $0x30] sm:$0xff] %v167
                %v169 = vld [vmem:[%s153 + $0x38] sm:$0xff]
                %170 = vst [vmem:[%s154 + $0x38] sm:$0xff] %v169
                %v171 = vld [vmem:[%s153 + $0x40] sm:$0xff]
                %172 = vst [vmem:[%s154 + $0x40] sm:$0xff] %v171
                %v173 = vld [vmem:[%s153 + $0x48] sm:$0xff]
                %174 = vst [vmem:[%s154 + $0x48] sm:$0xff] %v173
                %v175 = vld [vmem:[%s153 + $0x50] sm:$0xff]
                %176 = vst [vmem:[%s154 + $0x50] sm:$0xff] %v175
                %v177 = vld [vmem:[%s153 + $0x58] sm:$0xff]
                %178 = vst [vmem:[%s154 + $0x58] sm:$0xff] %v177
                %v179 = vld [vmem:[%s153 + $0x60] sm:$0xff]
                %180 = vst [vmem:[%s154 + $0x60] sm:$0xff] %v179
                %v181 = vld [vmem:[%s153 + $0x68] sm:$0xff]
                %182 = vst [vmem:[%s154 + $0x68] sm:$0xff] %v181
                %v183 = vld [vmem:[%s153 + $0x70] sm:$0xff]
                %184 = vst [vmem:[%s154 + $0x70] sm:$0xff] %v183
                %v185 = vld [vmem:[%s153 + $0x78] sm:$0xff]
                %186 = vst [vmem:[%s154 + $0x78] sm:$0xff] %v185
                %v187 = vld [vmem:[%s153 + $0x100] sm:$0xff]
                %188 = vst [vmem:[%s154 + $0x80] sm:$0xff] %v187
                %v189 = vld [vmem:[%s153 + $0x108] sm:$0xff]
                %190 = vst [vmem:[%s154 + $0x88] sm:$0xff] %v189
                %v191 = vld [vmem:[%s153 + $0x110] sm:$0xff]
                %192 = vst [vmem:[%s154 + $0x90] sm:$0xff] %v191
                %v193 = vld [vmem:[%s153 + $0x118] sm:$0xff]
                %194 = vst [vmem:[%s154 + $0x98] sm:$0xff] %v193
                %v195 = vld [vmem:[%s153 + $0x120] sm:$0xff]
                %196 = vst [vmem:[%s154 + $0xa0] sm:$0xff] %v195
                %v197 = vld [vmem:[%s153 + $0x128] sm:$0xff]
                %198 = vst [vmem:[%s154 + $0xa8] sm:$0xff] %v197
                %v199 = vld [vmem:[%s153 + $0x130] sm:$0xff]
                %200 = vst [vmem:[%s154 + $0xb0] sm:$0xff] %v199
                %v201 = vld [vmem:[%s153 + $0x138] sm:$0xff]
                %202 = vst [vmem:[%s154 + $0xb8] sm:$0xff] %v201
                %v203 = vld [vmem:[%s153 + $0x140] sm:$0xff]
                %204 = vst [vmem:[%s154 + $0xc0] sm:$0xff] %v203
                %v205 = vld [vmem:[%s153 + $0x148] sm:$0xff]
                %206 = vst [vmem:[%s154 + $0xc8] sm:$0xff] %v205
                %v207 = vld [vmem:[%s153 + $0x150] sm:$0xff]
                %208 = vst [vmem:[%s154 + $0xd0] sm:$0xff] %v207
                %v209 = vld [vmem:[%s153 + $0x158] sm:$0xff]
                %210 = vst [vmem:[%s154 + $0xd8] sm:$0xff] %v209
                %v211 = vld [vmem:[%s153 + $0x160] sm:$0xff]
                %212 = vst [vmem:[%s154 + $0xe0] sm:$0xff] %v211
                %v213 = vld [vmem:[%s153 + $0x168] sm:$0xff]
                %214 = vst [vmem:[%s154 + $0xe8] sm:$0xff] %v213
                %v215 = vld [vmem:[%s153 + $0x170] sm:$0xff]
                %216 = vst [vmem:[%s154 + $0xf0] sm:$0xff] %v215
                %v217 = vld [vmem:[%s153 + $0x178] sm:$0xff]
                %218 = vst [vmem:[%s154 + $0xf8] sm:$0xff] %v217
              $region33: #{fno_forward.4} parent=27 // loop_footer
                %s152 = sadd.s32 1, %s148
              $region34: #{fno_forward.4} parent=27 // loop_footer_branch
                %147 = sbr.rel target = $region30
              $region35: #{fno_forward.4} parent=27 // loop_exit
                _
            $region28: #{fno_forward.4} parent=23 // pred_fallthru
              _
            // Predicated region
            $region36: #{fno_forward.4} parent=23 // pred_check
              _
            $region37: #{fno_forward.4} parent=23 // pred_check_branch
              %220 = sbr.rel target = $region39
            $region38: #{fno_forward.4} parent=23 // pred_region
              _
            $region39: #{fno_forward.4} parent=23 // pred_fallthru
              _
          $region24: #{fno_forward.4} parent=19 // pred_fallthru
            _
          %221 = vnop
        $region20: #{fno_forward.4} parent=15 // pred_fallthru
          _
        // Predicated region
        $region40: #{fno_forward.4} parent=15 // pred_check
          %p222 = pneg %p55
        $region41: #{fno_forward.4} parent=15 // pred_check_branch
          %224 = sbr.rel (%p222) target = $region43
        $region42: #{fno_forward.4} parent=15 // pred_region
          %s225 = smul.u32 2, %s9
          %p226 = scmp.lt.s32.totalorder %s225, 3
          %s227 = scalar_select %p226, %s225, 3
          %s228 = smul.addr %s227, 8
          %s229 = scalar_lea.vmem %s1, %s228
          %s230 = smul.u32 2, %s9
        $region43: #{fno_forward.4} parent=15 // pred_fallthru
          _
        // Predicated region
        $region44: #{fno_forward.4} parent=15 // pred_check
          %p231 = pneg %p81
        $region45: #{fno_forward.4} parent=15 // pred_check_branch
          %233 = sbr.rel (%p231) target = $region47
        $region46: #{fno_forward.4} parent=15 // pred_region
          %s234 = smul.u32 2, %s9
          %p235 = scmp.lt.s32.totalorder %s234, 3
          %s236 = scalar_select %p235, %s234, 3
          %s237 = smul.addr %s236, 8
          %s238 = scalar_lea.vmem %s2, %s237
          %s239 = smul.u32 2, %s9
        $region47: #{fno_forward.4} parent=15 // pred_fallthru
          _
      $region16: #{fno_forward.4} parent=5 // pred_fallthru
        _
      %p240 = scmp.le.s32.totalorder 1, %s9
      %p241 = scmp.lt.s32.totalorder %s9, 3
      %p242 = pnand %p240, %p241
      %p243 = pneg %p242
      // Predicated region
      $region48: #{fno_forward.4} parent=5 // pred_check
        _
      $region49: #{fno_forward.4} parent=5 // pred_check_branch
        %245 = sbr.rel (%p242) target = $region51
      $region50: #{fno_forward.4} parent=5 // pred_region
        %s246 = ssub.s32 %s9, 1
        %s247 = sand.u32 %s22, 1
        %s248 = sand.u32 %s22, 1
        %s249 = smul.addr %s248, 256
        %s250 = scalar_lea.vmem [#allocation2], %s249
        // Predicated region
        $region52: #{fno_forward.4} parent=50 // pred_check
          %p251 = pneg %p35
        $region53: #{fno_forward.4} parent=50 // pred_check_branch
          %253 = sbr.rel (%p251) target = $region55
        $region54: #{fno_forward.4} parent=50 // pred_region
          _
        $region55: #{fno_forward.4} parent=50 // pred_fallthru
          _
        %s254 = sand.u32 %s22, 1
        %s255 = sand.u32 %s22, 1
        %s256 = smul.addr %s255, 256
        %s257 = scalar_lea.vmem [#allocation2], %s256
        %p258 = pneg %p35
        %p259 = pneg %p32
        %s260 = smul.u32 2, %s14
        %p261 = scmp.lt.s32.totalorder %s260, 3
        %s262 = scalar_select %p261, %s260, 3
        %s263 = smul.addr %s262, 8
        %s264 = scalar_lea.vmem %s1, %s263
        %p265 = pneg %p61
        %p266 = pneg %p58
        %s267 = smul.u32 2, %s14
        %p268 = scmp.lt.s32.totalorder %s267, 3
        %s269 = scalar_select %p268, %s267, 3
        %s270 = smul.addr %s269, 8
        %s271 = scalar_lea.vmem %s2, %s270
        %p272 = pneg %p87
        %p273 = pneg %p84
        %p274 = pneg %p113
        %p275 = pneg %p110
        %s276 = sand.u32 %s100, 1
        %s277 = sand.u32 %s100, 1
        %s278 = smul.addr %s277, 256
        %s279 = scalar_lea.vmem [#allocation3], %s278
        %s280 = smul.u32 2, %s14
        %s281 = smul.u32 2, %s14
        %p282 = scmp.lt.s32.totalorder %s281, 3
        %s283 = scalar_select %p282, %s281, 3
        %s284 = smul.addr %s283, 8
        %s285 = scalar_lea.vmem %s1, %s284
        %s286 = smul.u32 2, %s14
        %s287 = smul.u32 2, %s14
        %p288 = scmp.lt.s32.totalorder %s287, 3
        %s289 = scalar_select %p288, %s287, 3
        %s290 = smul.addr %s289, 8
        %s291 = scalar_lea.vmem %s2, %s290
        %s292 = smul.u32 2, %s14
        %s293 = smul.u32 2, %s14
        %v294 = vld [vmem:[%s250] sm:$0xff]
        %v295 = vld [vmem:[%s250 + $0x8] sm:$0xff]
        %v296 = vld [vmem:[%s250 + $0x10] sm:$0xff]
        %v297 = vld [vmem:[%s250 + $0x18] sm:$0xff]
        %v298 = vld [vmem:[%s250 + $0x20] sm:$0xff]
        %v299 = vld [vmem:[%s250 + $0x28] sm:$0xff]
        %v300 = vld [vmem:[%s250 + $0x30] sm:$0xff]
        %v301 = vld [vmem:[%s250 + $0x38] sm:$0xff]
        %v302 = vld [vmem:[%s250 + $0x40] sm:$0xff]
        %v303 = vld [vmem:[%s250 + $0x48] sm:$0xff]
        %v304 = vld [vmem:[%s250 + $0x50] sm:$0xff]
        %v305 = vld [vmem:[%s250 + $0x58] sm:$0xff]
        %v306 = vld [vmem:[%s250 + $0x60] sm:$0xff]
        %v307 = vld [vmem:[%s250 + $0x68] sm:$0xff]
        %v308 = vld [vmem:[%s250 + $0x70] sm:$0xff]
        %v309 = vld [vmem:[%s250 + $0x78] sm:$0xff]
        %v310 = vld [vmem:[%s250 + $0x80] sm:$0xff]
        %v311 = vld [vmem:[%s250 + $0x88] sm:$0xff]
        %v312 = vld [vmem:[%s250 + $0x90] sm:$0xff]
        %v313 = vld [vmem:[%s250 + $0x98] sm:$0xff]
        %v314 = vld [vmem:[%s250 + $0xa0] sm:$0xff]
        %v315 = vld [vmem:[%s250 + $0xa8] sm:$0xff]
        %v316 = vld [vmem:[%s250 + $0xb0] sm:$0xff]
        %v317 = vld [vmem:[%s250 + $0xb8] sm:$0xff]
        %v318 = vld [vmem:[%s250 + $0xc0] sm:$0xff]
        %v319 = vld [vmem:[%s250 + $0xc8] sm:$0xff]
        %v320 = vld [vmem:[%s250 + $0xd0] sm:$0xff]
        %v321 = vld [vmem:[%s250 + $0xd8] sm:$0xff]
        %v322 = vld [vmem:[%s250 + $0xe0] sm:$0xff]
        %v323 = vld [vmem:[%s250 + $0xe8] sm:$0xff]
        %v324 = vld [vmem:[%s250 + $0xf0] sm:$0xff]
        %v325 = vld [vmem:[%s250 + $0xf8] sm:$0xff]
        %v326 = vadd.f32 %v294, %v295
        %v327 = vadd.f32 %v326, %v296
        %v328 = vadd.f32 %v327, %v297
        %v329 = vadd.f32 %v328, %v298
        %v330 = vadd.f32 %v329, %v299
        %v331 = vadd.f32 %v330, %v300
        %v332 = vadd.f32 %v331, %v301
        %333 = vadd.xlane.f32.xlu0 %v332
        %v334 = vpop.xlane.xlu0 %333
        %v335 = vadd.f32 %v302, %v303
        %v336 = vadd.f32 %v335, %v304
        %v337 = vadd.f32 %v336, %v305
        %v338 = vadd.f32 %v337, %v306
        %v339 = vadd.f32 %v338, %v307
        %v340 = vadd.f32 %v339, %v308
        %v341 = vadd.f32 %v340, %v309
        %342 = vadd.xlane.f32.xlu0 %v341
        %v343 = vpop.xlane.xlu0 %342
        %v344 = vadd.f32 %v310, %v311
        %v345 = vadd.f32 %v344, %v312
        %v346 = vadd.f32 %v345, %v313
        %v347 = vadd.f32 %v346, %v314
        %v348 = vadd.f32 %v347, %v315
        %v349 = vadd.f32 %v348, %v316
        %v350 = vadd.f32 %v349, %v317
        %351 = vadd.xlane.f32.xlu0 %v350
        %v352 = vpop.xlane.xlu0 %351
        %v353 = vadd.f32 %v318, %v319
        %v354 = vadd.f32 %v353, %v320
        %v355 = vadd.f32 %v354, %v321
        %v356 = vadd.f32 %v355, %v322
        %v357 = vadd.f32 %v356, %v323
        %v358 = vadd.f32 %v357, %v324
        %v359 = vadd.f32 %v358, %v325
        %360 = vadd.xlane.f32.xlu0 %v359
        %v361 = vpop.xlane.xlu0 %360
        %v362 = vadd.f32 %v334, %v352
        %v363 = vadd.f32 %v343, %v361
        %v364 = vmul.f32 %v294, %v294
        %v365 = vmul.f32 %v295, %v295
        %v366 = vmul.f32 %v296, %v296
        %v367 = vmul.f32 %v297, %v297
        %v368 = vmul.f32 %v298, %v298
        %v369 = vmul.f32 %v299, %v299
        %v370 = vmul.f32 %v300, %v300
        %v371 = vmul.f32 %v301, %v301
        %v372 = vmul.f32 %v302, %v302
        %v373 = vmul.f32 %v303, %v303
        %v374 = vmul.f32 %v304, %v304
        %v375 = vmul.f32 %v305, %v305
        %v376 = vmul.f32 %v306, %v306
        %v377 = vmul.f32 %v307, %v307
        %v378 = vmul.f32 %v308, %v308
        %v379 = vmul.f32 %v309, %v309
        %v380 = vmul.f32 %v310, %v310
        %v381 = vmul.f32 %v311, %v311
        %v382 = vmul.f32 %v312, %v312
        %v383 = vmul.f32 %v313, %v313
        %v384 = vmul.f32 %v314, %v314
        %v385 = vmul.f32 %v315, %v315
        %v386 = vmul.f32 %v316, %v316
        %v387 = vmul.f32 %v317, %v317
        %v388 = vmul.f32 %v318, %v318
        %v389 = vmul.f32 %v319, %v319
        %v390 = vmul.f32 %v320, %v320
        %v391 = vmul.f32 %v321, %v321
        %v392 = vmul.f32 %v322, %v322
        %v393 = vmul.f32 %v323, %v323
        %v394 = vmul.f32 %v324, %v324
        %v395 = vmul.f32 %v325, %v325
        %v396 = vadd.f32 %v364, %v365
        %v397 = vadd.f32 %v396, %v366
        %v398 = vadd.f32 %v397, %v367
        %v399 = vadd.f32 %v398, %v368
        %v400 = vadd.f32 %v399, %v369
        %v401 = vadd.f32 %v400, %v370
        %v402 = vadd.f32 %v401, %v371
        %403 = vadd.xlane.f32.xlu0 %v402
        %v404 = vpop.xlane.xlu0 %403
        %v405 = vadd.f32 %v372, %v373
        %v406 = vadd.f32 %v405, %v374
        %v407 = vadd.f32 %v406, %v375
        %v408 = vadd.f32 %v407, %v376
        %v409 = vadd.f32 %v408, %v377
        %v410 = vadd.f32 %v409, %v378
        %v411 = vadd.f32 %v410, %v379
        %412 = vadd.xlane.f32.xlu0 %v411
        %v413 = vpop.xlane.xlu0 %412
        %v414 = vadd.f32 %v380, %v381
        %v415 = vadd.f32 %v414, %v382
        %v416 = vadd.f32 %v415, %v383
        %v417 = vadd.f32 %v416, %v384
        %v418 = vadd.f32 %v417, %v385
        %v419 = vadd.f32 %v418, %v386
        %v420 = vadd.f32 %v419, %v387
        %421 = vadd.xlane.f32.xlu0 %v420
        %v422 = vpop.xlane.xlu0 %421
        %v423 = vadd.f32 %v388, %v389
        %v424 = vadd.f32 %v423, %v390
        %v425 = vadd.f32 %v424, %v391
        %v426 = vadd.f32 %v425, %v392
        %v427 = vadd.f32 %v426, %v393
        %v428 = vadd.f32 %v427, %v394
        %v429 = vadd.f32 %v428, %v395
        %430 = vadd.xlane.f32.xlu0 %v429
        %v431 = vpop.xlane.xlu0 %430
        %v432 = vadd.f32 %v404, %v422
        %v433 = vadd.f32 %v413, %v431
        %v434 = vrcp.pop 2048.0
        %v435 = vmul.f32 %v362, %v434
        %v436 = vmul.f32 %v363, %v434
        %v437 = vmul.f32 %v432, %v434
        %v438 = vmul.f32 %v433, %v434
        %v439 = vmul.f32 %v435, %v435
        %v440 = vmul.f32 %v436, %v436
        %v441 = vsub.f32 %v437, %v439
        %v442 = vsub.f32 %v438, %v440
        %v443 = vadd.f32 %v441, 1e-05
        %v444 = vadd.f32 %v442, 1e-05
        %v445 = vrsqrt.pop %v443
        %v446 = vrsqrt.pop %v444
        %v447 = vld [vmem:[%s285] sm:$0xff]
        %v448 = vld [vmem:[%s285 + $0x8] sm:$0xff]
        %v449 = vmul.f32 %v445, %v447
        %v450 = vmul.f32 %v446, %v448
        %v451 = vld [vmem:[%s291] sm:$0xff]
        %v452 = vld [vmem:[%s291 + $0x8] sm:$0xff]
        %v453 = vmul.f32 %v435, %v449
        %v454 = vmul.f32 %v436, %v450
        %v455 = vsub.f32 %v451, %v453
        %v456 = vsub.f32 %v452, %v454
        %458 = vset.pattern.permute.xlu0 0
        %459 = vperm.xlu0 %458, %v449
        %v460 = vpop.permute.xlu0 %459
        %463 = vset.pattern.permute.xlu0 0
        %464 = vperm.xlu0 %463, %v450
        %v465 = vpop.permute.xlu0 %464
        %v467 = vmul.f32 %v294, %v460
        %v468 = vmul.f32 %v295, %v460
        %v469 = vmul.f32 %v296, %v460
        %v470 = vmul.f32 %v297, %v460
        %v471 = vmul.f32 %v298, %v460
        %v472 = vmul.f32 %v299, %v460
        %v473 = vmul.f32 %v300, %v460
        %v474 = vmul.f32 %v301, %v460
        %v475 = vmul.f32 %v302, %v465
        %v476 = vmul.f32 %v303, %v465
        %v477 = vmul.f32 %v304, %v465
        %v478 = vmul.f32 %v305, %v465
        %v479 = vmul.f32 %v306, %v465
        %v480 = vmul.f32 %v307, %v465
        %v481 = vmul.f32 %v308, %v465
        %v482 = vmul.f32 %v309, %v465
        %v483 = vmul.f32 %v310, %v460
        %v484 = vmul.f32 %v311, %v460
        %v485 = vmul.f32 %v312, %v460
        %v486 = vmul.f32 %v313, %v460
        %v487 = vmul.f32 %v314, %v460
        %v488 = vmul.f32 %v315, %v460
        %v489 = vmul.f32 %v316, %v460
        %v490 = vmul.f32 %v317, %v460
        %v491 = vmul.f32 %v318, %v465
        %v492 = vmul.f32 %v319, %v465
        %v493 = vmul.f32 %v320, %v465
        %v494 = vmul.f32 %v321, %v465
        %v495 = vmul.f32 %v322, %v465
        %v496 = vmul.f32 %v323, %v465
        %v497 = vmul.f32 %v324, %v465
        %v498 = vmul.f32 %v325, %v465
        %500 = vset.pattern.permute.xlu0 0
        %501 = vperm.xlu0 %500, %v455
        %v502 = vpop.permute.xlu0 %501
        %505 = vset.pattern.permute.xlu0 0
        %506 = vperm.xlu0 %505, %v456
        %v507 = vpop.permute.xlu0 %506
        %v509 = vadd.f32 %v467, %v502
        %v510 = vadd.f32 %v468, %v502
        %v511 = vadd.f32 %v469, %v502
        %v512 = vadd.f32 %v470, %v502
        %v513 = vadd.f32 %v471, %v502
        %v514 = vadd.f32 %v472, %v502
        %v515 = vadd.f32 %v473, %v502
        %v516 = vadd.f32 %v474, %v502
        %v517 = vadd.f32 %v475, %v507
        %v518 = vadd.f32 %v476, %v507
        %v519 = vadd.f32 %v477, %v507
        %v520 = vadd.f32 %v478, %v507
        %v521 = vadd.f32 %v479, %v507
        %v522 = vadd.f32 %v480, %v507
        %v523 = vadd.f32 %v481, %v507
        %v524 = vadd.f32 %v482, %v507
        %v525 = vadd.f32 %v483, %v502
        %v526 = vadd.f32 %v484, %v502
        %v527 = vadd.f32 %v485, %v502
        %v528 = vadd.f32 %v486, %v502
        %v529 = vadd.f32 %v487, %v502
        %v530 = vadd.f32 %v488, %v502
        %v531 = vadd.f32 %v489, %v502
        %v532 = vadd.f32 %v490, %v502
        %v533 = vadd.f32 %v491, %v507
        %v534 = vadd.f32 %v492, %v507
        %v535 = vadd.f32 %v493, %v507
        %v536 = vadd.f32 %v494, %v507
        %v537 = vadd.f32 %v495, %v507
        %v538 = vadd.f32 %v496, %v507
        %v539 = vadd.f32 %v497, %v507
        %v540 = vadd.f32 %v498, %v507
        %v541 = vmax.f32 %v509, 0.0
        %v542 = vmax.f32 %v510, 0.0
        %v543 = vmax.f32 %v511, 0.0
        %v544 = vmax.f32 %v512, 0.0
        %v545 = vmax.f32 %v513, 0.0
        %v546 = vmax.f32 %v514, 0.0
        %v547 = vmax.f32 %v515, 0.0
        %v548 = vmax.f32 %v516, 0.0
        %v549 = vmax.f32 %v517, 0.0
        %v550 = vmax.f32 %v518, 0.0
        %v551 = vmax.f32 %v519, 0.0
        %v552 = vmax.f32 %v520, 0.0
        %v553 = vmax.f32 %v521, 0.0
        %v554 = vmax.f32 %v522, 0.0
        %v555 = vmax.f32 %v523, 0.0
        %v556 = vmax.f32 %v524, 0.0
        %v557 = vmax.f32 %v525, 0.0
        %v558 = vmax.f32 %v526, 0.0
        %v559 = vmax.f32 %v527, 0.0
        %v560 = vmax.f32 %v528, 0.0
        %v561 = vmax.f32 %v529, 0.0
        %v562 = vmax.f32 %v530, 0.0
        %v563 = vmax.f32 %v531, 0.0
        %v564 = vmax.f32 %v532, 0.0
        %v565 = vmax.f32 %v533, 0.0
        %v566 = vmax.f32 %v534, 0.0
        %v567 = vmax.f32 %v535, 0.0
        %v568 = vmax.f32 %v536, 0.0
        %v569 = vmax.f32 %v537, 0.0
        %v570 = vmax.f32 %v538, 0.0
        %v571 = vmax.f32 %v539, 0.0
        %v572 = vmax.f32 %v540, 0.0
        %573 = vst [vmem:[%s279] sm:$0xff] %v541
        %574 = vst [vmem:[%s279 + $0x8] sm:$0xff] %v542
        %575 = vst [vmem:[%s279 + $0x10] sm:$0xff] %v543
        %576 = vst [vmem:[%s279 + $0x18] sm:$0xff] %v544
        %577 = vst [vmem:[%s279 + $0x20] sm:$0xff] %v545
        %578 = vst [vmem:[%s279 + $0x28] sm:$0xff] %v546
        %579 = vst [vmem:[%s279 + $0x30] sm:$0xff] %v547
        %580 = vst [vmem:[%s279 + $0x38] sm:$0xff] %v548
        %581 = vst [vmem:[%s279 + $0x40] sm:$0xff] %v549
        %582 = vst [vmem:[%s279 + $0x48] sm:$0xff] %v550
        %583 = vst [vmem:[%s279 + $0x50] sm:$0xff] %v551
        %584 = vst [vmem:[%s279 + $0x58] sm:$0xff] %v552
        %585 = vst [vmem:[%s279 + $0x60] sm:$0xff] %v553
        %586 = vst [vmem:[%s279 + $0x68] sm:$0xff] %v554
        %587 = vst [vmem:[%s279 + $0x70] sm:$0xff] %v555
        %588 = vst [vmem:[%s279 + $0x78] sm:$0xff] %v556
        %589 = vst [vmem:[%s279 + $0x80] sm:$0xff] %v557
        %590 = vst [vmem:[%s279 + $0x88] sm:$0xff] %v558
        %591 = vst [vmem:[%s279 + $0x90] sm:$0xff] %v559
        %592 = vst [vmem:[%s279 + $0x98] sm:$0xff] %v560
        %593 = vst [vmem:[%s279 + $0xa0] sm:$0xff] %v561
        %594 = vst [vmem:[%s279 + $0xa8] sm:$0xff] %v562
        %595 = vst [vmem:[%s279 + $0xb0] sm:$0xff] %v563
        %596 = vst [vmem:[%s279 + $0xb8] sm:$0xff] %v564
        %597 = vst [vmem:[%s279 + $0xc0] sm:$0xff] %v565
        %598 = vst [vmem:[%s279 + $0xc8] sm:$0xff] %v566
        %599 = vst [vmem:[%s279 + $0xd0] sm:$0xff] %v567
        %600 = vst [vmem:[%s279 + $0xd8] sm:$0xff] %v568
        %601 = vst [vmem:[%s279 + $0xe0] sm:$0xff] %v569
        %602 = vst [vmem:[%s279 + $0xe8] sm:$0xff] %v570
        %603 = vst [vmem:[%s279 + $0xf0] sm:$0xff] %v571
        %604 = vst [vmem:[%s279 + $0xf8] sm:$0xff] %v572
        %s605 = sand.u32 %s100, 1
        %s606 = sand.u32 %s100, 1
        %s607 = smul.addr %s606, 256
        %s608 = scalar_lea.vmem [#allocation3], %s607
        // Predicated region
        $region56: #{fno_forward.4} parent=50 // pred_check
          %p609 = pneg %p110
        $region57: #{fno_forward.4} parent=50 // pred_check_branch
          %611 = sbr.rel (%p609) target = $region59
        $region58: #{fno_forward.4} parent=50 // pred_region
          %s612 = smul.u32 2, %s14
          %s613 = smul.addr %s612, 8
          %s614 = smul.addr %s613, 8
          %s615 = scalar_lea.vmem %s3, %s614
          // Predicated region
          $region60: #{fno_forward.4} parent=58 // pred_check
            _
          $region61: #{fno_forward.4} parent=58 // pred_check_branch
            %617 = sbr.rel (0) target = $region63
          $region62: #{fno_forward.4} parent=58 // pred_region
            // Predicated region
            $region64: #{fno_forward.4} parent=62 // pred_check
              _
            $region65: #{fno_forward.4} parent=62 // pred_check_branch
              %619 = sbr.rel (0) target = $region67
            $region66: #{fno_forward.4} parent=62 // pred_region
              loop: start=0, step=1, limit=1
              $region68: #{fno_forward.4} parent=66 // loop_pre_header
                _
              $region69: #{fno_forward.4} parent=66 // loop_header
                %s621 = sphi 0, %s625
                %p622 = scmp.ge.s32.totalorder %s621, 1
                %s626 = sphi %s608, %s608
                %s627 = sphi %s615, %s615
              $region70: #{fno_forward.4} parent=66 // loop_header_branch
                %624 = sbr.rel (%p622) target = $region74
              $region71: #{fno_forward.4} parent=66 // loop_body
                %v628 = vld [vmem:[%s626] sm:$0xff]
                %629 = vst [vmem:[%s627] sm:$0xff] %v628
                %v630 = vld [vmem:[%s626 + $0x8] sm:$0xff]
                %631 = vst [vmem:[%s627 + $0x8] sm:$0xff] %v630
                %v632 = vld [vmem:[%s626 + $0x10] sm:$0xff]
                %633 = vst [vmem:[%s627 + $0x10] sm:$0xff] %v632
                %v634 = vld [vmem:[%s626 + $0x18] sm:$0xff]
                %635 = vst [vmem:[%s627 + $0x18] sm:$0xff] %v634
                %v636 = vld [vmem:[%s626 + $0x20] sm:$0xff]
                %637 = vst [vmem:[%s627 + $0x20] sm:$0xff] %v636
                %v638 = vld [vmem:[%s626 + $0x28] sm:$0xff]
                %639 = vst [vmem:[%s627 + $0x28] sm:$0xff] %v638
                %v640 = vld [vmem:[%s626 + $0x30] sm:$0xff]
                %641 = vst [vmem:[%s627 + $0x30] sm:$0xff] %v640
                %v642 = vld [vmem:[%s626 + $0x38] sm:$0xff]
                %643 = vst [vmem:[%s627 + $0x38] sm:$0xff] %v642
                %v644 = vld [vmem:[%s626 + $0x40] sm:$0xff]
                %645 = vst [vmem:[%s627 + $0x40] sm:$0xff] %v644
                %v646 = vld [vmem:[%s626 + $0x48] sm:$0xff]
                %647 = vst [vmem:[%s627 + $0x48] sm:$0xff] %v646
                %v648 = vld [vmem:[%s626 + $0x50] sm:$0xff]
                %649 = vst [vmem:[%s627 + $0x50] sm:$0xff] %v648
                %v650 = vld [vmem:[%s626 + $0x58] sm:$0xff]
                %651 = vst [vmem:[%s627 + $0x58] sm:$0xff] %v650
                %v652 = vld [vmem:[%s626 + $0x60] sm:$0xff]
                %653 = vst [vmem:[%s627 + $0x60] sm:$0xff] %v652
                %v654 = vld [vmem:[%s626 + $0x68] sm:$0xff]
                %655 = vst [vmem:[%s627 + $0x68] sm:$0xff] %v654
                %v656 = vld [vmem:[%s626 + $0x70] sm:$0xff]
                %657 = vst [vmem:[%s627 + $0x70] sm:$0xff] %v656
                %v658 = vld [vmem:[%s626 + $0x78] sm:$0xff]
                %659 = vst [vmem:[%s627 + $0x78] sm:$0xff] %v658
                %v660 = vld [vmem:[%s626 + $0x80] sm:$0xff]
                %661 = vst [vmem:[%s627 + $0x100] sm:$0xff] %v660
                %v662 = vld [vmem:[%s626 + $0x88] sm:$0xff]
                %663 = vst [vmem:[%s627 + $0x108] sm:$0xff] %v662
                %v664 = vld [vmem:[%s626 + $0x90] sm:$0xff]
                %665 = vst [vmem:[%s627 + $0x110] sm:$0xff] %v664
                %v666 = vld [vmem:[%s626 + $0x98] sm:$0xff]
                %667 = vst [vmem:[%s627 + $0x118] sm:$0xff] %v666
                %v668 = vld [vmem:[%s626 + $0xa0] sm:$0xff]
                %669 = vst [vmem:[%s627 + $0x120] sm:$0xff] %v668
                %v670 = vld [vmem:[%s626 + $0xa8] sm:$0xff]
                %671 = vst [vmem:[%s627 + $0x128] sm:$0xff] %v670
                %v672 = vld [vmem:[%s626 + $0xb0] sm:$0xff]
                %673 = vst [vmem:[%s627 + $0x130] sm:$0xff] %v672
                %v674 = vld [vmem:[%s626 + $0xb8] sm:$0xff]
                %675 = vst [vmem:[%s627 + $0x138] sm:$0xff] %v674
                %v676 = vld [vmem:[%s626 + $0xc0] sm:$0xff]
                %677 = vst [vmem:[%s627 + $0x140] sm:$0xff] %v676
                %v678 = vld [vmem:[%s626 + $0xc8] sm:$0xff]
                %679 = vst [vmem:[%s627 + $0x148] sm:$0xff] %v678
                %v680 = vld [vmem:[%s626 + $0xd0] sm:$0xff]
                %681 = vst [vmem:[%s627 + $0x150] sm:$0xff] %v680
                %v682 = vld [vmem:[%s626 + $0xd8] sm:$0xff]
                %683 = vst [vmem:[%s627 + $0x158] sm:$0xff] %v682
                %v684 = vld [vmem:[%s626 + $0xe0] sm:$0xff]
                %685 = vst [vmem:[%s627 + $0x160] sm:$0xff] %v684
                %v686 = vld [vmem:[%s626 + $0xe8] sm:$0xff]
                %687 = vst [vmem:[%s627 + $0x168] sm:$0xff] %v686
                %v688 = vld [vmem:[%s626 + $0xf0] sm:$0xff]
                %689 = vst [vmem:[%s627 + $0x170] sm:$0xff] %v688
                %v690 = vld [vmem:[%s626 + $0xf8] sm:$0xff]
                %691 = vst [vmem:[%s627 + $0x178] sm:$0xff] %v690
              $region72: #{fno_forward.4} parent=66 // loop_footer
                %s625 = sadd.s32 1, %s621
              $region73: #{fno_forward.4} parent=66 // loop_footer_branch
                %620 = sbr.rel target = $region69
              $region74: #{fno_forward.4} parent=66 // loop_exit
                _
            $region67: #{fno_forward.4} parent=62 // pred_fallthru
              _
            // Predicated region
            $region75: #{fno_forward.4} parent=62 // pred_check
              _
            $region76: #{fno_forward.4} parent=62 // pred_check_branch
              %693 = sbr.rel target = $region78
            $region77: #{fno_forward.4} parent=62 // pred_region
              _
            $region78: #{fno_forward.4} parent=62 // pred_fallthru
              _
          $region63: #{fno_forward.4} parent=58 // pred_fallthru
            _
          %694 = vnop
        $region59: #{fno_forward.4} parent=50 // pred_fallthru
          _
      $region51: #{fno_forward.4} parent=5 // pred_fallthru
        _
      %p695 = scmp.le.s32.totalorder 2, %s9
      // Predicated region
      $region79: #{fno_forward.4} parent=5 // pred_check
        %p696 = pneg %p695
      $region80: #{fno_forward.4} parent=5 // pred_check_branch
        %698 = sbr.rel (%p696) target = $region82
      $region81: #{fno_forward.4} parent=5 // pred_region
        %s699 = ssub.s32 %s9, 2
        // Predicated region
        $region83: #{fno_forward.4} parent=81 // pred_check
          %p700 = pneg %p116
        $region84: #{fno_forward.4} parent=81 // pred_check_branch
          %702 = sbr.rel (%p700) target = $region86
        $region85: #{fno_forward.4} parent=81 // pred_region
          %s703 = sand.u32 %s101, 1
          %s704 = sand.u32 %s101, 1
          %s705 = smul.addr %s704, 256
          %s706 = scalar_lea.vmem [#allocation3], %s705
        $region86: #{fno_forward.4} parent=81 // pred_fallthru
          _
      $region82: #{fno_forward.4} parent=5 // pred_fallthru
        _
    $region6: #{fno_forward.4} parent=1 // loop_footer
      %s13 = sadd.s32 1, %s9
    $region7: #{fno_forward.4} parent=1 // loop_footer_branch
      %8 = sbr.rel target = $region3
    $region8: #{fno_forward.4} parent=1 // loop_exit
      _

// kernel: fno_forward.5
$region0: #{fno_forward.5}
  #allocation0 [shape = 'u32[]', space=smem, size = 0x4, offset = 0x4, fixed_abs, tag = 'smem constant byte address 0x4 - core index']
  #allocation1 [shape = 'u32[144,128]{1,0:T(1,128)}', space=vmem, size = 0x12000, scoped, tag = 'internal scratch']
  %s0 = inlined_call_operand.vmem [shape: f32[2,2,32,256], index: 0, kind: input, shape index: {}]
  %s1 = inlined_call_operand.vmem [shape: f32[2,3,32,256], index: 1, kind: input, shape index: {}]
  %s2 = inlined_call_operand.vmem [shape: f32[2,2,3,256], index: 2, kind: output, shape index: {}]
  %s3 = sld [smem:[#allocation0]]
  $region41: #{fno_forward.5} parent=0
    _
  %s5 = ssub.s32 1, %s3
  %s6 = scalar_select 0, %s5, %s3
  loop: start=0, step=1, limit=4
  $region2: #{fno_forward.5} parent=0 // loop_pre_header
    _
  $region3: #{fno_forward.5} parent=0 // loop_header
    %s8 = sphi 0, %s12
    %p9 = scmp.ge.s32.totalorder %s8, 4
    %s18 = sphi 0, %s20
    %s21 = sphi 0, %s18
    %s22 = sphi 0, %s21
    %s38 = sphi 0, %s22
    %s44 = sphi 0, %s46
    %s47 = sphi 0, %s44
    %s48 = sphi 0, %s47
    %s64 = sphi 0, %s48
    %s70 = sphi 0, %s72
    %s73 = sphi 0, %s70
    %s74 = sphi 0, %s73
    %s90 = sphi 0, %s74
  $region4: #{fno_forward.5} parent=0 // loop_header_branch
    %11 = sbr.rel (%p9) target = $region8
  $region5: #{fno_forward.5} parent=0 // loop_body
    %s13 = ssub.s32 %s8, 1
    %s14 = ssub.s32 %s8, 2
    %s15 = sadd.s32 %s8, 1
    %s16 = ssub.s32 %s8, %s15
    %p17 = scmp.eq.s32.totalorder %s16, 0
    %s19 = sadd.s32 %s18, 1
    %s20 = scalar_select %p17, %s18, %s19
    %p23 = pneg %p17
    %p24 = scmp.eq.s32.totalorder %s8, 1
    %p25 = por %p23, %p24
    %p26 = scmp.ne.s32.totalorder %s18, %s21
    %p27 = scmp.eq.s32.totalorder %s8, 0
    %p28 = por %p26, %p27
    %p29 = scmp.ne.s32.totalorder %s18, %s21
    %p30 = scmp.eq.s32.totalorder %s13, 1
    %p31 = por %p29, %p30
    %p32 = scmp.ne.s32.totalorder %s21, %s22
    %p33 = scmp.eq.s32.totalorder %s13, 0
    %p34 = por %p32, %p33
    %p35 = scmp.ne.s32.totalorder %s21, %s22
    %p36 = scmp.eq.s32.totalorder %s14, 1
    %p37 = por %p35, %p36
    %p39 = scmp.ne.s32.totalorder %s22, %s38
    %p40 = scmp.eq.s32.totalorder %s14, 0
    %p41 = por %p39, %p40
    %s42 = ssub.s32 %s8, %s15
    %p43 = scmp.eq.s32.totalorder %s42, 0
    %s45 = sadd.s32 %s44, 1
    %s46 = scalar_select %p43, %s44, %s45
    %p49 = pneg %p43
    %p50 = scmp.eq.s32.totalorder %s8, 1
    %p51 = por %p49, %p50
    %p52 = scmp.ne.s32.totalorder %s44, %s47
    %p53 = scmp.eq.s32.totalorder %s8, 0
    %p54 = por %p52, %p53
    %p55 = scmp.ne.s32.totalorder %s44, %s47
    %p56 = scmp.eq.s32.totalorder %s13, 1
    %p57 = por %p55, %p56
    %p58 = scmp.ne.s32.totalorder %s47, %s48
    %p59 = scmp.eq.s32.totalorder %s13, 0
    %p60 = por %p58, %p59
    %p61 = scmp.ne.s32.totalorder %s47, %s48
    %p62 = scmp.eq.s32.totalorder %s14, 1
    %p63 = por %p61, %p62
    %p65 = scmp.ne.s32.totalorder %s48, %s64
    %p66 = scmp.eq.s32.totalorder %s14, 0
    %p67 = por %p65, %p66
    %s68 = ssub.s32 %s8, %s15
    %p69 = scmp.eq.s32.totalorder %s68, 0
    %s71 = sadd.s32 %s70, 1
    %s72 = scalar_select %p69, %s70, %s71
    %p75 = pneg %p69
    %p76 = scmp.eq.s32.totalorder %s8, 1
    %p77 = por %p75, %p76
    %p78 = scmp.ne.s32.totalorder %s70, %s73
    %p79 = scmp.eq.s32.totalorder %s8, 0
    %p80 = por %p78, %p79
    %p81 = scmp.ne.s32.totalorder %s70, %s73
    %p82 = scmp.eq.s32.totalorder %s13, 1
    %p83 = por %p81, %p82
    %p84 = scmp.ne.s32.totalorder %s73, %s74
    %p85 = scmp.eq.s32.totalorder %s13, 0
    %p86 = por %p84, %p85
    %p87 = scmp.ne.s32.totalorder %s73, %s74
    %p88 = scmp.eq.s32.totalorder %s14, 1
    %p89 = por %p87, %p88
    %p91 = scmp.ne.s32.totalorder %s74, %s90
    %p92 = scmp.eq.s32.totalorder %s14, 0
    %p93 = por %p91, %p92
    %p94 = scmp.le.s32.totalorder 1, %s8
    %p95 = scmp.lt.s32.totalorder %s8, 3
    %p96 = pnand %p94, %p95
    %p97 = pneg %p96
    // Predicated region
    $region9: #{fno_forward.5} parent=5 // pred_check
      _
    $region10: #{fno_forward.5} parent=5 // pred_check_branch
      %99 = sbr.rel (%p96) target = $region12
    $region11: #{fno_forward.5} parent=5 // pred_region
      %s100 = ssub.s32 %s8, 1
    $region12: #{fno_forward.5} parent=5 // pred_fallthru
      _
    %p101 = scmp.lt.s32.totalorder %s8, 2
    // Predicated region
    $region13: #{fno_forward.5} parent=5 // pred_check
      %p102 = pneg %p101
    $region14: #{fno_forward.5} parent=5 // pred_check_branch
      %104 = sbr.rel (%p102) target = $region16
    $region15: #{fno_forward.5} parent=5 // pred_region
      // Predicated region
      $region17: #{fno_forward.5} parent=15 // pred_check
        %p105 = pneg %p28
      $region18: #{fno_forward.5} parent=15 // pred_check_branch
        %107 = sbr.rel (%p105) target = $region20
      $region19: #{fno_forward.5} parent=15 // pred_region
        %p108 = scmp.lt.s32.totalorder %s8, 1
        %s109 = scalar_select %p108, %s8, 1
        %s110 = smul.addr %s109, 16
        %s111 = smul.addr %s110, 8
        %s112 = scalar_lea.vmem %s0, %s111
      $region20: #{fno_forward.5} parent=15 // pred_fallthru
        _
      // Predicated region
      $region21: #{fno_forward.5} parent=15 // pred_check
        %p113 = pneg %p54
      $region22: #{fno_forward.5} parent=15 // pred_check_branch
        %115 = sbr.rel (%p113) target = $region24
      $region23: #{fno_forward.5} parent=15 // pred_region
        %p116 = scmp.lt.s32.totalorder %s8, 1
        %s117 = scalar_select %p116, %s8, 1
        %s118 = smul.addr %s117, 24
        %s119 = smul.addr %s118, 8
        %s120 = scalar_lea.vmem %s1, %s119
      $region24: #{fno_forward.5} parent=15 // pred_fallthru
        _
    $region16: #{fno_forward.5} parent=5 // pred_fallthru
      _
    %p121 = scmp.le.s32.totalorder 1, %s8
    %p122 = scmp.lt.s32.totalorder %s8, 3
    %p123 = pnand %p121, %p122
    %p124 = pneg %p123
    // Predicated region
    $region25: #{fno_forward.5} parent=5 // pred_check
      _
    $region26: #{fno_forward.5} parent=5 // pred_check_branch
      %126 = sbr.rel (%p123) target = $region28
    $region27: #{fno_forward.5} parent=5 // pred_region
      %s127 = ssub.s32 %s8, 1
      %p128 = scmp.lt.s32.totalorder %s13, 1
      %s129 = scalar_select %p128, %s13, 1
      %s130 = smul.addr %s129, 16
      %s131 = smul.addr %s130, 8
      %s132 = scalar_lea.vmem %s0, %s131
      %p133 = pneg %p34
      %p134 = pneg %p31
      %p135 = scmp.lt.s32.totalorder %s13, 1
      %s136 = scalar_select %p135, %s13, 1
      %s137 = smul.addr %s136, 24
      %s138 = smul.addr %s137, 8
      %s139 = scalar_lea.vmem %s1, %s138
      %p140 = pneg %p60
      %p141 = pneg %p57
      %p142 = pneg %p86
      %p143 = pneg %p83
      %p144 = scmp.lt.s32.totalorder %s13, 1
      %s145 = scalar_select %p144, %s13, 1
      %s146 = smul.addr %s145, 4
      %s147 = smul.addr %s146, 4
      %s148 = scalar_lea.vmem %s2, %s147
      %p149 = scmp.lt.s32.totalorder %s13, 1
      %s150 = scalar_select %p149, %s13, 1
      %s151 = smul.addr %s150, 16
      %s152 = smul.addr %s151, 8
      %s153 = scalar_lea.vmem %s0, %s152
      %p154 = scmp.lt.s32.totalorder %s13, 1
      %s155 = scalar_select %p154, %s13, 1
      %s156 = smul.addr %s155, 24
      %s157 = smul.addr %s156, 8
      %s158 = scalar_lea.vmem %s1, %s157
      %p159 = scmp.lt.s32.totalorder %s13, 1
      %s160 = scalar_select %p159, %s13, 1
      %s161 = smul.addr %s160, 4
      %s162 = smul.addr %s161, 4
      %s163 = scalar_lea.vmem %s2, %s162
      %v164 = vld [vmem:[%s158] sm:$0xff]
      %v165 = vld [vmem:[%s158 + $0x8] sm:$0xff]
      %v166 = vld [vmem:[%s158 + $0x10] sm:$0xff]
      %v167 = vld [vmem:[%s158 + $0x18] sm:$0xff]
      %v168 = vld [vmem:[%s158 + $0x20] sm:$0xff]
      %v169 = vld [vmem:[%s158 + $0x28] sm:$0xff]
      %v170 = vld [vmem:[%s158 + $0x30] sm:$0xff]
      %v171 = vld [vmem:[%s158 + $0x38] sm:$0xff]
      %v172 = vld [vmem:[%s158 + $0x40] sm:$0xff]
      %v173 = vld [vmem:[%s158 + $0x48] sm:$0xff]
      %v174 = vld [vmem:[%s158 + $0x50] sm:$0xff]
      %v175 = vld [vmem:[%s158 + $0x58] sm:$0xff]
      %v176 = vld [vmem:[%s158 + $0x60] sm:$0xff]
      %v177 = vld [vmem:[%s158 + $0x68] sm:$0xff]
      %v178 = vld [vmem:[%s158 + $0x70] sm:$0xff]
      %v179 = vld [vmem:[%s158 + $0x78] sm:$0xff]
      %v180 = vld [vmem:[%s158 + $0x80] sm:$0xff]
      %v181 = vld [vmem:[%s158 + $0x88] sm:$0xff]
      %v182 = vld [vmem:[%s158 + $0x90] sm:$0xff]
      %v183 = vld [vmem:[%s158 + $0x98] sm:$0xff]
      %v184 = vld [vmem:[%s158 + $0xa0] sm:$0xff]
      %v185 = vld [vmem:[%s158 + $0xa8] sm:$0xff]
      %v186 = vld [vmem:[%s158 + $0xb0] sm:$0xff]
      %v187 = vld [vmem:[%s158 + $0xb8] sm:$0xff]
      %v188 = vld [vmem:[%s153] sm:$0xff]
      %v189 = vld [vmem:[%s153 + $0x8] sm:$0xff]
      %v190 = vld [vmem:[%s153 + $0x10] sm:$0xff]
      %v191 = vld [vmem:[%s153 + $0x18] sm:$0xff]
      %v192 = vld [vmem:[%s153 + $0x20] sm:$0xff]
      %v193 = vld [vmem:[%s153 + $0x28] sm:$0xff]
      %v194 = vld [vmem:[%s153 + $0x30] sm:$0xff]
      %v195 = vld [vmem:[%s153 + $0x38] sm:$0xff]
      %v196 = vmul.f32 %v188, %v164
      %v197 = vmul.f32 %v190, %v166
      %v198 = vmul.f32 %v192, %v168
      %v199 = vmul.f32 %v194, %v170
      %v200 = vmul.f32 %v188, %v172
      %v201 = vmul.f32 %v190, %v174
      %v202 = vmul.f32 %v192, %v176
      %v203 = vmul.f32 %v194, %v178
      %v204 = vmul.f32 %v188, %v180
      %v205 = vmul.f32 %v190, %v182
      %v206 = vmul.f32 %v192, %v184
      %v207 = vmul.f32 %v194, %v186
      %v208 = vmul.f32 %v189, %v165
      %v209 = vmul.f32 %v191, %v167
      %v210 = vmul.f32 %v193, %v169
      %v211 = vmul.f32 %v195, %v171
      %v212 = vmul.f32 %v189, %v173
      %v213 = vmul.f32 %v191, %v175
      %v214 = vmul.f32 %v193, %v177
      %v215 = vmul.f32 %v195, %v179
      %v216 = vmul.f32 %v189, %v181
      %v217 = vmul.f32 %v191, %v183
      %v218 = vmul.f32 %v193, %v185
      %v219 = vmul.f32 %v195, %v187
      %v220 = vsub.f32 %v196, %v208
      %v221 = vsub.f32 %v197, %v209
      %v222 = vsub.f32 %v198, %v210
      %v223 = vsub.f32 %v199, %v211
      %v224 = vsub.f32 %v200, %v212
      %v225 = vsub.f32 %v201, %v213
      %v226 = vsub.f32 %v202, %v214
      %v227 = vsub.f32 %v203, %v215
      %v228 = vsub.f32 %v204, %v216
      %v229 = vsub.f32 %v205, %v217
      %v230 = vsub.f32 %v206, %v218
      %v231 = vsub.f32 %v207, %v219
      %v232 = vadd.f32 %v220, %v221
      %v233 = vadd.f32 %v232, %v222
      %v234 = vadd.f32 %v233, %v223
      %v235 = vrot.slane %v234, 4
      %v236 = vadd.f32 %v234, %v235
      %v237 = vrot.slane %v236, 2
      %v238 = vadd.f32 %v236, %v237
      %v239 = vrot.slane %v238, 1
      %v240 = vadd.f32 %v238, %v239
      %v241 = vadd.f32 %v224, %v225
      %v242 = vadd.f32 %v241, %v226
      %v243 = vadd.f32 %v242, %v227
      %v244 = vrot.slane %v243, 4
      %v245 = vadd.f32 %v243, %v244
      %v246 = vrot.slane %v245, 2
      %v247 = vadd.f32 %v245, %v246
      %v248 = vrot.slane %v247, 1
      %v249 = vadd.f32 %v247, %v248
      %v250 = vadd.f32 %v228, %v229
      %v251 = vadd.f32 %v250, %v230
      %v252 = vadd.f32 %v251, %v231
      %v253 = vrot.slane %v252, 4
      %v254 = vadd.f32 %v252, %v253
      %v255 = vrot.slane %v254, 2
      %v256 = vadd.f32 %v254, %v255
      %v257 = vrot.slane %v256, 1
      %v258 = vadd.f32 %v256, %v257
      %v259 = vmul.f32 %v189, %v164
      %v260 = vmul.f32 %v191, %v166
      %v261 = vmul.f32 %v193, %v168
      %v262 = vmul.f32 %v195, %v170
      %v263 = vmul.f32 %v189, %v172
      %v264 = vmul.f32 %v191, %v174
      %v265 = vmul.f32 %v193, %v176
      %v266 = vmul.f32 %v195, %v178
      %v267 = vmul.f32 %v189, %v180
      %v268 = vmul.f32 %v191, %v182
      %v269 = vmul.f32 %v193, %v184
      %v270 = vmul.f32 %v195, %v186
      %v271 = vmul.f32 %v188, %v165
      %v272 = vmul.f32 %v190, %v167
      %v273 = vmul.f32 %v192, %v169
      %v274 = vmul.f32 %v194, %v171
      %v275 = vmul.f32 %v188, %v173
      %v276 = vmul.f32 %v190, %v175
      %v277 = vmul.f32 %v192, %v177
      %v278 = vmul.f32 %v194, %v179
      %v279 = vmul.f32 %v188, %v181
      %v280 = vmul.f32 %v190, %v183
      %v281 = vmul.f32 %v192, %v185
      %v282 = vmul.f32 %v194, %v187
      %v283 = vadd.f32 %v259, %v271
      %v284 = vadd.f32 %v260, %v272
      %v285 = vadd.f32 %v261, %v273
      %v286 = vadd.f32 %v262, %v274
      %v287 = vadd.f32 %v263, %v275
      %v288 = vadd.f32 %v264, %v276
      %v289 = vadd.f32 %v265, %v277
      %v290 = vadd.f32 %v266, %v278
      %v291 = vadd.f32 %v267, %v279
      %v292 = vadd.f32 %v268, %v280
      %v293 = vadd.f32 %v269, %v281
      %v294 = vadd.f32 %v270, %v282
      %v295 = vadd.f32 %v283, %v284
      %v296 = vadd.f32 %v295, %v285
      %v297 = vadd.f32 %v296, %v286
      %v298 = vrot.slane %v297, 4
      %v299 = vadd.f32 %v297, %v298
      %v300 = vrot.slane %v299, 2
      %v301 = vadd.f32 %v299, %v300
      %v302 = vrot.slane %v301, 1
      %v303 = vadd.f32 %v301, %v302
      %v304 = vadd.f32 %v287, %v288
      %v305 = vadd.f32 %v304, %v289
      %v306 = vadd.f32 %v305, %v290
      %v307 = vrot.slane %v306, 4
      %v308 = vadd.f32 %v306, %v307
      %v309 = vrot.slane %v308, 2
      %v310 = vadd.f32 %v308, %v309
      %v311 = vrot.slane %v310, 1
      %v312 = vadd.f32 %v310, %v311
      %v313 = vadd.f32 %v291, %v292
      %v314 = vadd.f32 %v313, %v293
      %v315 = vadd.f32 %v314, %v294
      %v316 = vrot.slane %v315, 4
      %v317 = vadd.f32 %v315, %v316
      %v318 = vrot.slane %v317, 2
      %v319 = vadd.f32 %v317, %v318
      %v320 = vrot.slane %v319, 1
      %v321 = vadd.f32 %v319, %v320
      %vm325 = vcmask 1041409
      %v326 = vsel %vm325, %v249, %v240
      %vm327 = vcmask 1042434
      %v328 = vsel %vm327, %v258, %v326
      %v332 = vsel %vm325, %v312, %v303
      %v333 = vsel %vm327, %v321, %v332
      %v334 = vcombine.low %v328, %v333
      %336 = vst [vmem:[%s163] sm:$0x77] %v334
      %s337 = scalar_lea.vmem %s153, 64
      %v338 = vld [vmem:[%s337] sm:$0xff]
      %v339 = vld [vmem:[%s337 + $0x8] sm:$0xff]
      %v340 = vld [vmem:[%s337 + $0x10] sm:$0xff]
      %v341 = vld [vmem:[%s337 + $0x18] sm:$0xff]
      %v342 = vld [vmem:[%s337 + $0x20] sm:$0xff]
      %v343 = vld [vmem:[%s337 + $0x28] sm:$0xff]
      %v344 = vld [vmem:[%s337 + $0x30] sm:$0xff]
      %v345 = vld [vmem:[%s337 + $0x38] sm:$0xff]
      %v346 = vmul.f32 %v338, %v164
      %v347 = vmul.f32 %v340, %v166
      %v348 = vmul.f32 %v342, %v168
      %v349 = vmul.f32 %v344, %v170
      %v350 = vmul.f32 %v338, %v172
      %v351 = vmul.f32 %v340, %v174
      %v352 = vmul.f32 %v342, %v176
      %v353 = vmul.f32 %v344, %v178
      %v354 = vmul.f32 %v338, %v180
      %v355 = vmul.f32 %v340, %v182
      %v356 = vmul.f32 %v342, %v184
      %v357 = vmul.f32 %v344, %v186
      %v358 = vmul.f32 %v339, %v165
      %v359 = vmul.f32 %v341, %v167
      %v360 = vmul.f32 %v343, %v169
      %v361 = vmul.f32 %v345, %v171
      %v362 = vmul.f32 %v339, %v173
      %v363 = vmul.f32 %v341, %v175
      %v364 = vmul.f32 %v343, %v177
      %v365 = vmul.f32 %v345, %v179
      %v366 = vmul.f32 %v339, %v181
      %v367 = vmul.f32 %v341, %v183
      %v368 = vmul.f32 %v343, %v185
      %v369 = vmul.f32 %v345, %v187
      %v370 = vsub.f32 %v346, %v358
      %v371 = vsub.f32 %v347, %v359
      %v372 = vsub.f32 %v348, %v360
      %v373 = vsub.f32 %v349, %v361
      %v374 = vsub.f32 %v350, %v362
      %v375 = vsub.f32 %v351, %v363
      %v376 = vsub.f32 %v352, %v364
      %v377 = vsub.f32 %v353, %v365
      %v378 = vsub.f32 %v354, %v366
      %v379 = vsub.f32 %v355, %v367
      %v380 = vsub.f32 %v356, %v368
      %v381 = vsub.f32 %v357, %v369
      %v382 = vadd.f32 %v370, %v371
      %v383 = vadd.f32 %v382, %v372
      %v384 = vadd.f32 %v383, %v373
      %v385 = vrot.slane %v384, 4
      %v386 = vadd.f32 %v384, %v385
      %v387 = vrot.slane %v386, 2
      %v388 = vadd.f32 %v386, %v387
      %v389 = vrot.slane %v388, 1
      %v390 = vadd.f32 %v388, %v389
      %v391 = vadd.f32 %v374, %v375
      %v392 = vadd.f32 %v391, %v376
      %v393 = vadd.f32 %v392, %v377
      %v394 = vrot.slane %v393, 4
      %v395 = vadd.f32 %v393, %v394
      %v396 = vrot.slane %v395, 2
      %v397 = vadd.f32 %v395, %v396
      %v398 = vrot.slane %v397, 1
      %v399 = vadd.f32 %v397, %v398
      %v400 = vadd.f32 %v378, %v379
      %v401 = vadd.f32 %v400, %v380
      %v402 = vadd.f32 %v401, %v381
      %v403 = vrot.slane %v402, 4
      %v404 = vadd.f32 %v402, %v403
      %v405 = vrot.slane %v404, 2
      %v406 = vadd.f32 %v404, %v405
      %v407 = vrot.slane %v406, 1
      %v408 = vadd.f32 %v406, %v407
      %v409 = vmul.f32 %v339, %v164
      %v410 = vmul.f32 %v341, %v166
      %v411 = vmul.f32 %v343, %v168
      %v412 = vmul.f32 %v345, %v170
      %v413 = vmul.f32 %v339, %v172
      %v414 = vmul.f32 %v341, %v174
      %v415 = vmul.f32 %v343, %v176
      %v416 = vmul.f32 %v345, %v178
      %v417 = vmul.f32 %v339, %v180
      %v418 = vmul.f32 %v341, %v182
      %v419 = vmul.f32 %v343, %v184
      %v420 = vmul.f32 %v345, %v186
      %v421 = vmul.f32 %v338, %v165
      %v422 = vmul.f32 %v340, %v167
      %v423 = vmul.f32 %v342, %v169
      %v424 = vmul.f32 %v344, %v171
      %v425 = vmul.f32 %v338, %v173
      %v426 = vmul.f32 %v340, %v175
      %v427 = vmul.f32 %v342, %v177
      %v428 = vmul.f32 %v344, %v179
      %v429 = vmul.f32 %v338, %v181
      %v430 = vmul.f32 %v340, %v183
      %v431 = vmul.f32 %v342, %v185
      %v432 = vmul.f32 %v344, %v187
      %v433 = vadd.f32 %v409, %v421
      %v434 = vadd.f32 %v410, %v422
      %v435 = vadd.f32 %v411, %v423
      %v436 = vadd.f32 %v412, %v424
      %v437 = vadd.f32 %v413, %v425
      %v438 = vadd.f32 %v414, %v426
      %v439 = vadd.f32 %v415, %v427
      %v440 = vadd.f32 %v416, %v428
      %v441 = vadd.f32 %v417, %v429
      %v442 = vadd.f32 %v418, %v430
      %v443 = vadd.f32 %v419, %v431
      %v444 = vadd.f32 %v420, %v432
      %v445 = vadd.f32 %v433, %v434
      %v446 = vadd.f32 %v445, %v435
      %v447 = vadd.f32 %v446, %v436
      %v448 = vrot.slane %v447, 4
      %v449 = vadd.f32 %v447, %v448
      %v450 = vrot.slane %v449, 2
      %v451 = vadd.f32 %v449, %v450
      %v452 = vrot.slane %v451, 1
      %v453 = vadd.f32 %v451, %v452
      %v454 = vadd.f32 %v437, %v438
      %v455 = vadd.f32 %v454, %v439
      %v456 = vadd.f32 %v455, %v440
      %v457 = vrot.slane %v456, 4
      %v458 = vadd.f32 %v456, %v457
      %v459 = vrot.slane %v458, 2
      %v460 = vadd.f32 %v458, %v459
      %v461 = vrot.slane %v460, 1
      %v462 = vadd.f32 %v460, %v461
      %v463 = vadd.f32 %v441, %v442
      %v464 = vadd.f32 %v463, %v443
      %v465 = vadd.f32 %v464, %v444
      %v466 = vrot.slane %v465, 4
      %v467 = vadd.f32 %v465, %v466
      %v468 = vrot.slane %v467, 2
      %v469 = vadd.f32 %v467, %v468
      %v470 = vrot.slane %v469, 1
      %v471 = vadd.f32 %v469, %v470
      %v475 = vsel %vm325, %v399, %v390
      %v476 = vsel %vm327, %v408, %v475
      %v480 = vsel %vm325, %v462, %v453
      %v481 = vsel %vm327, %v471, %v480
      %v482 = vcombine.low %v476, %v481
      %s484 = scalar_lea.vmem %s163, 8
      %485 = vst [vmem:[%s484] sm:$0x77] %v482
      %p486 = scmp.lt.s32.totalorder %s13, 1
      %s487 = scalar_select %p486, %s13, 1
      %s488 = smul.addr %s487, 4
      %s489 = smul.addr %s488, 4
      %s490 = scalar_lea.vmem %s2, %s489
      // Predicated region
      $region29: #{fno_forward.5} parent=27 // pred_check
        %p491 = pneg %p83
      $region30: #{fno_forward.5} parent=27 // pred_check_branch
        %493 = sbr.rel (%p491) target = $region32
      $region31: #{fno_forward.5} parent=27 // pred_region
        _
      $region32: #{fno_forward.5} parent=27 // pred_fallthru
        _
    $region28: #{fno_forward.5} parent=5 // pred_fallthru
      _
    %p494 = scmp.le.s32.totalorder 2, %s8
    // Predicated region
    $region33: #{fno_forward.5} parent=5 // pred_check
      %p495 = pneg %p494
    $region34: #{fno_forward.5} parent=5 // pred_check_branch
      %497 = sbr.rel (%p495) target = $region36
    $region35: #{fno_forward.5} parent=5 // pred_region
      %s498 = ssub.s32 %s8, 2
      // Predicated region
      $region37: #{fno_forward.5} parent=35 // pred_check
        %p499 = pneg %p89
      $region38: #{fno_forward.5} parent=35 // pred_check_branch
        %501 = sbr.rel (%p499) target = $region40
      $region39: #{fno_forward.5} parent=35 // pred_region
        %p502 = scmp.lt.s32.totalorder %s14, 1
        %s503 = scalar_select %p502, %s14, 1
        %s504 = smul.addr %s503, 4
        %s505 = smul.addr %s504, 4
        %s506 = scalar_lea.vmem %s2, %s505
      $region40: #{fno_forward.5} parent=35 // pred_fallthru
        _
    $region36: #{fno_forward.5} parent=5 // pred_fallthru
      _
  $region6: #{fno_forward.5} parent=0 // loop_footer
    %s12 = sadd.s32 1, %s8
  $region7: #{fno_forward.5} parent=0 // loop_footer_branch
    %7 = sbr.rel target = $region3
  $region8: #{fno_forward.5} parent=0 // loop_exit
    _

// kernel: reverse.1
$region0: #{reverse.1}
  %s0 = inlined_call_operand.vmem [shape: f32[2,3,32,15], index: 0, kind: input, shape index: {}]
  %s1 = inlined_call_operand.vmem [shape: f32[2,3,32,15], index: 1, kind: output, shape index: {}]
  $region1: #{reverse.1} parent=0
    #allocation0 [shape = 'u8[73728]{0}', space=vmem, size = 0x12000, scoped, tag = 'operand span for operand 0']
    #allocation1 [shape = 'u8[49152]{0}', space=vmem, size = 0xc000, scoped, tag = 'operand span for operand 1']
    %s2 = scalar_lea.vmem [#allocation0], 8
    // Predicated region
    $region2: #{reverse.1} parent=1 // pred_check
      _
    $region3: #{reverse.1} parent=1 // pred_check_branch
      %4 = sbr.rel (0) target = $region5
    $region4: #{reverse.1} parent=1 // pred_region
      // Predicated region
      $region6: #{reverse.1} parent=4 // pred_check
        _
      $region7: #{reverse.1} parent=4 // pred_check_branch
        %6 = sbr.rel (0) target = $region9
      $region8: #{reverse.1} parent=4 // pred_region
        // Predicated region
        $region21: #{reverse.1} parent=8 // pred_check
          _
        $region22: #{reverse.1} parent=8 // pred_check_branch
          %43 = sbr.rel (0) target = $region24
        $region23: #{reverse.1} parent=8 // pred_region
          loop: start=0, step=1, limit=1
          $region25: #{reverse.1} parent=23 // loop_pre_header
            _
          $region26: #{reverse.1} parent=23 // loop_header
            %s45 = sphi 0, %s49
            %p46 = scmp.ge.s32.totalorder %s45, 1
            %s50 = sphi %s0, %s0
            %s51 = sphi %s2, %s2
          $region27: #{reverse.1} parent=23 // loop_header_branch
            %48 = sbr.rel (%p46) target = $region31
          $region28: #{reverse.1} parent=23 // loop_body
            %v52 = vld [vmem:[%s50] sm:$0xff]
            %53 = vst [vmem:[%s51] sm:$0xff] %v52
            %v54 = vld [vmem:[%s50 + $0x8] sm:$0xff]
            %55 = vst [vmem:[%s51 + $0x8] sm:$0xff] %v54
            %v56 = vld [vmem:[%s50 + $0x10] sm:$0xff]
            %57 = vst [vmem:[%s51 + $0x18] sm:$0xff] %v56
            %v58 = vld [vmem:[%s50 + $0x18] sm:$0xff]
            %59 = vst [vmem:[%s51 + $0x20] sm:$0xff] %v58
            %v60 = vld [vmem:[%s50 + $0x20] sm:$0xff]
            %61 = vst [vmem:[%s51 + $0x30] sm:$0xff] %v60
            %v62 = vld [vmem:[%s50 + $0x28] sm:$0xff]
            %63 = vst [vmem:[%s51 + $0x38] sm:$0xff] %v62
            %v64 = vld [vmem:[%s50 + $0x30] sm:$0xff]
            %65 = vst [vmem:[%s51 + $0x48] sm:$0xff] %v64
            %v66 = vld [vmem:[%s50 + $0x38] sm:$0xff]
            %67 = vst [vmem:[%s51 + $0x50] sm:$0xff] %v66
            %v68 = vld [vmem:[%s50 + $0x40] sm:$0xff]
            %69 = vst [vmem:[%s51 + $0x60] sm:$0xff] %v68
            %v70 = vld [vmem:[%s50 + $0x48] sm:$0xff]
            %71 = vst [vmem:[%s51 + $0x68] sm:$0xff] %v70
            %v72 = vld [vmem:[%s50 + $0x50] sm:$0xff]
            %73 = vst [vmem:[%s51 + $0x78] sm:$0xff] %v72
            %v74 = vld [vmem:[%s50 + $0x58] sm:$0xff]
            %75 = vst [vmem:[%s51 + $0x80] sm:$0xff] %v74
          $region29: #{reverse.1} parent=23 // loop_footer
            %s49 = sadd.s32 1, %s45
          $region30: #{reverse.1} parent=23 // loop_footer_branch
            %44 = sbr.rel target = $region26
          $region31: #{reverse.1} parent=23 // loop_exit
            _
        $region24: #{reverse.1} parent=8 // pred_fallthru
          _
        // Predicated region
        $region32: #{reverse.1} parent=8 // pred_check
          _
        $region33: #{reverse.1} parent=8 // pred_check_branch
          %77 = sbr.rel target = $region35
        $region34: #{reverse.1} parent=8 // pred_region
          _
        $region35: #{reverse.1} parent=8 // pred_fallthru
          _
      $region9: #{reverse.1} parent=4 // pred_fallthru
        _
      // Predicated region
      $region10: #{reverse.1} parent=4 // pred_check
        _
      $region11: #{reverse.1} parent=4 // pred_check_branch
        %8 = sbr.rel target = $region13
      $region12: #{reverse.1} parent=4 // pred_region
        loop: start=0, step=1, limit=1
        $region14: #{reverse.1} parent=12 // loop_pre_header
          _
        $region15: #{reverse.1} parent=12 // loop_header
          %s11 = sphi 0, %s15
          %p12 = scmp.ge.s32.totalorder %s11, 1
          %s16 = sphi %s0, %s0
          %s17 = sphi %s2, %s2
        $region16: #{reverse.1} parent=12 // loop_header_branch
          %14 = sbr.rel (%p12) target = $region20
        $region17: #{reverse.1} parent=12 // loop_body
          %v18 = vld [vmem:[%s16] sm:$0xff]
          %19 = vst [vmem:[%s17] sm:$0xff] %v18
          %v20 = vld [vmem:[%s16 + $0x8] sm:$0xff]
          %21 = vst [vmem:[%s17 + $0x8] sm:$0xff] %v20
          %v22 = vld [vmem:[%s16 + $0x10] sm:$0xff]
          %23 = vst [vmem:[%s17 + $0x18] sm:$0xff] %v22
          %v24 = vld [vmem:[%s16 + $0x18] sm:$0xff]
          %25 = vst [vmem:[%s17 + $0x20] sm:$0xff] %v24
          %v26 = vld [vmem:[%s16 + $0x20] sm:$0xff]
          %27 = vst [vmem:[%s17 + $0x30] sm:$0xff] %v26
          %v28 = vld [vmem:[%s16 + $0x28] sm:$0xff]
          %29 = vst [vmem:[%s17 + $0x38] sm:$0xff] %v28
          %v30 = vld [vmem:[%s16 + $0x30] sm:$0xff]
          %31 = vst [vmem:[%s17 + $0x48] sm:$0xff] %v30
          %v32 = vld [vmem:[%s16 + $0x38] sm:$0xff]
          %33 = vst [vmem:[%s17 + $0x50] sm:$0xff] %v32
          %v34 = vld [vmem:[%s16 + $0x40] sm:$0xff]
          %35 = vst [vmem:[%s17 + $0x60] sm:$0xff] %v34
          %v36 = vld [vmem:[%s16 + $0x48] sm:$0xff]
          %37 = vst [vmem:[%s17 + $0x68] sm:$0xff] %v36
          %v38 = vld [vmem:[%s16 + $0x50] sm:$0xff]
          %39 = vst [vmem:[%s17 + $0x78] sm:$0xff] %v38
          %v40 = vld [vmem:[%s16 + $0x58] sm:$0xff]
          %41 = vst [vmem:[%s17 + $0x80] sm:$0xff] %v40
        $region18: #{reverse.1} parent=12 // loop_footer
          %s15 = sadd.s32 1, %s11
        $region19: #{reverse.1} parent=12 // loop_footer_branch
          %10 = sbr.rel target = $region15
        $region20: #{reverse.1} parent=12 // loop_exit
          _
      $region13: #{reverse.1} parent=4 // pred_fallthru
        _
    $region5: #{reverse.1} parent=1 // pred_fallthru
      _
    %78 = vnop
    %s79 = scalar_lea.vmem [#allocation0], 8
    %s80 = scalar_lea.vmem %s79, 7 [#allocation0]
    %v81 = vld [vmem:[%s80] ss:$-1 sm:$0xff]
    %v82 = vrot.slane %v81, 1
    %83 = vst [vmem:[#allocation1] sm:$0xff] %v82
    %s84 = scalar_lea.vmem [#allocation0], 16
    %s85 = scalar_lea.vmem %s84, 7 [#allocation0]
    %v86 = vld [vmem:[%s85] ss:$-1 sm:$0xff]
    %v87 = vrot.slane %v86, 1
    %v88 = vlaneseq
    %v89 = vshrl.u32 %v88, 7
    %vm90 = vcmp.lt.s32.totalorder %v89, 7
    %91 = vst.msk [vmem:[#allocation1] sm:$0xff] %vm90, %v87
    %s92 = scalar_lea.vmem [#allocation1], 8
    %s93 = scalar_lea.vmem [#allocation0], 7
    %v94 = vld [vmem:[%s93] ss:$-1 sm:$0xff]
    %v95 = vrot.slane %v94, 1
    %96 = vst [vmem:[%s92] sm:$0xff] %v95
    %s97 = scalar_lea.vmem [#allocation0], 8
    %s98 = scalar_lea.vmem %s97, 7 [#allocation0]
    %v99 = vld [vmem:[%s98] ss:$-1 sm:$0xff]
    %v100 = vrot.slane %v99, 1
    %v101 = vlaneseq
    %v102 = vshrl.u32 %v101, 7
    %vm103 = vcmp.lt.s32.totalorder %v102, 7
    %104 = vst.msk [vmem:[%s92] sm:$0xff] %vm103, %v100
    %s105 = scalar_lea.vmem [#allocation1], 16
    %s106 = scalar_lea.vmem [#allocation0], 24
    %s107 = scalar_lea.vmem %s106, 8 [#allocation0]
    %s108 = scalar_lea.vmem %s107, 7 [#allocation0]
    %v109 = vld [vmem:[%s108] ss:$-1 sm:$0xff]
    %v110 = vrot.slane %v109, 1
    %111 = vst [vmem:[%s105] sm:$0xff] %v110
    %s112 = scalar_lea.vmem %s106, 16 [#allocation0]
    %s113 = scalar_lea.vmem %s112, 7 [#allocation0]
    %v114 = vld [vmem:[%s113] ss:$-1 sm:$0xff]
    %v115 = vrot.slane %v114, 1
    %v116 = vlaneseq
    %v117 = vshrl.u32 %v116, 7
    %vm118 = vcmp.lt.s32.totalorder %v117, 7
    %119 = vst.msk [vmem:[%s105] sm:$0xff] %vm118, %v115
    %s120 = scalar_lea.vmem %s105, 8 [#allocation1]
    %s121 = scalar_lea.vmem %s106, 7 [#allocation0]
    %v122 = vld [vmem:[%s121] ss:$-1 sm:$0xff]
    %v123 = vrot.slane %v122, 1
    %124 = vst [vmem:[%s120] sm:$0xff] %v123
    %s125 = scalar_lea.vmem %s106, 8 [#allocation0]
    %s126 = scalar_lea.vmem %s125, 7 [#allocation0]
    %v127 = vld [vmem:[%s126] ss:$-1 sm:$0xff]
    %v128 = vrot.slane %v127, 1
    %v129 = vlaneseq
    %v130 = vshrl.u32 %v129, 7
    %vm131 = vcmp.lt.s32.totalorder %v130, 7
    %132 = vst.msk [vmem:[%s120] sm:$0xff] %vm131, %v128
    %s133 = scalar_lea.vmem [#allocation1], 32
    %s134 = scalar_lea.vmem [#allocation0], 48
    %s135 = scalar_lea.vmem %s134, 8 [#allocation0]
    %s136 = scalar_lea.vmem %s135, 7 [#allocation0]
    %v137 = vld [vmem:[%s136] ss:$-1 sm:$0xff]
    %v138 = vrot.slane %v137, 1
    %139 = vst [vmem:[%s133] sm:$0xff] %v138
    %s140 = scalar_lea.vmem %s134, 16 [#allocation0]
    %s141 = scalar_lea.vmem %s140, 7 [#allocation0]
    %v142 = vld [vmem:[%s141] ss:$-1 sm:$0xff]
    %v143 = vrot.slane %v142, 1
    %v144 = vlaneseq
    %v145 = vshrl.u32 %v144, 7
    %vm146 = vcmp.lt.s32.totalorder %v145, 7
    %147 = vst.msk [vmem:[%s133] sm:$0xff] %vm146, %v143
    %s148 = scalar_lea.vmem %s133, 8 [#allocation1]
    %s149 = scalar_lea.vmem %s134, 7 [#allocation0]
    %v150 = vld [vmem:[%s149] ss:$-1 sm:$0xff]
    %v151 = vrot.slane %v150, 1
    %152 = vst [vmem:[%s148] sm:$0xff] %v151
    %s153 = scalar_lea.vmem %s134, 8 [#allocation0]
    %s154 = scalar_lea.vmem %s153, 7 [#allocation0]
    %v155 = vld [vmem:[%s154] ss:$-1 sm:$0xff]
    %v156 = vrot.slane %v155, 1
    %v157 = vlaneseq
    %v158 = vshrl.u32 %v157, 7
    %vm159 = vcmp.lt.s32.totalorder %v158, 7
    %160 = vst.msk [vmem:[%s148] sm:$0xff] %vm159, %v156
    %s161 = scalar_lea.vmem [#allocation1], 48
    %s162 = scalar_lea.vmem [#allocation0], 72
    %s163 = scalar_lea.vmem %s162, 8 [#allocation0]
    %s164 = scalar_lea.vmem %s163, 7 [#allocation0]
    %v165 = vld [vmem:[%s164] ss:$-1 sm:$0xff]
    %v166 = vrot.slane %v165, 1
    %167 = vst [vmem:[%s161] sm:$0xff] %v166
    %s168 = scalar_lea.vmem %s162, 16 [#allocation0]
    %s169 = scalar_lea.vmem %s168, 7 [#allocation0]
    %v170 = vld [vmem:[%s169] ss:$-1 sm:$0xff]
    %v171 = vrot.slane %v170, 1
    %v172 = vlaneseq
    %v173 = vshrl.u32 %v172, 7
    %vm174 = vcmp.lt.s32.totalorder %v173, 7
    %175 = vst.msk [vmem:[%s161] sm:$0xff] %vm174, %v171
    %s176 = scalar_lea.vmem %s161, 8 [#allocation1]
    %s177 = scalar_lea.vmem %s162, 7 [#allocation0]
    %v178 = vld [vmem:[%s177] ss:$-1 sm:$0xff]
    %v179 = vrot.slane %v178, 1
    %180 = vst [vmem:[%s176] sm:$0xff] %v179
    %s181 = scalar_lea.vmem %s162, 8 [#allocation0]
    %s182 = scalar_lea.vmem %s181, 7 [#allocation0]
    %v183 = vld [vmem:[%s182] ss:$-1 sm:$0xff]
    %v184 = vrot.slane %v183, 1
    %v185 = vlaneseq
    %v186 = vshrl.u32 %v185, 7
    %vm187 = vcmp.lt.s32.totalorder %v186, 7
    %188 = vst.msk [vmem:[%s176] sm:$0xff] %vm187, %v184
    %s189 = scalar_lea.vmem [#allocation1], 64
    %s190 = scalar_lea.vmem [#allocation0], 96
    %s191 = scalar_lea.vmem %s190, 8 [#allocation0]
    %s192 = scalar_lea.vmem %s191, 7 [#allocation0]
    %v193 = vld [vmem:[%s192] ss:$-1 sm:$0xff]
    %v194 = vrot.slane %v193, 1
    %195 = vst [vmem:[%s189] sm:$0xff] %v194
    %s196 = scalar_lea.vmem %s190, 16 [#allocation0]
    %s197 = scalar_lea.vmem %s196, 7 [#allocation0]
    %v198 = vld [vmem:[%s197] ss:$-1 sm:$0xff]
    %v199 = vrot.slane %v198, 1
    %v200 = vlaneseq
    %v201 = vshrl.u32 %v200, 7
    %vm202 = vcmp.lt.s32.totalorder %v201, 7
    %203 = vst.msk [vmem:[%s189] sm:$0xff] %vm202, %v199
    %s204 = scalar_lea.vmem %s189, 8 [#allocation1]
    %s205 = scalar_lea.vmem %s190, 7 [#allocation0]
    %v206 = vld [vmem:[%s205] ss:$-1 sm:$0xff]
    %v207 = vrot.slane %v206, 1
    %208 = vst [vmem:[%s204] sm:$0xff] %v207
    %s209 = scalar_lea.vmem %s190, 8 [#allocation0]
    %s210 = scalar_lea.vmem %s209, 7 [#allocation0]
    %v211 = vld [vmem:[%s210] ss:$-1 sm:$0xff]
    %v212 = vrot.slane %v211, 1
    %v213 = vlaneseq
    %v214 = vshrl.u32 %v213, 7
    %vm215 = vcmp.lt.s32.totalorder %v214, 7
    %216 = vst.msk [vmem:[%s204] sm:$0xff] %vm215, %v212
    %s217 = scalar_lea.vmem [#allocation1], 80
    %s218 = scalar_lea.vmem [#allocation0], 120
    %s219 = scalar_lea.vmem %s218, 8 [#allocation0]
    %s220 = scalar_lea.vmem %s219, 7 [#allocation0]
    %v221 = vld [vmem:[%s220] ss:$-1 sm:$0xff]
    %v222 = vrot.slane %v221, 1
    %223 = vst [vmem:[%s217] sm:$0xff] %v222
    %s224 = scalar_lea.vmem %s218, 16 [#allocation0]
    %s225 = scalar_lea.vmem %s224, 7 [#allocation0]
    %v226 = vld [vmem:[%s225] ss:$-1 sm:$0xff]
    %v227 = vrot.slane %v226, 1
    %v228 = vlaneseq
    %v229 = vshrl.u32 %v228, 7
    %vm230 = vcmp.lt.s32.totalorder %v229, 7
    %231 = vst.msk [vmem:[%s217] sm:$0xff] %vm230, %v227
    %s232 = scalar_lea.vmem %s217, 8 [#allocation1]
    %s233 = scalar_lea.vmem %s218, 7 [#allocation0]
    %v234 = vld [vmem:[%s233] ss:$-1 sm:$0xff]
    %v235 = vrot.slane %v234, 1
    %236 = vst [vmem:[%s232] sm:$0xff] %v235
    %s237 = scalar_lea.vmem %s218, 8 [#allocation0]
    %s238 = scalar_lea.vmem %s237, 7 [#allocation0]
    %v239 = vld [vmem:[%s238] ss:$-1 sm:$0xff]
    %v240 = vrot.slane %v239, 1
    %v241 = vlaneseq
    %v242 = vshrl.u32 %v241, 7
    %vm243 = vcmp.lt.s32.totalorder %v242, 7
    %244 = vst.msk [vmem:[%s232] sm:$0xff] %vm243, %v240
    // Predicated region
    $region36: #{reverse.1} parent=1 // pred_check
      _
    $region37: #{reverse.1} parent=1 // pred_check_branch
      %246 = sbr.rel (0) target = $region39
    $region38: #{reverse.1} parent=1 // pred_region
      // Predicated region
      $region40: #{reverse.1} parent=38 // pred_check
        _
      $region41: #{reverse.1} parent=38 // pred_check_branch
        %248 = sbr.rel (0) target = $region43
      $region42: #{reverse.1} parent=38 // pred_region
        // Predicated region
        $region55: #{reverse.1} parent=42 // pred_check
          _
        $region56: #{reverse.1} parent=42 // pred_check_branch
          %285 = sbr.rel (0) target = $region58
        $region57: #{reverse.1} parent=42 // pred_region
          loop: start=0, step=1, limit=1
          $region59: #{reverse.1} parent=57 // loop_pre_header
            _
          $region60: #{reverse.1} parent=57 // loop_header
            %s287 = sphi 0, %s291
            %p288 = scmp.ge.s32.totalorder %s287, 1
            %s292 = sphi [#allocation1], [#allocation1]
            %s293 = sphi %s1, %s1
          $region61: #{reverse.1} parent=57 // loop_header_branch
            %290 = sbr.rel (%p288) target = $region65
          $region62: #{reverse.1} parent=57 // loop_body
            %v294 = vld [vmem:[%s292] sm:$0xff]
            %295 = vst [vmem:[%s293] sm:$0xff] %v294
            %v296 = vld [vmem:[%s292 + $0x8] sm:$0xff]
            %297 = vst [vmem:[%s293 + $0x8] sm:$0xff] %v296
            %v298 = vld [vmem:[%s292 + $0x10] sm:$0xff]
            %299 = vst [vmem:[%s293 + $0x10] sm:$0xff] %v298
            %v300 = vld [vmem:[%s292 + $0x18] sm:$0xff]
            %301 = vst [vmem:[%s293 + $0x18] sm:$0xff] %v300
            %v302 = vld [vmem:[%s292 + $0x20] sm:$0xff]
            %303 = vst [vmem:[%s293 + $0x20] sm:$0xff] %v302
            %v304 = vld [vmem:[%s292 + $0x28] sm:$0xff]
            %305 = vst [vmem:[%s293 + $0x28] sm:$0xff] %v304
            %v306 = vld [vmem:[%s292 + $0x30] sm:$0xff]
            %307 = vst [vmem:[%s293 + $0x30] sm:$0xff] %v306
            %v308 = vld [vmem:[%s292 + $0x38] sm:$0xff]
            %309 = vst [vmem:[%s293 + $0x38] sm:$0xff] %v308
            %v310 = vld [vmem:[%s292 + $0x40] sm:$0xff]
            %311 = vst [vmem:[%s293 + $0x40] sm:$0xff] %v310
            %v312 = vld [vmem:[%s292 + $0x48] sm:$0xff]
            %313 = vst [vmem:[%s293 + $0x48] sm:$0xff] %v312
            %v314 = vld [vmem:[%s292 + $0x50] sm:$0xff]
            %315 = vst [vmem:[%s293 + $0x50] sm:$0xff] %v314
            %v316 = vld [vmem:[%s292 + $0x58] sm:$0xff]
            %317 = vst [vmem:[%s293 + $0x58] sm:$0xff] %v316
          $region63: #{reverse.1} parent=57 // loop_footer
            %s291 = sadd.s32 1, %s287
          $region64: #{reverse.1} parent=57 // loop_footer_branch
            %286 = sbr.rel target = $region60
          $region65: #{reverse.1} parent=57 // loop_exit
            _
        $region58: #{reverse.1} parent=42 // pred_fallthru
          _
        // Predicated region
        $region66: #{reverse.1} parent=42 // pred_check
          _
        $region67: #{reverse.1} parent=42 // pred_check_branch
          %319 = sbr.rel target = $region69
        $region68: #{reverse.1} parent=42 // pred_region
          _
        $region69: #{reverse.1} parent=42 // pred_fallthru
          _
      $region43: #{reverse.1} parent=38 // pred_fallthru
        _
      // Predicated region
      $region44: #{reverse.1} parent=38 // pred_check
        _
      $region45: #{reverse.1} parent=38 // pred_check_branch
        %250 = sbr.rel target = $region47
      $region46: #{reverse.1} parent=38 // pred_region
        loop: start=0, step=1, limit=1
        $region48: #{reverse.1} parent=46 // loop_pre_header
          _
        $region49: #{reverse.1} parent=46 // loop_header
          %s253 = sphi 0, %s257
          %p254 = scmp.ge.s32.totalorder %s253, 1
          %s258 = sphi [#allocation1], [#allocation1]
          %s259 = sphi %s1, %s1
        $region50: #{reverse.1} parent=46 // loop_header_branch
          %256 = sbr.rel (%p254) target = $region54
        $region51: #{reverse.1} parent=46 // loop_body
          %v260 = vld [vmem:[%s258] sm:$0xff]
          %261 = vst [vmem:[%s259] sm:$0xff] %v260
          %v262 = vld [vmem:[%s258 + $0x8] sm:$0xff]
          %263 = vst [vmem:[%s259 + $0x8] sm:$0xff] %v262
          %v264 = vld [vmem:[%s258 + $0x10] sm:$0xff]
          %265 = vst [vmem:[%s259 + $0x10] sm:$0xff] %v264
          %v266 = vld [vmem:[%s258 + $0x18] sm:$0xff]
          %267 = vst [vmem:[%s259 + $0x18] sm:$0xff] %v266
          %v268 = vld [vmem:[%s258 + $0x20] sm:$0xff]
          %269 = vst [vmem:[%s259 + $0x20] sm:$0xff] %v268
          %v270 = vld [vmem:[%s258 + $0x28] sm:$0xff]
          %271 = vst [vmem:[%s259 + $0x28] sm:$0xff] %v270
          %v272 = vld [vmem:[%s258 + $0x30] sm:$0xff]
          %273 = vst [vmem:[%s259 + $0x30] sm:$0xff] %v272
          %v274 = vld [vmem:[%s258 + $0x38] sm:$0xff]
          %275 = vst [vmem:[%s259 + $0x38] sm:$0xff] %v274
          %v276 = vld [vmem:[%s258 + $0x40] sm:$0xff]
          %277 = vst [vmem:[%s259 + $0x40] sm:$0xff] %v276
          %v278 = vld [vmem:[%s258 + $0x48] sm:$0xff]
          %279 = vst [vmem:[%s259 + $0x48] sm:$0xff] %v278
          %v280 = vld [vmem:[%s258 + $0x50] sm:$0xff]
          %281 = vst [vmem:[%s259 + $0x50] sm:$0xff] %v280
          %v282 = vld [vmem:[%s258 + $0x58] sm:$0xff]
          %283 = vst [vmem:[%s259 + $0x58] sm:$0xff] %v282
        $region52: #{reverse.1} parent=46 // loop_footer
          %s257 = sadd.s32 1, %s253
        $region53: #{reverse.1} parent=46 // loop_footer_branch
          %252 = sbr.rel target = $region49
        $region54: #{reverse.1} parent=46 // loop_exit
          _
      $region47: #{reverse.1} parent=38 // pred_fallthru
        _
    $region39: #{reverse.1} parent=1 // pred_fallthru
      _
    %320 = vnop

</llo_original>
